<compile_context>
chip_gen: v5e
topology: v5e:2x2
jax: 0.10.0
libtpu: 0.0.40
codegen_flags: <defaults>
</compile_context>

<pallas_src>
import functools

import jax
import jax.numpy as jnp
from jax.experimental import pallas as pl
from jax.experimental.pallas import tpu as pltpu


def _bin_conv_kernel(x_ref, w_ref, a_ref, o_ref, *, bs, ho, wo, kh, kw, cin, opad):
    """bs padded NHWC images -> (bs*Ho*Wo, OPAD) conv output, scaled by alpha.

    x_ref: (bs, Hp, Wp, C)     bf16, sign(x) with zero halo
    w_ref: (kh*kw, C, OPAD)    bf16, sign(M) reordered (tap, C, O), O zero-padded
    a_ref: (1, OPAD)           f32 alpha (zero in the padded columns)
    o_ref: (bs*Ho*Wo, OPAD)    f32
    """
    rows = bs * ho * wo
    acc = jnp.zeros((rows, opad), jnp.float32)
    # Tap loop: kh*kw accumulating bf16 matmuls over statically shifted views
    # of the VMEM-resident padded tile (no im2col buffer anywhere). The
    # reshape only merges leading dims into the sublane axis (wo is a
    # multiple of 8), so it is a cheap in-VMEM view, not a hard relayout.
    for t in range(kh * kw):
        di, dj = divmod(t, kw)
        xt = x_ref[:, di:di + ho, dj:dj + wo, :].reshape(rows, cin)
        acc = acc + jnp.dot(xt, w_ref[t], preferred_element_type=jnp.float32)
    # Per-output-channel alpha scale in f32, kept outside the matmul so the
    # +-1 bf16 operands stay exact.
    o_ref[...] = acc * a_ref[...]


def _pick_images_per_step(n, in_img_bytes, out_img_bytes, w_bytes,
                          budget_bytes=12 << 20):
    """Images per grid step: fill (a fraction of) scoped VMEM, keep >=2 steps."""
    # Per image: double-buffered input block + double-buffered output block
    # + the live f32 accumulator (same size as one output block).
    per_img = 2 * (in_img_bytes + out_img_bytes) + out_img_bytes
    cap = max(1, int((budget_bytes - 2 * w_bytes) // max(per_img, 1)))
    # Keep at least two grid steps when N >= 2 so v7x can shard the
    # "parallel" batch axis across both TensorCores.
    cap = min(cap, n if n < 2 else max(1, n // 2))
    bs = 1
    for d in range(1, n + 1):
        if n % d == 0 and d <= cap:
            bs = d
    return bs


def binarize_conv2d_sdp(x, m_param, alpha, stride=1, padding=1):
    """x: (N, C, H, W) f32; m_param: (O, C, kh, kw); alpha: (O, 1, 1). Returns NCHW."""
    N, C, H, W = x.shape
    O, _, kh, kw = m_param.shape
    if stride != 1:
        # TODO(synk): stride > 1 needs strided tap slices; module default (stride=1) only.
        raise NotImplementedError("binarize_conv2d_sdp Pallas kernel supports stride=1 only")

    Hp, Wp = H + 2 * padding, W + 2 * padding
    Ho, Wo = Hp - kh + 1, Wp - kw + 1
    OPAD = max(128, -(-O // 128) * 128)  # lane-dense output-channel axis

    # Binarize activations BEFORE the bf16 cast (sign is exact in bf16),
    # go NHWC, and zero-pad the halo (zero padding after sign == conv2d zero
    # padding of the signed input).
    ba = jnp.sign(x).astype(jnp.bfloat16).transpose(0, 2, 3, 1)       # (N, H, W, C)
    ba = jnp.pad(ba, ((0, 0), (padding, padding), (padding, padding), (0, 0)))

    # Binarize weights once in the wrapper; reorder to (tap, C, O) and pad O.
    bw = jnp.sign(m_param).transpose(2, 3, 1, 0).reshape(kh * kw, C, O)
    bw = jnp.pad(bw, ((0, 0), (0, 0), (0, OPAD - O))).astype(jnp.bfloat16)

    a2d = jnp.pad(alpha.reshape(1, O).astype(jnp.float32), ((0, 0), (0, OPAD - O)))

    in_img_bytes = Hp * Wp * C * 2
    out_img_bytes = Ho * Wo * OPAD * 4
    w_bytes = kh * kw * C * OPAD * 2
    bs = _pick_images_per_step(N, in_img_bytes, out_img_bytes, w_bytes)

    kernel = functools.partial(
        _bin_conv_kernel, bs=bs, ho=Ho, wo=Wo, kh=kh, kw=kw, cin=C, opad=OPAD)

    flops = 2 * N * Ho * Wo * C * kh * kw * OPAD
    bytes_accessed = ba.size * 2 + bw.size * 2 + a2d.size * 4 + N * Ho * Wo * OPAD * 4

    out = pl.pallas_call(
        kernel,
        out_shape=jax.ShapeDtypeStruct((N * Ho * Wo, OPAD), jnp.float32),
        grid=(N // bs,),
        in_specs=[
            # bs full padded images per grid step (block == full array in the
            # last two dims, so the (8,128) divisibility rule is satisfied).
            pl.BlockSpec((bs, Hp, Wp, C), lambda n: (n, 0, 0, 0)),
            # Weights and alpha are grid-invariant (same block every step;
            # Pallas fetches them once and keeps them VMEM-resident).
            pl.BlockSpec((kh * kw, C, OPAD), lambda n: (0, 0, 0)),
            pl.BlockSpec((1, OPAD), lambda n: (0, 0)),
        ],
        # 2-D lane-dense output slab: (bs*Ho*Wo, OPAD) per step — unmasked
        # 128-lane stores, no kernel-side output reshape needed.
        out_specs=pl.BlockSpec((bs * Ho * Wo, OPAD), lambda n: (n, 0)),
        compiler_params=pltpu.CompilerParams(dimension_semantics=("parallel",)),
        cost_estimate=pl.CostEstimate(
            flops=flops, transcendentals=0, bytes_accessed=bytes_accessed),
    )(ba, bw, a2d)

    # Drop the lane padding, restore NCHW at the module boundary.
    out = out[:, :O].reshape(N, Ho, Wo, O).transpose(0, 3, 1, 2)
    return out
    # TODO(synk): non-default branches (linear=True, bias, binarize_out,
    # binarize_a=False) are not implemented; default module config only.


def _reference(x, m_param, alpha, stride=1, padding=1):
    bw = jnp.sign(m_param)
    ba = jnp.sign(x)
    out = jax.lax.conv_general_dilated(
        ba, bw,
        window_strides=(stride, stride),
        padding=((padding, padding), (padding, padding)),
        dimension_numbers=("NCHW", "OIHW", "NCHW"),
    )
    return out * alpha[None]  # (1, O, 1, 1) broadcast


if __name__ == "__main__":
    # Module config (forward does not use K / scale numerically).
    in_chn, out_chn, ksize, stride, padding = 4, 8, 3, 1, 1
    N, H, W = 2, 16, 16

    key = jax.random.PRNGKey(0)
    k_x, k_alpha, k_m = jax.random.split(key, 3)

    x = jax.random.normal(k_x, (N, in_chn, H, W), dtype=jnp.float32)

    # Alpha ~ torch.rand(out_chn, 1, 1)
    alpha = jax.random.uniform(k_alpha, (out_chn, 1, 1), dtype=jnp.float32)

    # M ~ xavier_normal_ on (out_chn, in_chn, k, k)
    fan_in = in_chn * ksize * ksize
    fan_out = out_chn * ksize * ksize
    std = (2.0 / (fan_in + fan_out)) ** 0.5
    m_param = std * jax.random.normal(
        k_m, (out_chn, in_chn, ksize, ksize), dtype=jnp.float32)

    out = binarize_conv2d_sdp(x, m_param, alpha, stride=stride, padding=padding)
    out = jax.block_until_ready(out)

    ref = jax.block_until_ready(
        _reference(x, m_param, alpha, stride=stride, padding=padding))
    assert out.shape == (N, out_chn, H, W), out.shape
    assert jnp.allclose(out, ref, atol=1e-4, rtol=1e-4), float(jnp.max(jnp.abs(out - ref)))

    print("KERNEL_OK")
</pallas_src>

<mosaic_0001>
module attributes {stable_mosaic.version = 11 : i64} {
  func.func @_bin_conv_kernel(%arg0: i32, %arg1: memref<1x18x18x4xbf16, #tpu.memory_space<vmem>>, %arg2: memref<9x4x128xbf16, #tpu.memory_space<vmem>>, %arg3: memref<1x128xf32, #tpu.memory_space<vmem>>, %arg4: memref<256x128xf32, #tpu.memory_space<vmem>>) attributes {dimension_semantics = [#tpu.dimension_semantics<parallel>], iteration_bounds = array<i64: 2>, scalar_prefetch = 0 : i64, scratch_operands = 0 : i64, tpu.core_type = #tpu.core_type<tc>, window_params = [{transform_indices = @transform_0, window_bounds = array<i64: 1, 18, 18, 4>}, {pipeline_mode = #tpu.pipeline_mode<synchronous>, transform_indices = @transform_1, window_bounds = array<i64: 9, 4, 128>}, {pipeline_mode = #tpu.pipeline_mode<synchronous>, transform_indices = @transform_2, window_bounds = array<i64: 1, 128>}, {transform_indices = @transform_3, window_bounds = array<i64: 256, 128>}]} {
    %cst = arith.constant 0.000000e+00 : f32
    %0 = vector.broadcast %cst : f32 to vector<256x128xf32>
    %c0 = arith.constant 0 : index
    %c0_0 = arith.constant 0 : index
    %c0_1 = arith.constant 0 : index
    %c0_2 = arith.constant 0 : index
    %1 = vector.load %arg1[%c0, %c0_0, %c0_1, %c0_2] : memref<1x18x18x4xbf16, #tpu.memory_space<vmem>>, vector<1x16x16x4xbf16>
    %2 = vector.shape_cast %1 : vector<1x16x16x4xbf16> to vector<256x4xbf16>
    %c0_3 = arith.constant 0 : index
    %c0_4 = arith.constant 0 : index
    %c0_5 = arith.constant 0 : index
    %3 = vector.load %arg2[%c0_3, %c0_4, %c0_5] : memref<9x4x128xbf16, #tpu.memory_space<vmem>>, vector<1x4x128xbf16>
    %4 = vector.shape_cast %3 : vector<1x4x128xbf16> to vector<4x128xbf16>
    %cst_6 = arith.constant dense<0.000000e+00> : vector<256x128xf32>
    %5 = tpu.matmul %2, %4, %cst_6 {dimension_numbers = #tpu.dot_dimension_numbers<[1], [0], [0], [1], [0, 0, 1, 1], [], []>} : vector<256x4xbf16>, vector<4x128xbf16>, vector<256x128xf32> -> vector<256x128xf32>
    %6 = arith.addf %0, %5 : vector<256x128xf32>
    %c0_7 = arith.constant 0 : index
    %c0_8 = arith.constant 0 : index
    %c1 = arith.constant 1 : index
    %c0_9 = arith.constant 0 : index
    %7 = vector.load %arg1[%c0_7, %c0_8, %c1, %c0_9] : memref<1x18x18x4xbf16, #tpu.memory_space<vmem>>, vector<1x16x16x4xbf16>
    %8 = vector.shape_cast %7 : vector<1x16x16x4xbf16> to vector<256x4xbf16>
    %c1_10 = arith.constant 1 : index
    %c0_11 = arith.constant 0 : index
    %c0_12 = arith.constant 0 : index
    %9 = vector.load %arg2[%c1_10, %c0_11, %c0_12] : memref<9x4x128xbf16, #tpu.memory_space<vmem>>, vector<1x4x128xbf16>
    %10 = vector.shape_cast %9 : vector<1x4x128xbf16> to vector<4x128xbf16>
    %cst_13 = arith.constant dense<0.000000e+00> : vector<256x128xf32>
    %11 = tpu.matmul %8, %10, %cst_13 {dimension_numbers = #tpu.dot_dimension_numbers<[1], [0], [0], [1], [0, 0, 1, 1], [], []>} : vector<256x4xbf16>, vector<4x128xbf16>, vector<256x128xf32> -> vector<256x128xf32>
    %12 = arith.addf %6, %11 : vector<256x128xf32>
    %c0_14 = arith.constant 0 : index
    %c0_15 = arith.constant 0 : index
    %c2 = arith.constant 2 : index
    %c0_16 = arith.constant 0 : index
    %13 = vector.load %arg1[%c0_14, %c0_15, %c2, %c0_16] : memref<1x18x18x4xbf16, #tpu.memory_space<vmem>>, vector<1x16x16x4xbf16>
    %14 = vector.shape_cast %13 : vector<1x16x16x4xbf16> to vector<256x4xbf16>
    %c2_17 = arith.constant 2 : index
    %c0_18 = arith.constant 0 : index
    %c0_19 = arith.constant 0 : index
    %15 = vector.load %arg2[%c2_17, %c0_18, %c0_19] : memref<9x4x128xbf16, #tpu.memory_space<vmem>>, vector<1x4x128xbf16>
    %16 = vector.shape_cast %15 : vector<1x4x128xbf16> to vector<4x128xbf16>
    %cst_20 = arith.constant dense<0.000000e+00> : vector<256x128xf32>
    %17 = tpu.matmul %14, %16, %cst_20 {dimension_numbers = #tpu.dot_dimension_numbers<[1], [0], [0], [1], [0, 0, 1, 1], [], []>} : vector<256x4xbf16>, vector<4x128xbf16>, vector<256x128xf32> -> vector<256x128xf32>
    %18 = arith.addf %12, %17 : vector<256x128xf32>
    %c0_21 = arith.constant 0 : index
    %c1_22 = arith.constant 1 : index
    %c0_23 = arith.constant 0 : index
    %c0_24 = arith.constant 0 : index
    %19 = vector.load %arg1[%c0_21, %c1_22, %c0_23, %c0_24] : memref<1x18x18x4xbf16, #tpu.memory_space<vmem>>, vector<1x16x16x4xbf16>
    %20 = vector.shape_cast %19 : vector<1x16x16x4xbf16> to vector<256x4xbf16>
    %c3 = arith.constant 3 : index
    %c0_25 = arith.constant 0 : index
    %c0_26 = arith.constant 0 : index
    %21 = vector.load %arg2[%c3, %c0_25, %c0_26] : memref<9x4x128xbf16, #tpu.memory_space<vmem>>, vector<1x4x128xbf16>
    %22 = vector.shape_cast %21 : vector<1x4x128xbf16> to vector<4x128xbf16>
    %cst_27 = arith.constant dense<0.000000e+00> : vector<256x128xf32>
    %23 = tpu.matmul %20, %22, %cst_27 {dimension_numbers = #tpu.dot_dimension_numbers<[1], [0], [0], [1], [0, 0, 1, 1], [], []>} : vector<256x4xbf16>, vector<4x128xbf16>, vector<256x128xf32> -> vector<256x128xf32>
    %24 = arith.addf %18, %23 : vector<256x128xf32>
    %c0_28 = arith.constant 0 : index
    %c1_29 = arith.constant 1 : index
    %c1_30 = arith.constant 1 : index
    %c0_31 = arith.constant 0 : index
    %25 = vector.load %arg1[%c0_28, %c1_29, %c1_30, %c0_31] : memref<1x18x18x4xbf16, #tpu.memory_space<vmem>>, vector<1x16x16x4xbf16>
    %26 = vector.shape_cast %25 : vector<1x16x16x4xbf16> to vector<256x4xbf16>
    %c4 = arith.constant 4 : index
    %c0_32 = arith.constant 0 : index
    %c0_33 = arith.constant 0 : index
    %27 = vector.load %arg2[%c4, %c0_32, %c0_33] : memref<9x4x128xbf16, #tpu.memory_space<vmem>>, vector<1x4x128xbf16>
    %28 = vector.shape_cast %27 : vector<1x4x128xbf16> to vector<4x128xbf16>
    %cst_34 = arith.constant dense<0.000000e+00> : vector<256x128xf32>
    %29 = tpu.matmul %26, %28, %cst_34 {dimension_numbers = #tpu.dot_dimension_numbers<[1], [0], [0], [1], [0, 0, 1, 1], [], []>} : vector<256x4xbf16>, vector<4x128xbf16>, vector<256x128xf32> -> vector<256x128xf32>
    %30 = arith.addf %24, %29 : vector<256x128xf32>
    %c0_35 = arith.constant 0 : index
    %c1_36 = arith.constant 1 : index
    %c2_37 = arith.constant 2 : index
    %c0_38 = arith.constant 0 : index
    %31 = vector.load %arg1[%c0_35, %c1_36, %c2_37, %c0_38] : memref<1x18x18x4xbf16, #tpu.memory_space<vmem>>, vector<1x16x16x4xbf16>
    %32 = vector.shape_cast %31 : vector<1x16x16x4xbf16> to vector<256x4xbf16>
    %c5 = arith.constant 5 : index
    %c0_39 = arith.constant 0 : index
    %c0_40 = arith.constant 0 : index
    %33 = vector.load %arg2[%c5, %c0_39, %c0_40] : memref<9x4x128xbf16, #tpu.memory_space<vmem>>, vector<1x4x128xbf16>
    %34 = vector.shape_cast %33 : vector<1x4x128xbf16> to vector<4x128xbf16>
    %cst_41 = arith.constant dense<0.000000e+00> : vector<256x128xf32>
    %35 = tpu.matmul %32, %34, %cst_41 {dimension_numbers = #tpu.dot_dimension_numbers<[1], [0], [0], [1], [0, 0, 1, 1], [], []>} : vector<256x4xbf16>, vector<4x128xbf16>, vector<256x128xf32> -> vector<256x128xf32>
    %36 = arith.addf %30, %35 : vector<256x128xf32>
    %c0_42 = arith.constant 0 : index
    %c2_43 = arith.constant 2 : index
    %c0_44 = arith.constant 0 : index
    %c0_45 = arith.constant 0 : index
    %37 = vector.load %arg1[%c0_42, %c2_43, %c0_44, %c0_45] : memref<1x18x18x4xbf16, #tpu.memory_space<vmem>>, vector<1x16x16x4xbf16>
    %38 = vector.shape_cast %37 : vector<1x16x16x4xbf16> to vector<256x4xbf16>
    %c6 = arith.constant 6 : index
    %c0_46 = arith.constant 0 : index
    %c0_47 = arith.constant 0 : index
    %39 = vector.load %arg2[%c6, %c0_46, %c0_47] : memref<9x4x128xbf16, #tpu.memory_space<vmem>>, vector<1x4x128xbf16>
    %40 = vector.shape_cast %39 : vector<1x4x128xbf16> to vector<4x128xbf16>
    %cst_48 = arith.constant dense<0.000000e+00> : vector<256x128xf32>
    %41 = tpu.matmul %38, %40, %cst_48 {dimension_numbers = #tpu.dot_dimension_numbers<[1], [0], [0], [1], [0, 0, 1, 1], [], []>} : vector<256x4xbf16>, vector<4x128xbf16>, vector<256x128xf32> -> vector<256x128xf32>
    %42 = arith.addf %36, %41 : vector<256x128xf32>
    %c0_49 = arith.constant 0 : index
    %c2_50 = arith.constant 2 : index
    %c1_51 = arith.constant 1 : index
    %c0_52 = arith.constant 0 : index
    %43 = vector.load %arg1[%c0_49, %c2_50, %c1_51, %c0_52] : memref<1x18x18x4xbf16, #tpu.memory_space<vmem>>, vector<1x16x16x4xbf16>
    %44 = vector.shape_cast %43 : vector<1x16x16x4xbf16> to vector<256x4xbf16>
    %c7 = arith.constant 7 : index
    %c0_53 = arith.constant 0 : index
    %c0_54 = arith.constant 0 : index
    %45 = vector.load %arg2[%c7, %c0_53, %c0_54] : memref<9x4x128xbf16, #tpu.memory_space<vmem>>, vector<1x4x128xbf16>
    %46 = vector.shape_cast %45 : vector<1x4x128xbf16> to vector<4x128xbf16>
    %cst_55 = arith.constant dense<0.000000e+00> : vector<256x128xf32>
    %47 = tpu.matmul %44, %46, %cst_55 {dimension_numbers = #tpu.dot_dimension_numbers<[1], [0], [0], [1], [0, 0, 1, 1], [], []>} : vector<256x4xbf16>, vector<4x128xbf16>, vector<256x128xf32> -> vector<256x128xf32>
    %48 = arith.addf %42, %47 : vector<256x128xf32>
    %c0_56 = arith.constant 0 : index
    %c2_57 = arith.constant 2 : index
    %c2_58 = arith.constant 2 : index
    %c0_59 = arith.constant 0 : index
    %49 = vector.load %arg1[%c0_56, %c2_57, %c2_58, %c0_59] : memref<1x18x18x4xbf16, #tpu.memory_space<vmem>>, vector<1x16x16x4xbf16>
    %50 = vector.shape_cast %49 : vector<1x16x16x4xbf16> to vector<256x4xbf16>
    %c8 = arith.constant 8 : index
    %c0_60 = arith.constant 0 : index
    %c0_61 = arith.constant 0 : index
    %51 = vector.load %arg2[%c8, %c0_60, %c0_61] : memref<9x4x128xbf16, #tpu.memory_space<vmem>>, vector<1x4x128xbf16>
    %52 = vector.shape_cast %51 : vector<1x4x128xbf16> to vector<4x128xbf16>
    %cst_62 = arith.constant dense<0.000000e+00> : vector<256x128xf32>
    %53 = tpu.matmul %50, %52, %cst_62 {dimension_numbers = #tpu.dot_dimension_numbers<[1], [0], [0], [1], [0, 0, 1, 1], [], []>} : vector<256x4xbf16>, vector<4x128xbf16>, vector<256x128xf32> -> vector<256x128xf32>
    %54 = arith.addf %48, %53 : vector<256x128xf32>
    %c0_63 = arith.constant 0 : index
    %c0_64 = arith.constant 0 : index
    %55 = vector.load %arg3[%c0_63, %c0_64] : memref<1x128xf32, #tpu.memory_space<vmem>>, vector<1x128xf32>
    %56 = vector.broadcast %55 : vector<1x128xf32> to vector<256x128xf32>
    %57 = arith.mulf %54, %56 : vector<256x128xf32>
    %c0_65 = arith.constant 0 : index
    %c0_66 = arith.constant 0 : index
    %58 = vector.load %arg4[%c0_65, %c0_66] : memref<256x128xf32, #tpu.memory_space<vmem>>, vector<256x128xf32>
    tpu.vector_store %arg4[%c0_65, %c0_66], %57 {strides = array<i32>} : memref<256x128xf32, #tpu.memory_space<vmem>>, vector<256x128xf32>,
    return
  }
  func.func @transform_0(%arg0: i32) -> (i32, i32, i32, i32) {
    %c0_i32 = arith.constant 0 : i32
    %c0_i32_0 = arith.constant 0 : i32
    %c0_i32_1 = arith.constant 0 : i32
    %c0_i32_2 = arith.constant 0 : i32
    return %arg0, %c0_i32, %c0_i32_0, %c0_i32_1 : i32, i32, i32, i32
  }
  func.func @transform_1(%arg0: i32) -> (i32, i32, i32) {
    %c0_i32 = arith.constant 0 : i32
    %c0_i32_0 = arith.constant 0 : i32
    %c0_i32_1 = arith.constant 0 : i32
    %c0_i32_2 = arith.constant 0 : i32
    return %c0_i32, %c0_i32_0, %c0_i32_1 : i32, i32, i32
  }
  func.func @transform_2(%arg0: i32) -> (i32, i32) {
    %c0_i32 = arith.constant 0 : i32
    %c0_i32_0 = arith.constant 0 : i32
    %c0_i32_1 = arith.constant 0 : i32
    return %c0_i32, %c0_i32_0 : i32, i32
  }
  func.func @transform_3(%arg0: i32) -> (i32, i32) {
    %c0_i32 = arith.constant 0 : i32
    %c0_i32_0 = arith.constant 0 : i32
    return %arg0, %c0_i32 : i32, i32
  }
}

</mosaic_0001>

<llo_original>
// kernel: tpu_custom_call.1
$region0: #{tpu_custom_call.1}
  #allocation0 [shape = 'u32[]', space=smem, size = 0x4, offset = 0x4, fixed_abs, tag = 'smem constant byte address 0x4 - core index']
  #allocation1 [shape = 'u32[72,128]{1,0:T(1,128)}', space=vmem, size = 0x9000, scoped, tag = 'internal scratch']
  %s0 = inlined_call_operand.vmem [shape: bf16[2,18,18,4], index: 0, kind: input, shape index: {}]
  %s1 = inlined_call_operand.vmem [shape: bf16[9,4,128], index: 1, kind: input, shape index: {}]
  %s2 = inlined_call_operand.vmem [shape: f32[1,128], index: 2, kind: input, shape index: {}]
  %s3 = inlined_call_operand.hbm [shape: f32[512,128], index: 3, kind: output, shape index: {}]
  %s4 = sld [smem:[#allocation0]]
  $region45: #{tpu_custom_call.1} parent=0
    _
  %s6 = ssub.s32 1, %s4
  %s7 = scalar_select 0, %s6, %s4
  $region1: #{tpu_custom_call.1} parent=0
    #allocation2 [shape = 'u8[262144]{0}', space=vmem, size = 0x40000, scoped, tag = 'output window, operand 0']
    #allocation3 [shape = 's32[2]{0}', space=sflag, size = 0x8, scoped, tag = 'scoped memory for tpu_custom_call.1']
    %8 = vsyncpa [#allocation3], 0
    %s9 = scalar_lea.sflag [#allocation3], 1
    %10 = vsyncpa %s9, 0
    loop: start=0, step=1, limit=4
    $region2: #{tpu_custom_call.1} parent=1 // loop_pre_header
      _
    $region3: #{tpu_custom_call.1} parent=1 // loop_header
      %s12 = sphi 0, %s16
      %p13 = scmp.ge.s32.totalorder %s12, 4
      %s22 = sphi 0, %s24
      %s25 = sphi 0, %s22
      %s26 = sphi 0, %s25
      %s42 = sphi 0, %s26
      %s46 = sphi 0, %s46
      %s48 = sphi 0, %s46
      %s49 = sphi 0, %s48
      %s63 = sphi 0, %s49
      %s67 = sphi 0, %s67
      %s69 = sphi 0, %s67
      %s70 = sphi 0, %s69
      %s84 = sphi 0, %s70
      %s90 = sphi 0, %s92
      %s93 = sphi 0, %s90
      %s94 = sphi 0, %s93
      %s110 = sphi 0, %s94
    $region4: #{tpu_custom_call.1} parent=1 // loop_header_branch
      %15 = sbr.rel (%p13) target = $region8
    $region5: #{tpu_custom_call.1} parent=1 // loop_body
      %s17 = ssub.s32 %s12, 1
      %s18 = ssub.s32 %s12, 2
      %s19 = sadd.s32 %s12, 1
      %s20 = ssub.s32 %s12, %s19
      %p21 = scmp.eq.s32.totalorder %s20, 0
      %s23 = sadd.s32 %s22, 1
      %s24 = scalar_select %p21, %s22, %s23
      %p27 = pneg %p21
      %p28 = scmp.eq.s32.totalorder %s12, 1
      %p29 = por %p27, %p28
      %p30 = scmp.ne.s32.totalorder %s22, %s25
      %p31 = scmp.eq.s32.totalorder %s12, 0
      %p32 = por %p30, %p31
      %p33 = scmp.ne.s32.totalorder %s22, %s25
      %p34 = scmp.eq.s32.totalorder %s17, 1
      %p35 = por %p33, %p34
      %p36 = scmp.ne.s32.totalorder %s25, %s26
      %p37 = scmp.eq.s32.totalorder %s17, 0
      %p38 = por %p36, %p37
      %p39 = scmp.ne.s32.totalorder %s25, %s26
      %p40 = scmp.eq.s32.totalorder %s18, 1
      %p41 = por %p39, %p40
      %p43 = scmp.ne.s32.totalorder %s26, %s42
      %p44 = scmp.eq.s32.totalorder %s18, 0
      %p45 = por %p43, %p44
      %s47 = sadd.s32 %s46, 1
      %p50 = scmp.eq.s32.totalorder %s12, 1
      %p51 = scmp.ne.s32.totalorder %s46, %s48
      %p52 = scmp.eq.s32.totalorder %s12, 0
      %p53 = por %p51, %p52
      %p54 = scmp.ne.s32.totalorder %s46, %s48
      %p55 = scmp.eq.s32.totalorder %s17, 1
      %p56 = por %p54, %p55
      %p57 = scmp.ne.s32.totalorder %s48, %s49
      %p58 = scmp.eq.s32.totalorder %s17, 0
      %p59 = por %p57, %p58
      %p60 = scmp.ne.s32.totalorder %s48, %s49
      %p61 = scmp.eq.s32.totalorder %s18, 1
      %p62 = por %p60, %p61
      %p64 = scmp.ne.s32.totalorder %s49, %s63
      %p65 = scmp.eq.s32.totalorder %s18, 0
      %p66 = por %p64, %p65
      %s68 = sadd.s32 %s67, 1
      %p71 = scmp.eq.s32.totalorder %s12, 1
      %p72 = scmp.ne.s32.totalorder %s67, %s69
      %p73 = scmp.eq.s32.totalorder %s12, 0
      %p74 = por %p72, %p73
      %p75 = scmp.ne.s32.totalorder %s67, %s69
      %p76 = scmp.eq.s32.totalorder %s17, 1
      %p77 = por %p75, %p76
      %p78 = scmp.ne.s32.totalorder %s69, %s70
      %p79 = scmp.eq.s32.totalorder %s17, 0
      %p80 = por %p78, %p79
      %p81 = scmp.ne.s32.totalorder %s69, %s70
      %p82 = scmp.eq.s32.totalorder %s18, 1
      %p83 = por %p81, %p82
      %p85 = scmp.ne.s32.totalorder %s70, %s84
      %p86 = scmp.eq.s32.totalorder %s18, 0
      %p87 = por %p85, %p86
      %s88 = ssub.s32 %s12, %s19
      %p89 = scmp.eq.s32.totalorder %s88, 0
      %s91 = sadd.s32 %s90, 1
      %s92 = scalar_select %p89, %s90, %s91
      %p95 = pneg %p89
      %p96 = scmp.eq.s32.totalorder %s12, 1
      %p97 = por %p95, %p96
      %p98 = scmp.ne.s32.totalorder %s90, %s93
      %p99 = scmp.eq.s32.totalorder %s12, 0
      %p100 = por %p98, %p99
      %p101 = scmp.ne.s32.totalorder %s90, %s93
      %p102 = scmp.eq.s32.totalorder %s17, 1
      %p103 = por %p101, %p102
      %p104 = scmp.ne.s32.totalorder %s93, %s94
      %p105 = scmp.eq.s32.totalorder %s17, 0
      %p106 = por %p104, %p105
      %p107 = scmp.ne.s32.totalorder %s93, %s94
      %p108 = scmp.eq.s32.totalorder %s18, 1
      %p109 = por %p107, %p108
      %p111 = scmp.ne.s32.totalorder %s94, %s110
      %p112 = scmp.eq.s32.totalorder %s18, 0
      %p113 = por %p111, %p112
      %p114 = scmp.le.s32.totalorder 1, %s12
      %p115 = scmp.lt.s32.totalorder %s12, 3
      %p116 = pnand %p114, %p115
      %p117 = pneg %p116
      // Predicated region
      $region9: #{tpu_custom_call.1} parent=5 // pred_check
        _
      $region10: #{tpu_custom_call.1} parent=5 // pred_check_branch
        %119 = sbr.rel (%p116) target = $region12
      $region11: #{tpu_custom_call.1} parent=5 // pred_region
        %s120 = ssub.s32 %s12, 1
        // Predicated region
        $region13: #{tpu_custom_call.1} parent=11 // pred_check
          %p121 = pneg %p59
        $region14: #{tpu_custom_call.1} parent=11 // pred_check_branch
          %123 = sbr.rel (%p121) target = $region16
        $region15: #{tpu_custom_call.1} parent=11 // pred_region
          _
        $region16: #{tpu_custom_call.1} parent=11 // pred_fallthru
          _
        // Predicated region
        $region17: #{tpu_custom_call.1} parent=11 // pred_check
          %p124 = pneg %p80
        $region18: #{tpu_custom_call.1} parent=11 // pred_check_branch
          %126 = sbr.rel (%p124) target = $region20
        $region19: #{tpu_custom_call.1} parent=11 // pred_region
          _
        $region20: #{tpu_custom_call.1} parent=11 // pred_fallthru
          _
      $region12: #{tpu_custom_call.1} parent=5 // pred_fallthru
        _
      %p127 = scmp.lt.s32.totalorder %s12, 2
      // Predicated region
      $region21: #{tpu_custom_call.1} parent=5 // pred_check
        %p128 = pneg %p127
      $region22: #{tpu_custom_call.1} parent=5 // pred_check_branch
        %130 = sbr.rel (%p128) target = $region24
      $region23: #{tpu_custom_call.1} parent=5 // pred_region
        // Predicated region
        $region25: #{tpu_custom_call.1} parent=23 // pred_check
          %p131 = pneg %p32
        $region26: #{tpu_custom_call.1} parent=23 // pred_check_branch
          %133 = sbr.rel (%p131) target = $region28
        $region27: #{tpu_custom_call.1} parent=23 // pred_region
          %p134 = scmp.lt.s32.totalorder %s12, 1
          %s135 = scalar_select %p134, %s12, 1
          %s136 = smul.addr %s135, 54
          %s137 = smul.addr %s136, 4
          %s138 = scalar_lea.vmem %s0, %s137
        $region28: #{tpu_custom_call.1} parent=23 // pred_fallthru
          _
      $region24: #{tpu_custom_call.1} parent=5 // pred_fallthru
        _
      %p139 = scmp.le.s32.totalorder 1, %s12
      %p140 = scmp.lt.s32.totalorder %s12, 3
      %p141 = pnand %p139, %p140
      %p142 = pneg %p141
      // Predicated region
      $region29: #{tpu_custom_call.1} parent=5 // pred_check
        _
      $region30: #{tpu_custom_call.1} parent=5 // pred_check_branch
        %144 = sbr.rel (%p141) target = $region32
      $region31: #{tpu_custom_call.1} parent=5 // pred_region
        %s145 = ssub.s32 %s12, 1
        %p146 = scmp.lt.s32.totalorder %s17, 1
        %s147 = scalar_select %p146, %s17, 1
        %s148 = smul.addr %s147, 54
        %s149 = smul.addr %s148, 4
        %s150 = scalar_lea.vmem %s0, %s149
        %p151 = pneg %p38
        %p152 = pneg %p35
        %p153 = pneg %p59
        %p154 = pneg %p56
        %p155 = pneg %p80
        %p156 = pneg %p77
        %p157 = pneg %p106
        %p158 = pneg %p103
        %s159 = sand.u32 %s93, 1
        %s160 = scalar_lea.sflag [#allocation3], %s159
        %s161 = sand.u32 %s93, 1
        %s162 = smul.addr %s161, 256
        %s163 = scalar_lea.vmem [#allocation2], %s162
        %p164 = scmp.lt.s32.totalorder %s17, 1
        %s165 = scalar_select %p164, %s17, 1
        %s166 = smul.addr %s165, 54
        %s167 = smul.addr %s166, 4
        %s168 = scalar_lea.vmem %s0, %s167
        %s169 = smul.u32 32, %s17
        %v171 = vld [vmem:[%s168] sm:$0xf]
        %v172 = vld [vmem:[%s168 + $0x4] sm:$0xf]
        %v173 = vld [vmem:[%s168 + $0xc] sm:$0xf]
        %v174 = vld [vmem:[%s168 + $0x10] sm:$0xf]
        %v175 = vld [vmem:[%s168 + $0x18] sm:$0xf]
        %v176 = vld [vmem:[%s168 + $0x1c] sm:$0xf]
        %v177 = vld [vmem:[%s168 + $0x24] sm:$0xf]
        %v178 = vld [vmem:[%s168 + $0x28] sm:$0xf]
        %v179 = vld [vmem:[%s168 + $0x30] sm:$0xf]
        %v180 = vld [vmem:[%s168 + $0x34] sm:$0xf]
        %v181 = vld [vmem:[%s168 + $0x3c] sm:$0xf]
        %v182 = vld [vmem:[%s168 + $0x40] sm:$0xf]
        %v183 = vld [vmem:[%s168 + $0x48] sm:$0xf]
        %v184 = vld [vmem:[%s168 + $0x4c] sm:$0xf]
        %v185 = vld [vmem:[%s168 + $0x54] sm:$0xf]
        %v186 = vld [vmem:[%s168 + $0x58] sm:$0xf]
        %v187 = vld [vmem:[%s168 + $0x60] sm:$0xf]
        %v188 = vld [vmem:[%s168 + $0x64] sm:$0xf]
        %v189 = vld [vmem:[%s168 + $0x6c] sm:$0xf]
        %v190 = vld [vmem:[%s168 + $0x70] sm:$0xf]
        %v191 = vld [vmem:[%s168 + $0x78] sm:$0xf]
        %v192 = vld [vmem:[%s168 + $0x7c] sm:$0xf]
        %v193 = vld [vmem:[%s168 + $0x84] sm:$0xf]
        %v194 = vld [vmem:[%s168 + $0x88] sm:$0xf]
        %v195 = vld [vmem:[%s168 + $0x90] sm:$0xf]
        %v196 = vld [vmem:[%s168 + $0x94] sm:$0xf]
        %v197 = vld [vmem:[%s168 + $0x9c] sm:$0xf]
        %v198 = vld [vmem:[%s168 + $0xa0] sm:$0xf]
        %v199 = vld [vmem:[%s168 + $0xa8] sm:$0xf]
        %v200 = vld [vmem:[%s168 + $0xac] sm:$0xf]
        %v201 = vld [vmem:[%s168 + $0xb4] sm:$0xf]
        %v202 = vld [vmem:[%s168 + $0xb8] sm:$0xf]
        %v203 = vld [vmem:[%s1] sm:$0x3]
        %v204 = vld [vmem:[%s168 + $0x8] sm:$0x1]
        %v205 = vld [vmem:[%s168 + $0x14] sm:$0x1]
        %v206 = vld [vmem:[%s168 + $0x20] sm:$0x1]
        %v207 = vld [vmem:[%s168 + $0x2c] sm:$0x1]
        %v208 = vld [vmem:[%s168 + $0x38] sm:$0x1]
        %v209 = vld [vmem:[%s168 + $0x44] sm:$0x1]
        %v210 = vld [vmem:[%s168 + $0x50] sm:$0x1]
        %v211 = vld [vmem:[%s168 + $0x5c] sm:$0x1]
        %v212 = vld [vmem:[%s168 + $0x68] sm:$0x1]
        %v213 = vld [vmem:[%s168 + $0x74] sm:$0x1]
        %v214 = vld [vmem:[%s168 + $0x80] sm:$0x1]
        %v215 = vld [vmem:[%s168 + $0x8c] sm:$0x1]
        %v216 = vld [vmem:[%s168 + $0x98] sm:$0x1]
        %v217 = vld [vmem:[%s168 + $0xa4] sm:$0x1]
        %v218 = vld [vmem:[%s168 + $0xb0] sm:$0x1]
        %v219 = vld [vmem:[%s168 + $0xbc] sm:$0x1]
        %vm220 = vsmask.f32 3328
        %vm221 = vsmask.f32 7440
        %vm222 = vmor %vm220, %vm221
        %v224 = vshrl.u32 %v171, 16
        %v226 = vrot.slane %v224, 4
        %v227 = vshll.u32 %v171, 16
        %v229 = vrot.slane %v227, 5
        %v230 = vor.u32 %v226, %v229
        %v231 = vrot.slane %v230, 4
        %v233 = vshll.u32 %v172, 16
        %v235 = vrot.slane %v233, 5
        %v236 = vsel %vm222, %v231, %v235
        %v237 = vshrl.u32 %v172, 16
        %v239 = vrot.slane %v237, 4
        %v240 = vor.u32 %v239, %v235
        %v241 = vrot.slane %v240, 4
        %v243 = vshll.u32 %v204, 16
        %v245 = vrot.slane %v243, 5
        %v246 = vsel %vm222, %v241, %v245
        %v248 = vshrl.u32 %v173, 16
        %v250 = vrot.slane %v248, 4
        %v251 = vshll.u32 %v173, 16
        %v253 = vrot.slane %v251, 5
        %v254 = vor.u32 %v250, %v253
        %v255 = vrot.slane %v254, 4
        %v257 = vshll.u32 %v174, 16
        %v259 = vrot.slane %v257, 5
        %v260 = vsel %vm222, %v255, %v259
        %v261 = vshrl.u32 %v174, 16
        %v263 = vrot.slane %v261, 4
        %v264 = vor.u32 %v263, %v259
        %v265 = vrot.slane %v264, 4
        %v267 = vshll.u32 %v205, 16
        %v269 = vrot.slane %v267, 5
        %v270 = vsel %vm222, %v265, %v269
        %v272 = vshrl.u32 %v175, 16
        %v274 = vrot.slane %v272, 4
        %v275 = vshll.u32 %v175, 16
        %v277 = vrot.slane %v275, 5
        %v278 = vor.u32 %v274, %v277
        %v279 = vrot.slane %v278, 4
        %v281 = vshll.u32 %v176, 16
        %v283 = vrot.slane %v281, 5
        %v284 = vsel %vm222, %v279, %v283
        %v285 = vshrl.u32 %v176, 16
        %v287 = vrot.slane %v285, 4
        %v288 = vor.u32 %v287, %v283
        %v289 = vrot.slane %v288, 4
        %v291 = vshll.u32 %v206, 16
        %v293 = vrot.slane %v291, 5
        %v294 = vsel %vm222, %v289, %v293
        %v296 = vshrl.u32 %v177, 16
        %v298 = vrot.slane %v296, 4
        %v299 = vshll.u32 %v177, 16
        %v301 = vrot.slane %v299, 5
        %v302 = vor.u32 %v298, %v301
        %v303 = vrot.slane %v302, 4
        %v305 = vshll.u32 %v178, 16
        %v307 = vrot.slane %v305, 5
        %v308 = vsel %vm222, %v303, %v307
        %v309 = vshrl.u32 %v178, 16
        %v311 = vrot.slane %v309, 4
        %v312 = vor.u32 %v311, %v307
        %v313 = vrot.slane %v312, 4
        %v315 = vshll.u32 %v207, 16
        %v317 = vrot.slane %v315, 5
        %v318 = vsel %vm222, %v313, %v317
        %v320 = vshrl.u32 %v179, 16
        %v322 = vrot.slane %v320, 4
        %v323 = vshll.u32 %v179, 16
        %v325 = vrot.slane %v323, 5
        %v326 = vor.u32 %v322, %v325
        %v327 = vrot.slane %v326, 4
        %v329 = vshll.u32 %v180, 16
        %v331 = vrot.slane %v329, 5
        %v332 = vsel %vm222, %v327, %v331
        %v333 = vshrl.u32 %v180, 16
        %v335 = vrot.slane %v333, 4
        %v336 = vor.u32 %v335, %v331
        %v337 = vrot.slane %v336, 4
        %v339 = vshll.u32 %v208, 16
        %v341 = vrot.slane %v339, 5
        %v342 = vsel %vm222, %v337, %v341
        %v344 = vshrl.u32 %v181, 16
        %v346 = vrot.slane %v344, 4
        %v347 = vshll.u32 %v181, 16
        %v349 = vrot.slane %v347, 5
        %v350 = vor.u32 %v346, %v349
        %v351 = vrot.slane %v350, 4
        %v353 = vshll.u32 %v182, 16
        %v355 = vrot.slane %v353, 5
        %v356 = vsel %vm222, %v351, %v355
        %v357 = vshrl.u32 %v182, 16
        %v359 = vrot.slane %v357, 4
        %v360 = vor.u32 %v359, %v355
        %v361 = vrot.slane %v360, 4
        %v363 = vshll.u32 %v209, 16
        %v365 = vrot.slane %v363, 5
        %v366 = vsel %vm222, %v361, %v365
        %v368 = vshrl.u32 %v183, 16
        %v370 = vrot.slane %v368, 4
        %v371 = vshll.u32 %v183, 16
        %v373 = vrot.slane %v371, 5
        %v374 = vor.u32 %v370, %v373
        %v375 = vrot.slane %v374, 4
        %v377 = vshll.u32 %v184, 16
        %v379 = vrot.slane %v377, 5
        %v380 = vsel %vm222, %v375, %v379
        %v381 = vshrl.u32 %v184, 16
        %v383 = vrot.slane %v381, 4
        %v384 = vor.u32 %v383, %v379
        %v385 = vrot.slane %v384, 4
        %v387 = vshll.u32 %v210, 16
        %v389 = vrot.slane %v387, 5
        %v390 = vsel %vm222, %v385, %v389
        %v392 = vshrl.u32 %v185, 16
        %v394 = vrot.slane %v392, 4
        %v395 = vshll.u32 %v185, 16
        %v397 = vrot.slane %v395, 5
        %v398 = vor.u32 %v394, %v397
        %v399 = vrot.slane %v398, 4
        %v401 = vshll.u32 %v186, 16
        %v403 = vrot.slane %v401, 5
        %v404 = vsel %vm222, %v399, %v403
        %v405 = vshrl.u32 %v186, 16
        %v407 = vrot.slane %v405, 4
        %v408 = vor.u32 %v407, %v403
        %v409 = vrot.slane %v408, 4
        %v411 = vshll.u32 %v211, 16
        %v413 = vrot.slane %v411, 5
        %v414 = vsel %vm222, %v409, %v413
        %v416 = vshrl.u32 %v187, 16
        %v418 = vrot.slane %v416, 4
        %v419 = vshll.u32 %v187, 16
        %v421 = vrot.slane %v419, 5
        %v422 = vor.u32 %v418, %v421
        %v423 = vrot.slane %v422, 4
        %v425 = vshll.u32 %v188, 16
        %v427 = vrot.slane %v425, 5
        %v428 = vsel %vm222, %v423, %v427
        %v429 = vshrl.u32 %v188, 16
        %v431 = vrot.slane %v429, 4
        %v432 = vor.u32 %v431, %v427
        %v433 = vrot.slane %v432, 4
        %v435 = vshll.u32 %v212, 16
        %v437 = vrot.slane %v435, 5
        %v438 = vsel %vm222, %v433, %v437
        %v440 = vshrl.u32 %v189, 16
        %v442 = vrot.slane %v440, 4
        %v443 = vshll.u32 %v189, 16
        %v445 = vrot.slane %v443, 5
        %v446 = vor.u32 %v442, %v445
        %v447 = vrot.slane %v446, 4
        %v449 = vshll.u32 %v190, 16
        %v451 = vrot.slane %v449, 5
        %v452 = vsel %vm222, %v447, %v451
        %v453 = vshrl.u32 %v190, 16
        %v455 = vrot.slane %v453, 4
        %v456 = vor.u32 %v455, %v451
        %v457 = vrot.slane %v456, 4
        %v459 = vshll.u32 %v213, 16
        %v461 = vrot.slane %v459, 5
        %v462 = vsel %vm222, %v457, %v461
        %v464 = vshrl.u32 %v191, 16
        %v466 = vrot.slane %v464, 4
        %v467 = vshll.u32 %v191, 16
        %v469 = vrot.slane %v467, 5
        %v470 = vor.u32 %v466, %v469
        %v471 = vrot.slane %v470, 4
        %v473 = vshll.u32 %v192, 16
        %v475 = vrot.slane %v473, 5
        %v476 = vsel %vm222, %v471, %v475
        %v477 = vshrl.u32 %v192, 16
        %v479 = vrot.slane %v477, 4
        %v480 = vor.u32 %v479, %v475
        %v481 = vrot.slane %v480, 4
        %v483 = vshll.u32 %v214, 16
        %v485 = vrot.slane %v483, 5
        %v486 = vsel %vm222, %v481, %v485
        %v488 = vshrl.u32 %v193, 16
        %v490 = vrot.slane %v488, 4
        %v491 = vshll.u32 %v193, 16
        %v493 = vrot.slane %v491, 5
        %v494 = vor.u32 %v490, %v493
        %v495 = vrot.slane %v494, 4
        %v497 = vshll.u32 %v194, 16
        %v499 = vrot.slane %v497, 5
        %v500 = vsel %vm222, %v495, %v499
        %v501 = vshrl.u32 %v194, 16
        %v503 = vrot.slane %v501, 4
        %v504 = vor.u32 %v503, %v499
        %v505 = vrot.slane %v504, 4
        %v507 = vshll.u32 %v215, 16
        %v509 = vrot.slane %v507, 5
        %v510 = vsel %vm222, %v505, %v509
        %v512 = vshrl.u32 %v195, 16
        %v514 = vrot.slane %v512, 4
        %v515 = vshll.u32 %v195, 16
        %v517 = vrot.slane %v515, 5
        %v518 = vor.u32 %v514, %v517
        %v519 = vrot.slane %v518, 4
        %v521 = vshll.u32 %v196, 16
        %v523 = vrot.slane %v521, 5
        %v524 = vsel %vm222, %v519, %v523
        %v525 = vshrl.u32 %v196, 16
        %v527 = vrot.slane %v525, 4
        %v528 = vor.u32 %v527, %v523
        %v529 = vrot.slane %v528, 4
        %v531 = vshll.u32 %v216, 16
        %v533 = vrot.slane %v531, 5
        %v534 = vsel %vm222, %v529, %v533
        %v536 = vshrl.u32 %v197, 16
        %v538 = vrot.slane %v536, 4
        %v539 = vshll.u32 %v197, 16
        %v541 = vrot.slane %v539, 5
        %v542 = vor.u32 %v538, %v541
        %v543 = vrot.slane %v542, 4
        %v545 = vshll.u32 %v198, 16
        %v547 = vrot.slane %v545, 5
        %v548 = vsel %vm222, %v543, %v547
        %v549 = vshrl.u32 %v198, 16
        %v551 = vrot.slane %v549, 4
        %v552 = vor.u32 %v551, %v547
        %v553 = vrot.slane %v552, 4
        %v555 = vshll.u32 %v217, 16
        %v557 = vrot.slane %v555, 5
        %v558 = vsel %vm222, %v553, %v557
        %v560 = vshrl.u32 %v199, 16
        %v562 = vrot.slane %v560, 4
        %v563 = vshll.u32 %v199, 16
        %v565 = vrot.slane %v563, 5
        %v566 = vor.u32 %v562, %v565
        %v567 = vrot.slane %v566, 4
        %v569 = vshll.u32 %v200, 16
        %v571 = vrot.slane %v569, 5
        %v572 = vsel %vm222, %v567, %v571
        %v573 = vshrl.u32 %v200, 16
        %v575 = vrot.slane %v573, 4
        %v576 = vor.u32 %v575, %v571
        %v577 = vrot.slane %v576, 4
        %v579 = vshll.u32 %v218, 16
        %v581 = vrot.slane %v579, 5
        %v582 = vsel %vm222, %v577, %v581
        %v584 = vshrl.u32 %v201, 16
        %v586 = vrot.slane %v584, 4
        %v587 = vshll.u32 %v201, 16
        %v589 = vrot.slane %v587, 5
        %v590 = vor.u32 %v586, %v589
        %v591 = vrot.slane %v590, 4
        %v593 = vshll.u32 %v202, 16
        %v595 = vrot.slane %v593, 5
        %v596 = vsel %vm222, %v591, %v595
        %v597 = vshrl.u32 %v202, 16
        %v599 = vrot.slane %v597, 4
        %v600 = vor.u32 %v599, %v595
        %v601 = vrot.slane %v600, 4
        %v603 = vshll.u32 %v219, 16
        %v605 = vrot.slane %v603, 5
        %v606 = vsel %vm222, %v601, %v605
        %s607 = scalar_lea.vmem %s1, 2
        %v608 = vld [vmem:[%s607] sm:$0x3]
        %v609 = vunpack.c.l.b16 %v236
        %v610 = vunpack.c.l.b16 %v246
        %v611 = vunpack.c.l.b16 %v260
        %v612 = vunpack.c.l.b16 %v270
        %v613 = vunpack.c.l.b16 %v284
        %v614 = vunpack.c.l.b16 %v294
        %v615 = vunpack.c.l.b16 %v308
        %v616 = vunpack.c.l.b16 %v318
        %v617 = vunpack.c.l.b16 %v332
        %v618 = vunpack.c.l.b16 %v342
        %v619 = vunpack.c.l.b16 %v356
        %v620 = vunpack.c.l.b16 %v366
        %v621 = vunpack.c.l.b16 %v380
        %v622 = vunpack.c.l.b16 %v390
        %v623 = vunpack.c.l.b16 %v404
        %v624 = vunpack.c.l.b16 %v414
        %v625 = vunpack.c.l.b16 %v428
        %v626 = vunpack.c.l.b16 %v438
        %v627 = vunpack.c.l.b16 %v452
        %v628 = vunpack.c.l.b16 %v462
        %v629 = vunpack.c.l.b16 %v476
        %v630 = vunpack.c.l.b16 %v486
        %v631 = vunpack.c.l.b16 %v500
        %v632 = vunpack.c.l.b16 %v510
        %v633 = vunpack.c.l.b16 %v524
        %v634 = vunpack.c.l.b16 %v534
        %v635 = vunpack.c.l.b16 %v548
        %v636 = vunpack.c.l.b16 %v558
        %v637 = vunpack.c.l.b16 %v572
        %v638 = vunpack.c.l.b16 %v582
        %v639 = vunpack.c.l.b16 %v596
        %v640 = vunpack.c.l.b16 %v606
        %v641 = vpack.c.b16 %v610, %v609
        %v642 = vpack.c.b16 %v612, %v611
        %v643 = vpack.c.b16 %v614, %v613
        %v644 = vpack.c.b16 %v616, %v615
        %v645 = vpack.c.b16 %v618, %v617
        %v646 = vpack.c.b16 %v620, %v619
        %v647 = vpack.c.b16 %v622, %v621
        %v648 = vpack.c.b16 %v624, %v623
        %v649 = vpack.c.b16 %v626, %v625
        %v650 = vpack.c.b16 %v628, %v627
        %v651 = vpack.c.b16 %v630, %v629
        %v652 = vpack.c.b16 %v632, %v631
        %v653 = vpack.c.b16 %v634, %v633
        %v654 = vpack.c.b16 %v636, %v635
        %v655 = vpack.c.b16 %v638, %v637
        %v656 = vpack.c.b16 %v640, %v639
        %vm657 = vcmask 31744
        %v659 = vsel %vm657, %v641, 0
        %v662 = vsel %vm657, %v642, 0
        %v665 = vsel %vm657, %v643, 0
        %v668 = vsel %vm657, %v644, 0
        %v671 = vsel %vm657, %v645, 0
        %v674 = vsel %vm657, %v646, 0
        %v677 = vsel %vm657, %v647, 0
        %v680 = vsel %vm657, %v648, 0
        %v683 = vsel %vm657, %v649, 0
        %v686 = vsel %vm657, %v650, 0
        %v689 = vsel %vm657, %v651, 0
        %v692 = vsel %vm657, %v652, 0
        %v695 = vsel %vm657, %v653, 0
        %v698 = vsel %vm657, %v654, 0
        %v701 = vsel %vm657, %v655, 0
        %v704 = vsel %vm657, %v656, 0
        %vm706 = vcmask 1041408
        %v708 = vsel %vm706, %v608, 0
        %710 = vmatpush.bf16.msra.mxu0 0
        %711 = vmatpush.bf16.msra.mxu0 0
        %712 = vmatpush.bf16.msra.mxu0 0
        %713 = vmatpush.bf16.msra.mxu0 0
        %714 = vmatpush.bf16.msra.mxu0 0
        %715 = vmatpush.bf16.msra.mxu0 0
        %716 = vmatpush.bf16.msra.mxu0 0
        %717 = vmatpush.bf16.msra.mxu0 %v708
        %718 = vmatmul.bf16.gmra.mxu0 %v659
        %v719 = vpop.f32.mrf.mxu0
        %v720 = vadd.f32 0.0, %v719
        %v721 = vpop.f32.mrf.mxu0
        %v722 = vadd.f32 0.0, %v721
        %723 = vmatmul.bf16.gmra.mxu0 %v662
        %v724 = vpop.f32.mrf.mxu0
        %v725 = vadd.f32 0.0, %v724
        %v726 = vpop.f32.mrf.mxu0
        %v727 = vadd.f32 0.0, %v726
        %728 = vmatmul.bf16.gmra.mxu0 %v665
        %v729 = vpop.f32.mrf.mxu0
        %v730 = vadd.f32 0.0, %v729
        %v731 = vpop.f32.mrf.mxu0
        %v732 = vadd.f32 0.0, %v731
        %733 = vmatmul.bf16.gmra.mxu0 %v668
        %v734 = vpop.f32.mrf.mxu0
        %v735 = vadd.f32 0.0, %v734
        %v736 = vpop.f32.mrf.mxu0
        %v737 = vadd.f32 0.0, %v736
        %738 = vmatmul.bf16.gmra.mxu0 %v671
        %v739 = vpop.f32.mrf.mxu0
        %v740 = vadd.f32 0.0, %v739
        %v741 = vpop.f32.mrf.mxu0
        %v742 = vadd.f32 0.0, %v741
        %743 = vmatmul.bf16.gmra.mxu0 %v674
        %v744 = vpop.f32.mrf.mxu0
        %v745 = vadd.f32 0.0, %v744
        %v746 = vpop.f32.mrf.mxu0
        %v747 = vadd.f32 0.0, %v746
        %748 = vmatmul.bf16.gmra.mxu0 %v677
        %v749 = vpop.f32.mrf.mxu0
        %v750 = vadd.f32 0.0, %v749
        %v751 = vpop.f32.mrf.mxu0
        %v752 = vadd.f32 0.0, %v751
        %753 = vmatmul.bf16.gmra.mxu0 %v680
        %v754 = vpop.f32.mrf.mxu0
        %v755 = vadd.f32 0.0, %v754
        %v756 = vpop.f32.mrf.mxu0
        %v757 = vadd.f32 0.0, %v756
        %758 = vmatmul.bf16.gmra.mxu0 %v683
        %v759 = vpop.f32.mrf.mxu0
        %v760 = vadd.f32 0.0, %v759
        %v761 = vpop.f32.mrf.mxu0
        %v762 = vadd.f32 0.0, %v761
        %763 = vmatmul.bf16.gmra.mxu0 %v686
        %v764 = vpop.f32.mrf.mxu0
        %v765 = vadd.f32 0.0, %v764
        %v766 = vpop.f32.mrf.mxu0
        %v767 = vadd.f32 0.0, %v766
        %768 = vmatmul.bf16.gmra.mxu0 %v689
        %v769 = vpop.f32.mrf.mxu0
        %v770 = vadd.f32 0.0, %v769
        %v771 = vpop.f32.mrf.mxu0
        %v772 = vadd.f32 0.0, %v771
        %773 = vmatmul.bf16.gmra.mxu0 %v692
        %v774 = vpop.f32.mrf.mxu0
        %v775 = vadd.f32 0.0, %v774
        %v776 = vpop.f32.mrf.mxu0
        %v777 = vadd.f32 0.0, %v776
        %778 = vmatmul.bf16.gmra.mxu0 %v695
        %v779 = vpop.f32.mrf.mxu0
        %v780 = vadd.f32 0.0, %v779
        %v781 = vpop.f32.mrf.mxu0
        %v782 = vadd.f32 0.0, %v781
        %783 = vmatmul.bf16.gmra.mxu0 %v698
        %v784 = vpop.f32.mrf.mxu0
        %v785 = vadd.f32 0.0, %v784
        %v786 = vpop.f32.mrf.mxu0
        %v787 = vadd.f32 0.0, %v786
        %788 = vmatmul.bf16.gmra.mxu0 %v701
        %v789 = vpop.f32.mrf.mxu0
        %v790 = vadd.f32 0.0, %v789
        %v791 = vpop.f32.mrf.mxu0
        %v792 = vadd.f32 0.0, %v791
        %793 = vmatmul.bf16.gmra.mxu0 %v704
        %v794 = vpop.f32.mrf.mxu0
        %v795 = vadd.f32 0.0, %v794
        %v796 = vpop.f32.mrf.mxu0
        %v797 = vadd.f32 0.0, %v796
        %798 = vdwg.mxu0
        %v831 = vunpack.c.l.b16 %v171
        %v832 = vunpack.c.l.b16 %v172
        %v833 = vunpack.c.l.b16 %v173
        %v834 = vunpack.c.l.b16 %v174
        %v835 = vunpack.c.l.b16 %v175
        %v836 = vunpack.c.l.b16 %v176
        %v837 = vunpack.c.l.b16 %v177
        %v838 = vunpack.c.l.b16 %v178
        %v839 = vunpack.c.l.b16 %v179
        %v840 = vunpack.c.l.b16 %v180
        %v841 = vunpack.c.l.b16 %v181
        %v842 = vunpack.c.l.b16 %v182
        %v843 = vunpack.c.l.b16 %v183
        %v844 = vunpack.c.l.b16 %v184
        %v845 = vunpack.c.l.b16 %v185
        %v846 = vunpack.c.l.b16 %v186
        %v847 = vunpack.c.l.b16 %v187
        %v848 = vunpack.c.l.b16 %v188
        %v849 = vunpack.c.l.b16 %v189
        %v850 = vunpack.c.l.b16 %v190
        %v851 = vunpack.c.l.b16 %v191
        %v852 = vunpack.c.l.b16 %v192
        %v853 = vunpack.c.l.b16 %v193
        %v854 = vunpack.c.l.b16 %v194
        %v855 = vunpack.c.l.b16 %v195
        %v856 = vunpack.c.l.b16 %v196
        %v857 = vunpack.c.l.b16 %v197
        %v858 = vunpack.c.l.b16 %v198
        %v859 = vunpack.c.l.b16 %v199
        %v860 = vunpack.c.l.b16 %v200
        %v861 = vunpack.c.l.b16 %v201
        %v862 = vunpack.c.l.b16 %v202
        %v863 = vpack.c.b16 %v832, %v831
        %v864 = vpack.c.b16 %v834, %v833
        %v865 = vpack.c.b16 %v836, %v835
        %v866 = vpack.c.b16 %v838, %v837
        %v867 = vpack.c.b16 %v840, %v839
        %v868 = vpack.c.b16 %v842, %v841
        %v869 = vpack.c.b16 %v844, %v843
        %v870 = vpack.c.b16 %v846, %v845
        %v871 = vpack.c.b16 %v848, %v847
        %v872 = vpack.c.b16 %v850, %v849
        %v873 = vpack.c.b16 %v852, %v851
        %v874 = vpack.c.b16 %v854, %v853
        %v875 = vpack.c.b16 %v856, %v855
        %v876 = vpack.c.b16 %v858, %v857
        %v877 = vpack.c.b16 %v860, %v859
        %v878 = vpack.c.b16 %v862, %v861
        %v880 = vsel %vm657, %v863, 0
        %v883 = vsel %vm657, %v864, 0
        %v886 = vsel %vm657, %v865, 0
        %v889 = vsel %vm657, %v866, 0
        %v892 = vsel %vm657, %v867, 0
        %v895 = vsel %vm657, %v868, 0
        %v898 = vsel %vm657, %v869, 0
        %v901 = vsel %vm657, %v870, 0
        %v904 = vsel %vm657, %v871, 0
        %v907 = vsel %vm657, %v872, 0
        %v910 = vsel %vm657, %v873, 0
        %v913 = vsel %vm657, %v874, 0
        %v916 = vsel %vm657, %v875, 0
        %v919 = vsel %vm657, %v876, 0
        %v922 = vsel %vm657, %v877, 0
        %v925 = vsel %vm657, %v878, 0
        %v928 = vsel %vm706, %v203, 0
        %930 = vmatpush.bf16.msra.mxu0 0
        %931 = vmatpush.bf16.msra.mxu0 0
        %932 = vmatpush.bf16.msra.mxu0 0
        %933 = vmatpush.bf16.msra.mxu0 0
        %934 = vmatpush.bf16.msra.mxu0 0
        %935 = vmatpush.bf16.msra.mxu0 0
        %936 = vmatpush.bf16.msra.mxu0 0
        %937 = vmatpush.bf16.msra.mxu0 %v928
        %938 = vmatmul.bf16.gmra.mxu0 %v880
        %v939 = vpop.f32.mrf.mxu0
        %v940 = vadd.f32 %v720, %v939
        %v941 = vpop.f32.mrf.mxu0
        %v942 = vadd.f32 %v722, %v941
        %943 = vmatmul.bf16.gmra.mxu0 %v883
        %v944 = vpop.f32.mrf.mxu0
        %v945 = vadd.f32 %v725, %v944
        %v946 = vpop.f32.mrf.mxu0
        %v947 = vadd.f32 %v727, %v946
        %948 = vmatmul.bf16.gmra.mxu0 %v886
        %v949 = vpop.f32.mrf.mxu0
        %v950 = vadd.f32 %v730, %v949
        %v951 = vpop.f32.mrf.mxu0
        %v952 = vadd.f32 %v732, %v951
        %953 = vmatmul.bf16.gmra.mxu0 %v889
        %v954 = vpop.f32.mrf.mxu0
        %v955 = vadd.f32 %v735, %v954
        %v956 = vpop.f32.mrf.mxu0
        %v957 = vadd.f32 %v737, %v956
        %958 = vmatmul.bf16.gmra.mxu0 %v892
        %v959 = vpop.f32.mrf.mxu0
        %v960 = vadd.f32 %v740, %v959
        %v961 = vpop.f32.mrf.mxu0
        %v962 = vadd.f32 %v742, %v961
        %963 = vmatmul.bf16.gmra.mxu0 %v895
        %v964 = vpop.f32.mrf.mxu0
        %v965 = vadd.f32 %v745, %v964
        %v966 = vpop.f32.mrf.mxu0
        %v967 = vadd.f32 %v747, %v966
        %968 = vmatmul.bf16.gmra.mxu0 %v898
        %v969 = vpop.f32.mrf.mxu0
        %v970 = vadd.f32 %v750, %v969
        %v971 = vpop.f32.mrf.mxu0
        %v972 = vadd.f32 %v752, %v971
        %973 = vmatmul.bf16.gmra.mxu0 %v901
        %v974 = vpop.f32.mrf.mxu0
        %v975 = vadd.f32 %v755, %v974
        %v976 = vpop.f32.mrf.mxu0
        %v977 = vadd.f32 %v757, %v976
        %978 = vmatmul.bf16.gmra.mxu0 %v904
        %v979 = vpop.f32.mrf.mxu0
        %v980 = vadd.f32 %v760, %v979
        %v981 = vpop.f32.mrf.mxu0
        %v982 = vadd.f32 %v762, %v981
        %983 = vmatmul.bf16.gmra.mxu0 %v907
        %v984 = vpop.f32.mrf.mxu0
        %v985 = vadd.f32 %v765, %v984
        %v986 = vpop.f32.mrf.mxu0
        %v987 = vadd.f32 %v767, %v986
        %988 = vmatmul.bf16.gmra.mxu0 %v910
        %v989 = vpop.f32.mrf.mxu0
        %v990 = vadd.f32 %v770, %v989
        %v991 = vpop.f32.mrf.mxu0
        %v992 = vadd.f32 %v772, %v991
        %993 = vmatmul.bf16.gmra.mxu0 %v913
        %v994 = vpop.f32.mrf.mxu0
        %v995 = vadd.f32 %v775, %v994
        %v996 = vpop.f32.mrf.mxu0
        %v997 = vadd.f32 %v777, %v996
        %998 = vmatmul.bf16.gmra.mxu0 %v916
        %v999 = vpop.f32.mrf.mxu0
        %v1000 = vadd.f32 %v780, %v999
        %v1001 = vpop.f32.mrf.mxu0
        %v1002 = vadd.f32 %v782, %v1001
        %1003 = vmatmul.bf16.gmra.mxu0 %v919
        %v1004 = vpop.f32.mrf.mxu0
        %v1005 = vadd.f32 %v785, %v1004
        %v1006 = vpop.f32.mrf.mxu0
        %v1007 = vadd.f32 %v787, %v1006
        %1008 = vmatmul.bf16.gmra.mxu0 %v922
        %v1009 = vpop.f32.mrf.mxu0
        %v1010 = vadd.f32 %v790, %v1009
        %v1011 = vpop.f32.mrf.mxu0
        %v1012 = vadd.f32 %v792, %v1011
        %1013 = vmatmul.bf16.gmra.mxu0 %v925
        %v1014 = vpop.f32.mrf.mxu0
        %v1015 = vadd.f32 %v795, %v1014
        %v1016 = vpop.f32.mrf.mxu0
        %v1017 = vadd.f32 %v797, %v1016
        %1018 = vdwg.mxu0
        %v1019 = vld [vmem:[%s168] sm:$0xe]
        %v1020 = vld [vmem:[%s168 + $0xc] sm:$0xe]
        %v1021 = vld [vmem:[%s168 + $0x18] sm:$0xe]
        %v1022 = vld [vmem:[%s168 + $0x24] sm:$0xe]
        %v1023 = vld [vmem:[%s168 + $0x30] sm:$0xe]
        %v1024 = vld [vmem:[%s168 + $0x3c] sm:$0xe]
        %v1025 = vld [vmem:[%s168 + $0x48] sm:$0xe]
        %v1026 = vld [vmem:[%s168 + $0x54] sm:$0xe]
        %v1027 = vld [vmem:[%s168 + $0x60] sm:$0xe]
        %v1028 = vld [vmem:[%s168 + $0x6c] sm:$0xe]
        %v1029 = vld [vmem:[%s168 + $0x78] sm:$0xe]
        %v1030 = vld [vmem:[%s168 + $0x84] sm:$0xe]
        %v1031 = vld [vmem:[%s168 + $0x90] sm:$0xe]
        %v1032 = vld [vmem:[%s168 + $0x9c] sm:$0xe]
        %v1033 = vld [vmem:[%s168 + $0xa8] sm:$0xe]
        %v1034 = vld [vmem:[%s168 + $0xb4] sm:$0xe]
        %vm1067 = vcmask 1042432
        %vm1068 = vcmask 1046532
        %vm1069 = vmor %vm1067, %vm1068
        %v1070 = vrot.slane %v1019, 5
        %v1071 = vrot.slane %v1070, 4
        %v1072 = vrot.slane %v172, 5
        %v1073 = vsel %vm1069, %v1071, %v1072
        %v1074 = vrot.slane %v1072, 4
        %v1075 = vrot.slane %v204, 5
        %v1076 = vsel %vm1069, %v1074, %v1075
        %v1077 = vrot.slane %v1020, 5
        %v1078 = vrot.slane %v1077, 4
        %v1079 = vrot.slane %v174, 5
        %v1080 = vsel %vm1069, %v1078, %v1079
        %v1081 = vrot.slane %v1079, 4
        %v1082 = vrot.slane %v205, 5
        %v1083 = vsel %vm1069, %v1081, %v1082
        %v1084 = vrot.slane %v1021, 5
        %v1085 = vrot.slane %v1084, 4
        %v1086 = vrot.slane %v176, 5
        %v1087 = vsel %vm1069, %v1085, %v1086
        %v1088 = vrot.slane %v1086, 4
        %v1089 = vrot.slane %v206, 5
        %v1090 = vsel %vm1069, %v1088, %v1089
        %v1091 = vrot.slane %v1022, 5
        %v1092 = vrot.slane %v1091, 4
        %v1093 = vrot.slane %v178, 5
        %v1094 = vsel %vm1069, %v1092, %v1093
        %v1095 = vrot.slane %v1093, 4
        %v1096 = vrot.slane %v207, 5
        %v1097 = vsel %vm1069, %v1095, %v1096
        %v1098 = vrot.slane %v1023, 5
        %v1099 = vrot.slane %v1098, 4
        %v1100 = vrot.slane %v180, 5
        %v1101 = vsel %vm1069, %v1099, %v1100
        %v1102 = vrot.slane %v1100, 4
        %v1103 = vrot.slane %v208, 5
        %v1104 = vsel %vm1069, %v1102, %v1103
        %v1105 = vrot.slane %v1024, 5
        %v1106 = vrot.slane %v1105, 4
        %v1107 = vrot.slane %v182, 5
        %v1108 = vsel %vm1069, %v1106, %v1107
        %v1109 = vrot.slane %v1107, 4
        %v1110 = vrot.slane %v209, 5
        %v1111 = vsel %vm1069, %v1109, %v1110
        %v1112 = vrot.slane %v1025, 5
        %v1113 = vrot.slane %v1112, 4
        %v1114 = vrot.slane %v184, 5
        %v1115 = vsel %vm1069, %v1113, %v1114
        %v1116 = vrot.slane %v1114, 4
        %v1117 = vrot.slane %v210, 5
        %v1118 = vsel %vm1069, %v1116, %v1117
        %v1119 = vrot.slane %v1026, 5
        %v1120 = vrot.slane %v1119, 4
        %v1121 = vrot.slane %v186, 5
        %v1122 = vsel %vm1069, %v1120, %v1121
        %v1123 = vrot.slane %v1121, 4
        %v1124 = vrot.slane %v211, 5
        %v1125 = vsel %vm1069, %v1123, %v1124
        %v1126 = vrot.slane %v1027, 5
        %v1127 = vrot.slane %v1126, 4
        %v1128 = vrot.slane %v188, 5
        %v1129 = vsel %vm1069, %v1127, %v1128
        %v1130 = vrot.slane %v1128, 4
        %v1131 = vrot.slane %v212, 5
        %v1132 = vsel %vm1069, %v1130, %v1131
        %v1133 = vrot.slane %v1028, 5
        %v1134 = vrot.slane %v1133, 4
        %v1135 = vrot.slane %v190, 5
        %v1136 = vsel %vm1069, %v1134, %v1135
        %v1137 = vrot.slane %v1135, 4
        %v1138 = vrot.slane %v213, 5
        %v1139 = vsel %vm1069, %v1137, %v1138
        %v1140 = vrot.slane %v1029, 5
        %v1141 = vrot.slane %v1140, 4
        %v1142 = vrot.slane %v192, 5
        %v1143 = vsel %vm1069, %v1141, %v1142
        %v1144 = vrot.slane %v1142, 4
        %v1145 = vrot.slane %v214, 5
        %v1146 = vsel %vm1069, %v1144, %v1145
        %v1147 = vrot.slane %v1030, 5
        %v1148 = vrot.slane %v1147, 4
        %v1149 = vrot.slane %v194, 5
        %v1150 = vsel %vm1069, %v1148, %v1149
        %v1151 = vrot.slane %v1149, 4
        %v1152 = vrot.slane %v215, 5
        %v1153 = vsel %vm1069, %v1151, %v1152
        %v1154 = vrot.slane %v1031, 5
        %v1155 = vrot.slane %v1154, 4
        %v1156 = vrot.slane %v196, 5
        %v1157 = vsel %vm1069, %v1155, %v1156
        %v1158 = vrot.slane %v1156, 4
        %v1159 = vrot.slane %v216, 5
        %v1160 = vsel %vm1069, %v1158, %v1159
        %v1161 = vrot.slane %v1032, 5
        %v1162 = vrot.slane %v1161, 4
        %v1163 = vrot.slane %v198, 5
        %v1164 = vsel %vm1069, %v1162, %v1163
        %v1165 = vrot.slane %v1163, 4
        %v1166 = vrot.slane %v217, 5
        %v1167 = vsel %vm1069, %v1165, %v1166
        %v1168 = vrot.slane %v1033, 5
        %v1169 = vrot.slane %v1168, 4
        %v1170 = vrot.slane %v200, 5
        %v1171 = vsel %vm1069, %v1169, %v1170
        %v1172 = vrot.slane %v1170, 4
        %v1173 = vrot.slane %v218, 5
        %v1174 = vsel %vm1069, %v1172, %v1173
        %v1175 = vrot.slane %v1034, 5
        %v1176 = vrot.slane %v1175, 4
        %v1177 = vrot.slane %v202, 5
        %v1178 = vsel %vm1069, %v1176, %v1177
        %v1179 = vrot.slane %v1177, 4
        %v1180 = vrot.slane %v219, 5
        %v1181 = vsel %vm1069, %v1179, %v1180
        %s1182 = scalar_lea.vmem %s1, 4
        %v1183 = vld [vmem:[%s1182] sm:$0x3]
        %v1184 = vunpack.c.l.b16 %v1073
        %v1185 = vunpack.c.l.b16 %v1076
        %v1186 = vunpack.c.l.b16 %v1080
        %v1187 = vunpack.c.l.b16 %v1083
        %v1188 = vunpack.c.l.b16 %v1087
        %v1189 = vunpack.c.l.b16 %v1090
        %v1190 = vunpack.c.l.b16 %v1094
        %v1191 = vunpack.c.l.b16 %v1097
        %v1192 = vunpack.c.l.b16 %v1101
        %v1193 = vunpack.c.l.b16 %v1104
        %v1194 = vunpack.c.l.b16 %v1108
        %v1195 = vunpack.c.l.b16 %v1111
        %v1196 = vunpack.c.l.b16 %v1115
        %v1197 = vunpack.c.l.b16 %v1118
        %v1198 = vunpack.c.l.b16 %v1122
        %v1199 = vunpack.c.l.b16 %v1125
        %v1200 = vunpack.c.l.b16 %v1129
        %v1201 = vunpack.c.l.b16 %v1132
        %v1202 = vunpack.c.l.b16 %v1136
        %v1203 = vunpack.c.l.b16 %v1139
        %v1204 = vunpack.c.l.b16 %v1143
        %v1205 = vunpack.c.l.b16 %v1146
        %v1206 = vunpack.c.l.b16 %v1150
        %v1207 = vunpack.c.l.b16 %v1153
        %v1208 = vunpack.c.l.b16 %v1157
        %v1209 = vunpack.c.l.b16 %v1160
        %v1210 = vunpack.c.l.b16 %v1164
        %v1211 = vunpack.c.l.b16 %v1167
        %v1212 = vunpack.c.l.b16 %v1171
        %v1213 = vunpack.c.l.b16 %v1174
        %v1214 = vunpack.c.l.b16 %v1178
        %v1215 = vunpack.c.l.b16 %v1181
        %v1216 = vpack.c.b16 %v1185, %v1184
        %v1217 = vpack.c.b16 %v1187, %v1186
        %v1218 = vpack.c.b16 %v1189, %v1188
        %v1219 = vpack.c.b16 %v1191, %v1190
        %v1220 = vpack.c.b16 %v1193, %v1192
        %v1221 = vpack.c.b16 %v1195, %v1194
        %v1222 = vpack.c.b16 %v1197, %v1196
        %v1223 = vpack.c.b16 %v1199, %v1198
        %v1224 = vpack.c.b16 %v1201, %v1200
        %v1225 = vpack.c.b16 %v1203, %v1202
        %v1226 = vpack.c.b16 %v1205, %v1204
        %v1227 = vpack.c.b16 %v1207, %v1206
        %v1228 = vpack.c.b16 %v1209, %v1208
        %v1229 = vpack.c.b16 %v1211, %v1210
        %v1230 = vpack.c.b16 %v1213, %v1212
        %v1231 = vpack.c.b16 %v1215, %v1214
        %v1233 = vsel %vm657, %v1216, 0
        %v1236 = vsel %vm657, %v1217, 0
        %v1239 = vsel %vm657, %v1218, 0
        %v1242 = vsel %vm657, %v1219, 0
        %v1245 = vsel %vm657, %v1220, 0
        %v1248 = vsel %vm657, %v1221, 0
        %v1251 = vsel %vm657, %v1222, 0
        %v1254 = vsel %vm657, %v1223, 0
        %v1257 = vsel %vm657, %v1224, 0
        %v1260 = vsel %vm657, %v1225, 0
        %v1263 = vsel %vm657, %v1226, 0
        %v1266 = vsel %vm657, %v1227, 0
        %v1269 = vsel %vm657, %v1228, 0
        %v1272 = vsel %vm657, %v1229, 0
        %v1275 = vsel %vm657, %v1230, 0
        %v1278 = vsel %vm657, %v1231, 0
        %v1281 = vsel %vm706, %v1183, 0
        %1283 = vmatpush.bf16.msra.mxu0 0
        %1284 = vmatpush.bf16.msra.mxu0 0
        %1285 = vmatpush.bf16.msra.mxu0 0
        %1286 = vmatpush.bf16.msra.mxu0 0
        %1287 = vmatpush.bf16.msra.mxu0 0
        %1288 = vmatpush.bf16.msra.mxu0 0
        %1289 = vmatpush.bf16.msra.mxu0 0
        %1290 = vmatpush.bf16.msra.mxu0 %v1281
        %1291 = vmatmul.bf16.gmra.mxu0 %v1233
        %v1292 = vpop.f32.mrf.mxu0
        %v1293 = vadd.f32 0.0, %v1292
        %v1294 = vpop.f32.mrf.mxu0
        %v1295 = vadd.f32 0.0, %v1294
        %1296 = vmatmul.bf16.gmra.mxu0 %v1236
        %v1297 = vpop.f32.mrf.mxu0
        %v1298 = vadd.f32 0.0, %v1297
        %v1299 = vpop.f32.mrf.mxu0
        %v1300 = vadd.f32 0.0, %v1299
        %1301 = vmatmul.bf16.gmra.mxu0 %v1239
        %v1302 = vpop.f32.mrf.mxu0
        %v1303 = vadd.f32 0.0, %v1302
        %v1304 = vpop.f32.mrf.mxu0
        %v1305 = vadd.f32 0.0, %v1304
        %1306 = vmatmul.bf16.gmra.mxu0 %v1242
        %v1307 = vpop.f32.mrf.mxu0
        %v1308 = vadd.f32 0.0, %v1307
        %v1309 = vpop.f32.mrf.mxu0
        %v1310 = vadd.f32 0.0, %v1309
        %1311 = vmatmul.bf16.gmra.mxu0 %v1245
        %v1312 = vpop.f32.mrf.mxu0
        %v1313 = vadd.f32 0.0, %v1312
        %v1314 = vpop.f32.mrf.mxu0
        %v1315 = vadd.f32 0.0, %v1314
        %1316 = vmatmul.bf16.gmra.mxu0 %v1248
        %v1317 = vpop.f32.mrf.mxu0
        %v1318 = vadd.f32 0.0, %v1317
        %v1319 = vpop.f32.mrf.mxu0
        %v1320 = vadd.f32 0.0, %v1319
        %1321 = vmatmul.bf16.gmra.mxu0 %v1251
        %v1322 = vpop.f32.mrf.mxu0
        %v1323 = vadd.f32 0.0, %v1322
        %v1324 = vpop.f32.mrf.mxu0
        %v1325 = vadd.f32 0.0, %v1324
        %1326 = vmatmul.bf16.gmra.mxu0 %v1254
        %v1327 = vpop.f32.mrf.mxu0
        %v1328 = vadd.f32 0.0, %v1327
        %v1329 = vpop.f32.mrf.mxu0
        %v1330 = vadd.f32 0.0, %v1329
        %1331 = vmatmul.bf16.gmra.mxu0 %v1257
        %v1332 = vpop.f32.mrf.mxu0
        %v1333 = vadd.f32 0.0, %v1332
        %v1334 = vpop.f32.mrf.mxu0
        %v1335 = vadd.f32 0.0, %v1334
        %1336 = vmatmul.bf16.gmra.mxu0 %v1260
        %v1337 = vpop.f32.mrf.mxu0
        %v1338 = vadd.f32 0.0, %v1337
        %v1339 = vpop.f32.mrf.mxu0
        %v1340 = vadd.f32 0.0, %v1339
        %1341 = vmatmul.bf16.gmra.mxu0 %v1263
        %v1342 = vpop.f32.mrf.mxu0
        %v1343 = vadd.f32 0.0, %v1342
        %v1344 = vpop.f32.mrf.mxu0
        %v1345 = vadd.f32 0.0, %v1344
        %1346 = vmatmul.bf16.gmra.mxu0 %v1266
        %v1347 = vpop.f32.mrf.mxu0
        %v1348 = vadd.f32 0.0, %v1347
        %v1349 = vpop.f32.mrf.mxu0
        %v1350 = vadd.f32 0.0, %v1349
        %1351 = vmatmul.bf16.gmra.mxu0 %v1269
        %v1352 = vpop.f32.mrf.mxu0
        %v1353 = vadd.f32 0.0, %v1352
        %v1354 = vpop.f32.mrf.mxu0
        %v1355 = vadd.f32 0.0, %v1354
        %1356 = vmatmul.bf16.gmra.mxu0 %v1272
        %v1357 = vpop.f32.mrf.mxu0
        %v1358 = vadd.f32 0.0, %v1357
        %v1359 = vpop.f32.mrf.mxu0
        %v1360 = vadd.f32 0.0, %v1359
        %1361 = vmatmul.bf16.gmra.mxu0 %v1275
        %v1362 = vpop.f32.mrf.mxu0
        %v1363 = vadd.f32 0.0, %v1362
        %v1364 = vpop.f32.mrf.mxu0
        %v1365 = vadd.f32 0.0, %v1364
        %1366 = vmatmul.bf16.gmra.mxu0 %v1278
        %v1367 = vpop.f32.mrf.mxu0
        %v1368 = vadd.f32 0.0, %v1367
        %v1369 = vpop.f32.mrf.mxu0
        %v1370 = vadd.f32 0.0, %v1369
        %1371 = vdwg.mxu0
        %v1372 = vadd.f32 %v940, %v1293
        %v1373 = vadd.f32 %v942, %v1295
        %v1374 = vadd.f32 %v945, %v1298
        %v1375 = vadd.f32 %v947, %v1300
        %v1376 = vadd.f32 %v950, %v1303
        %v1377 = vadd.f32 %v952, %v1305
        %v1378 = vadd.f32 %v955, %v1308
        %v1379 = vadd.f32 %v957, %v1310
        %v1380 = vadd.f32 %v960, %v1313
        %v1381 = vadd.f32 %v962, %v1315
        %v1382 = vadd.f32 %v965, %v1318
        %v1383 = vadd.f32 %v967, %v1320
        %v1384 = vadd.f32 %v970, %v1323
        %v1385 = vadd.f32 %v972, %v1325
        %v1386 = vadd.f32 %v975, %v1328
        %v1387 = vadd.f32 %v977, %v1330
        %v1388 = vadd.f32 %v980, %v1333
        %v1389 = vadd.f32 %v982, %v1335
        %v1390 = vadd.f32 %v985, %v1338
        %v1391 = vadd.f32 %v987, %v1340
        %v1392 = vadd.f32 %v990, %v1343
        %v1393 = vadd.f32 %v992, %v1345
        %v1394 = vadd.f32 %v995, %v1348
        %v1395 = vadd.f32 %v997, %v1350
        %v1396 = vadd.f32 %v1000, %v1353
        %v1397 = vadd.f32 %v1002, %v1355
        %v1398 = vadd.f32 %v1005, %v1358
        %v1399 = vadd.f32 %v1007, %v1360
        %v1400 = vadd.f32 %v1010, %v1363
        %v1401 = vadd.f32 %v1012, %v1365
        %v1402 = vadd.f32 %v1015, %v1368
        %v1403 = vadd.f32 %v1017, %v1370
        %s1404 = scalar_lea.vmem %s168, 12
        %v1405 = vld [vmem:[%s1404] sm:$0xf]
        %v1406 = vld [vmem:[%s1404 + $0x4] sm:$0xf]
        %v1407 = vld [vmem:[%s1404 + $0xc] sm:$0xf]
        %v1408 = vld [vmem:[%s1404 + $0x10] sm:$0xf]
        %v1409 = vld [vmem:[%s1404 + $0x18] sm:$0xf]
        %v1410 = vld [vmem:[%s1404 + $0x1c] sm:$0xf]
        %v1411 = vld [vmem:[%s1404 + $0x24] sm:$0xf]
        %v1412 = vld [vmem:[%s1404 + $0x28] sm:$0xf]
        %v1413 = vld [vmem:[%s1404 + $0x30] sm:$0xf]
        %v1414 = vld [vmem:[%s1404 + $0x34] sm:$0xf]
        %v1415 = vld [vmem:[%s1404 + $0x3c] sm:$0xf]
        %v1416 = vld [vmem:[%s1404 + $0x40] sm:$0xf]
        %v1417 = vld [vmem:[%s1404 + $0x48] sm:$0xf]
        %v1418 = vld [vmem:[%s1404 + $0x4c] sm:$0xf]
        %v1419 = vld [vmem:[%s1404 + $0x54] sm:$0xf]
        %v1420 = vld [vmem:[%s1404 + $0x58] sm:$0xf]
        %v1421 = vld [vmem:[%s1404 + $0x60] sm:$0xf]
        %v1422 = vld [vmem:[%s1404 + $0x64] sm:$0xf]
        %v1423 = vld [vmem:[%s1404 + $0x6c] sm:$0xf]
        %v1424 = vld [vmem:[%s1404 + $0x70] sm:$0xf]
        %v1425 = vld [vmem:[%s1404 + $0x78] sm:$0xf]
        %v1426 = vld [vmem:[%s1404 + $0x7c] sm:$0xf]
        %v1427 = vld [vmem:[%s1404 + $0x84] sm:$0xf]
        %v1428 = vld [vmem:[%s1404 + $0x88] sm:$0xf]
        %v1429 = vld [vmem:[%s1404 + $0x90] sm:$0xf]
        %v1430 = vld [vmem:[%s1404 + $0x94] sm:$0xf]
        %v1431 = vld [vmem:[%s1404 + $0x9c] sm:$0xf]
        %v1432 = vld [vmem:[%s1404 + $0xa0] sm:$0xf]
        %v1433 = vld [vmem:[%s1404 + $0xa8] sm:$0xf]
        %v1434 = vld [vmem:[%s1404 + $0xac] sm:$0xf]
        %v1435 = vld [vmem:[%s1404 + $0xb4] sm:$0xf]
        %v1436 = vld [vmem:[%s1404 + $0xb8] sm:$0xf]
        %s1437 = scalar_lea.vmem %s1, 6
        %v1438 = vld [vmem:[%s1437] sm:$0x3]
        %v1471 = vunpack.c.l.b16 %v1405
        %v1472 = vunpack.c.l.b16 %v1406
        %v1473 = vunpack.c.l.b16 %v1407
        %v1474 = vunpack.c.l.b16 %v1408
        %v1475 = vunpack.c.l.b16 %v1409
        %v1476 = vunpack.c.l.b16 %v1410
        %v1477 = vunpack.c.l.b16 %v1411
        %v1478 = vunpack.c.l.b16 %v1412
        %v1479 = vunpack.c.l.b16 %v1413
        %v1480 = vunpack.c.l.b16 %v1414
        %v1481 = vunpack.c.l.b16 %v1415
        %v1482 = vunpack.c.l.b16 %v1416
        %v1483 = vunpack.c.l.b16 %v1417
        %v1484 = vunpack.c.l.b16 %v1418
        %v1485 = vunpack.c.l.b16 %v1419
        %v1486 = vunpack.c.l.b16 %v1420
        %v1487 = vunpack.c.l.b16 %v1421
        %v1488 = vunpack.c.l.b16 %v1422
        %v1489 = vunpack.c.l.b16 %v1423
        %v1490 = vunpack.c.l.b16 %v1424
        %v1491 = vunpack.c.l.b16 %v1425
        %v1492 = vunpack.c.l.b16 %v1426
        %v1493 = vunpack.c.l.b16 %v1427
        %v1494 = vunpack.c.l.b16 %v1428
        %v1495 = vunpack.c.l.b16 %v1429
        %v1496 = vunpack.c.l.b16 %v1430
        %v1497 = vunpack.c.l.b16 %v1431
        %v1498 = vunpack.c.l.b16 %v1432
        %v1499 = vunpack.c.l.b16 %v1433
        %v1500 = vunpack.c.l.b16 %v1434
        %v1501 = vunpack.c.l.b16 %v1435
        %v1502 = vunpack.c.l.b16 %v1436
        %v1503 = vpack.c.b16 %v1472, %v1471
        %v1504 = vpack.c.b16 %v1474, %v1473
        %v1505 = vpack.c.b16 %v1476, %v1475
        %v1506 = vpack.c.b16 %v1478, %v1477
        %v1507 = vpack.c.b16 %v1480, %v1479
        %v1508 = vpack.c.b16 %v1482, %v1481
        %v1509 = vpack.c.b16 %v1484, %v1483
        %v1510 = vpack.c.b16 %v1486, %v1485
        %v1511 = vpack.c.b16 %v1488, %v1487
        %v1512 = vpack.c.b16 %v1490, %v1489
        %v1513 = vpack.c.b16 %v1492, %v1491
        %v1514 = vpack.c.b16 %v1494, %v1493
        %v1515 = vpack.c.b16 %v1496, %v1495
        %v1516 = vpack.c.b16 %v1498, %v1497
        %v1517 = vpack.c.b16 %v1500, %v1499
        %v1518 = vpack.c.b16 %v1502, %v1501
        %v1520 = vsel %vm657, %v1503, 0
        %v1523 = vsel %vm657, %v1504, 0
        %v1526 = vsel %vm657, %v1505, 0
        %v1529 = vsel %vm657, %v1506, 0
        %v1532 = vsel %vm657, %v1507, 0
        %v1535 = vsel %vm657, %v1508, 0
        %v1538 = vsel %vm657, %v1509, 0
        %v1541 = vsel %vm657, %v1510, 0
        %v1544 = vsel %vm657, %v1511, 0
        %v1547 = vsel %vm657, %v1512, 0
        %v1550 = vsel %vm657, %v1513, 0
        %v1553 = vsel %vm657, %v1514, 0
        %v1556 = vsel %vm657, %v1515, 0
        %v1559 = vsel %vm657, %v1516, 0
        %v1562 = vsel %vm657, %v1517, 0
        %v1565 = vsel %vm657, %v1518, 0
        %v1568 = vsel %vm706, %v1438, 0
        %1570 = vmatpush.bf16.msra.mxu0 0
        %1571 = vmatpush.bf16.msra.mxu0 0
        %1572 = vmatpush.bf16.msra.mxu0 0
        %1573 = vmatpush.bf16.msra.mxu0 0
        %1574 = vmatpush.bf16.msra.mxu0 0
        %1575 = vmatpush.bf16.msra.mxu0 0
        %1576 = vmatpush.bf16.msra.mxu0 0
        %1577 = vmatpush.bf16.msra.mxu0 %v1568
        %1578 = vmatmul.bf16.gmra.mxu0 %v1520
        %v1579 = vpop.f32.mrf.mxu0
        %v1580 = vadd.f32 0.0, %v1579
        %v1581 = vpop.f32.mrf.mxu0
        %v1582 = vadd.f32 0.0, %v1581
        %1583 = vmatmul.bf16.gmra.mxu0 %v1523
        %v1584 = vpop.f32.mrf.mxu0
        %v1585 = vadd.f32 0.0, %v1584
        %v1586 = vpop.f32.mrf.mxu0
        %v1587 = vadd.f32 0.0, %v1586
        %1588 = vmatmul.bf16.gmra.mxu0 %v1526
        %v1589 = vpop.f32.mrf.mxu0
        %v1590 = vadd.f32 0.0, %v1589
        %v1591 = vpop.f32.mrf.mxu0
        %v1592 = vadd.f32 0.0, %v1591
        %1593 = vmatmul.bf16.gmra.mxu0 %v1529
        %v1594 = vpop.f32.mrf.mxu0
        %v1595 = vadd.f32 0.0, %v1594
        %v1596 = vpop.f32.mrf.mxu0
        %v1597 = vadd.f32 0.0, %v1596
        %1598 = vmatmul.bf16.gmra.mxu0 %v1532
        %v1599 = vpop.f32.mrf.mxu0
        %v1600 = vadd.f32 0.0, %v1599
        %v1601 = vpop.f32.mrf.mxu0
        %v1602 = vadd.f32 0.0, %v1601
        %1603 = vmatmul.bf16.gmra.mxu0 %v1535
        %v1604 = vpop.f32.mrf.mxu0
        %v1605 = vadd.f32 0.0, %v1604
        %v1606 = vpop.f32.mrf.mxu0
        %v1607 = vadd.f32 0.0, %v1606
        %1608 = vmatmul.bf16.gmra.mxu0 %v1538
        %v1609 = vpop.f32.mrf.mxu0
        %v1610 = vadd.f32 0.0, %v1609
        %v1611 = vpop.f32.mrf.mxu0
        %v1612 = vadd.f32 0.0, %v1611
        %1613 = vmatmul.bf16.gmra.mxu0 %v1541
        %v1614 = vpop.f32.mrf.mxu0
        %v1615 = vadd.f32 0.0, %v1614
        %v1616 = vpop.f32.mrf.mxu0
        %v1617 = vadd.f32 0.0, %v1616
        %1618 = vmatmul.bf16.gmra.mxu0 %v1544
        %v1619 = vpop.f32.mrf.mxu0
        %v1620 = vadd.f32 0.0, %v1619
        %v1621 = vpop.f32.mrf.mxu0
        %v1622 = vadd.f32 0.0, %v1621
        %1623 = vmatmul.bf16.gmra.mxu0 %v1547
        %v1624 = vpop.f32.mrf.mxu0
        %v1625 = vadd.f32 0.0, %v1624
        %v1626 = vpop.f32.mrf.mxu0
        %v1627 = vadd.f32 0.0, %v1626
        %1628 = vmatmul.bf16.gmra.mxu0 %v1550
        %v1629 = vpop.f32.mrf.mxu0
        %v1630 = vadd.f32 0.0, %v1629
        %v1631 = vpop.f32.mrf.mxu0
        %v1632 = vadd.f32 0.0, %v1631
        %1633 = vmatmul.bf16.gmra.mxu0 %v1553
        %v1634 = vpop.f32.mrf.mxu0
        %v1635 = vadd.f32 0.0, %v1634
        %v1636 = vpop.f32.mrf.mxu0
        %v1637 = vadd.f32 0.0, %v1636
        %1638 = vmatmul.bf16.gmra.mxu0 %v1556
        %v1639 = vpop.f32.mrf.mxu0
        %v1640 = vadd.f32 0.0, %v1639
        %v1641 = vpop.f32.mrf.mxu0
        %v1642 = vadd.f32 0.0, %v1641
        %1643 = vmatmul.bf16.gmra.mxu0 %v1559
        %v1644 = vpop.f32.mrf.mxu0
        %v1645 = vadd.f32 0.0, %v1644
        %v1646 = vpop.f32.mrf.mxu0
        %v1647 = vadd.f32 0.0, %v1646
        %1648 = vmatmul.bf16.gmra.mxu0 %v1562
        %v1649 = vpop.f32.mrf.mxu0
        %v1650 = vadd.f32 0.0, %v1649
        %v1651 = vpop.f32.mrf.mxu0
        %v1652 = vadd.f32 0.0, %v1651
        %1653 = vmatmul.bf16.gmra.mxu0 %v1565
        %v1654 = vpop.f32.mrf.mxu0
        %v1655 = vadd.f32 0.0, %v1654
        %v1656 = vpop.f32.mrf.mxu0
        %v1657 = vadd.f32 0.0, %v1656
        %1658 = vdwg.mxu0
        %v1659 = vadd.f32 %v1372, %v1580
        %v1660 = vadd.f32 %v1373, %v1582
        %v1661 = vadd.f32 %v1374, %v1585
        %v1662 = vadd.f32 %v1375, %v1587
        %v1663 = vadd.f32 %v1376, %v1590
        %v1664 = vadd.f32 %v1377, %v1592
        %v1665 = vadd.f32 %v1378, %v1595
        %v1666 = vadd.f32 %v1379, %v1597
        %v1667 = vadd.f32 %v1380, %v1600
        %v1668 = vadd.f32 %v1381, %v1602
        %v1669 = vadd.f32 %v1382, %v1605
        %v1670 = vadd.f32 %v1383, %v1607
        %v1671 = vadd.f32 %v1384, %v1610
        %v1672 = vadd.f32 %v1385, %v1612
        %v1673 = vadd.f32 %v1386, %v1615
        %v1674 = vadd.f32 %v1387, %v1617
        %v1675 = vadd.f32 %v1388, %v1620
        %v1676 = vadd.f32 %v1389, %v1622
        %v1677 = vadd.f32 %v1390, %v1625
        %v1678 = vadd.f32 %v1391, %v1627
        %v1679 = vadd.f32 %v1392, %v1630
        %v1680 = vadd.f32 %v1393, %v1632
        %v1681 = vadd.f32 %v1394, %v1635
        %v1682 = vadd.f32 %v1395, %v1637
        %v1683 = vadd.f32 %v1396, %v1640
        %v1684 = vadd.f32 %v1397, %v1642
        %v1685 = vadd.f32 %v1398, %v1645
        %v1686 = vadd.f32 %v1399, %v1647
        %v1687 = vadd.f32 %v1400, %v1650
        %v1688 = vadd.f32 %v1401, %v1652
        %v1689 = vadd.f32 %v1402, %v1655
        %v1690 = vadd.f32 %v1403, %v1657
        %v1691 = vld [vmem:[%s1404] sm:$0xf]
        %v1692 = vld [vmem:[%s1404 + $0x4] sm:$0xf]
        %v1693 = vld [vmem:[%s1404 + $0x8] sm:$0x1]
        %v1694 = vld [vmem:[%s1404 + $0xc] sm:$0xf]
        %v1695 = vld [vmem:[%s1404 + $0x10] sm:$0xf]
        %v1696 = vld [vmem:[%s1404 + $0x14] sm:$0x1]
        %v1697 = vld [vmem:[%s1404 + $0x18] sm:$0xf]
        %v1698 = vld [vmem:[%s1404 + $0x1c] sm:$0xf]
        %v1699 = vld [vmem:[%s1404 + $0x20] sm:$0x1]
        %v1700 = vld [vmem:[%s1404 + $0x24] sm:$0xf]
        %v1701 = vld [vmem:[%s1404 + $0x28] sm:$0xf]
        %v1702 = vld [vmem:[%s1404 + $0x2c] sm:$0x1]
        %v1703 = vld [vmem:[%s1404 + $0x30] sm:$0xf]
        %v1704 = vld [vmem:[%s1404 + $0x34] sm:$0xf]
        %v1705 = vld [vmem:[%s1404 + $0x38] sm:$0x1]
        %v1706 = vld [vmem:[%s1404 + $0x3c] sm:$0xf]
        %v1707 = vld [vmem:[%s1404 + $0x40] sm:$0xf]
        %v1708 = vld [vmem:[%s1404 + $0x44] sm:$0x1]
        %v1709 = vld [vmem:[%s1404 + $0x48] sm:$0xf]
        %v1710 = vld [vmem:[%s1404 + $0x4c] sm:$0xf]
        %v1711 = vld [vmem:[%s1404 + $0x50] sm:$0x1]
        %v1712 = vld [vmem:[%s1404 + $0x54] sm:$0xf]
        %v1713 = vld [vmem:[%s1404 + $0x58] sm:$0xf]
        %v1714 = vld [vmem:[%s1404 + $0x5c] sm:$0x1]
        %v1715 = vld [vmem:[%s1404 + $0x60] sm:$0xf]
        %v1716 = vld [vmem:[%s1404 + $0x64] sm:$0xf]
        %v1717 = vld [vmem:[%s1404 + $0x68] sm:$0x1]
        %v1718 = vld [vmem:[%s1404 + $0x6c] sm:$0xf]
        %v1719 = vld [vmem:[%s1404 + $0x70] sm:$0xf]
        %v1720 = vld [vmem:[%s1404 + $0x74] sm:$0x1]
        %v1721 = vld [vmem:[%s1404 + $0x78] sm:$0xf]
        %v1722 = vld [vmem:[%s1404 + $0x7c] sm:$0xf]
        %v1723 = vld [vmem:[%s1404 + $0x80] sm:$0x1]
        %v1724 = vld [vmem:[%s1404 + $0x84] sm:$0xf]
        %v1725 = vld [vmem:[%s1404 + $0x88] sm:$0xf]
        %v1726 = vld [vmem:[%s1404 + $0x8c] sm:$0x1]
        %v1727 = vld [vmem:[%s1404 + $0x90] sm:$0xf]
        %v1728 = vld [vmem:[%s1404 + $0x94] sm:$0xf]
        %v1729 = vld [vmem:[%s1404 + $0x98] sm:$0x1]
        %v1730 = vld [vmem:[%s1404 + $0x9c] sm:$0xf]
        %v1731 = vld [vmem:[%s1404 + $0xa0] sm:$0xf]
        %v1732 = vld [vmem:[%s1404 + $0xa4] sm:$0x1]
        %v1733 = vld [vmem:[%s1404 + $0xa8] sm:$0xf]
        %v1734 = vld [vmem:[%s1404 + $0xac] sm:$0xf]
        %v1735 = vld [vmem:[%s1404 + $0xb0] sm:$0x1]
        %v1736 = vld [vmem:[%s1404 + $0xb4] sm:$0xf]
        %v1737 = vld [vmem:[%s1404 + $0xb8] sm:$0xf]
        %v1738 = vld [vmem:[%s1404 + $0xbc] sm:$0x1]
        %v1740 = vshrl.u32 %v1691, 16
        %v1742 = vrot.slane %v1740, 4
        %v1743 = vshll.u32 %v1691, 16
        %v1745 = vrot.slane %v1743, 5
        %v1746 = vor.u32 %v1742, %v1745
        %v1747 = vrot.slane %v1746, 4
        %v1749 = vshll.u32 %v1692, 16
        %v1751 = vrot.slane %v1749, 5
        %v1752 = vsel %vm222, %v1747, %v1751
        %v1753 = vshrl.u32 %v1692, 16
        %v1755 = vrot.slane %v1753, 4
        %v1756 = vor.u32 %v1755, %v1751
        %v1757 = vrot.slane %v1756, 4
        %v1759 = vshll.u32 %v1693, 16
        %v1761 = vrot.slane %v1759, 5
        %v1762 = vsel %vm222, %v1757, %v1761
        %v1764 = vshrl.u32 %v1694, 16
        %v1766 = vrot.slane %v1764, 4
        %v1767 = vshll.u32 %v1694, 16
        %v1769 = vrot.slane %v1767, 5
        %v1770 = vor.u32 %v1766, %v1769
        %v1771 = vrot.slane %v1770, 4
        %v1773 = vshll.u32 %v1695, 16
        %v1775 = vrot.slane %v1773, 5
        %v1776 = vsel %vm222, %v1771, %v1775
        %v1777 = vshrl.u32 %v1695, 16
        %v1779 = vrot.slane %v1777, 4
        %v1780 = vor.u32 %v1779, %v1775
        %v1781 = vrot.slane %v1780, 4
        %v1783 = vshll.u32 %v1696, 16
        %v1785 = vrot.slane %v1783, 5
        %v1786 = vsel %vm222, %v1781, %v1785
        %v1788 = vshrl.u32 %v1697, 16
        %v1790 = vrot.slane %v1788, 4
        %v1791 = vshll.u32 %v1697, 16
        %v1793 = vrot.slane %v1791, 5
        %v1794 = vor.u32 %v1790, %v1793
        %v1795 = vrot.slane %v1794, 4
        %v1797 = vshll.u32 %v1698, 16
        %v1799 = vrot.slane %v1797, 5
        %v1800 = vsel %vm222, %v1795, %v1799
        %v1801 = vshrl.u32 %v1698, 16
        %v1803 = vrot.slane %v1801, 4
        %v1804 = vor.u32 %v1803, %v1799
        %v1805 = vrot.slane %v1804, 4
        %v1807 = vshll.u32 %v1699, 16
        %v1809 = vrot.slane %v1807, 5
        %v1810 = vsel %vm222, %v1805, %v1809
        %v1812 = vshrl.u32 %v1700, 16
        %v1814 = vrot.slane %v1812, 4
        %v1815 = vshll.u32 %v1700, 16
        %v1817 = vrot.slane %v1815, 5
        %v1818 = vor.u32 %v1814, %v1817
        %v1819 = vrot.slane %v1818, 4
        %v1821 = vshll.u32 %v1701, 16
        %v1823 = vrot.slane %v1821, 5
        %v1824 = vsel %vm222, %v1819, %v1823
        %v1825 = vshrl.u32 %v1701, 16
        %v1827 = vrot.slane %v1825, 4
        %v1828 = vor.u32 %v1827, %v1823
        %v1829 = vrot.slane %v1828, 4
        %v1831 = vshll.u32 %v1702, 16
        %v1833 = vrot.slane %v1831, 5
        %v1834 = vsel %vm222, %v1829, %v1833
        %v1836 = vshrl.u32 %v1703, 16
        %v1838 = vrot.slane %v1836, 4
        %v1839 = vshll.u32 %v1703, 16
        %v1841 = vrot.slane %v1839, 5
        %v1842 = vor.u32 %v1838, %v1841
        %v1843 = vrot.slane %v1842, 4
        %v1845 = vshll.u32 %v1704, 16
        %v1847 = vrot.slane %v1845, 5
        %v1848 = vsel %vm222, %v1843, %v1847
        %v1849 = vshrl.u32 %v1704, 16
        %v1851 = vrot.slane %v1849, 4
        %v1852 = vor.u32 %v1851, %v1847
        %v1853 = vrot.slane %v1852, 4
        %v1855 = vshll.u32 %v1705, 16
        %v1857 = vrot.slane %v1855, 5
        %v1858 = vsel %vm222, %v1853, %v1857
        %v1860 = vshrl.u32 %v1706, 16
        %v1862 = vrot.slane %v1860, 4
        %v1863 = vshll.u32 %v1706, 16
        %v1865 = vrot.slane %v1863, 5
        %v1866 = vor.u32 %v1862, %v1865
        %v1867 = vrot.slane %v1866, 4
        %v1869 = vshll.u32 %v1707, 16
        %v1871 = vrot.slane %v1869, 5
        %v1872 = vsel %vm222, %v1867, %v1871
        %v1873 = vshrl.u32 %v1707, 16
        %v1875 = vrot.slane %v1873, 4
        %v1876 = vor.u32 %v1875, %v1871
        %v1877 = vrot.slane %v1876, 4
        %v1879 = vshll.u32 %v1708, 16
        %v1881 = vrot.slane %v1879, 5
        %v1882 = vsel %vm222, %v1877, %v1881
        %v1884 = vshrl.u32 %v1709, 16
        %v1886 = vrot.slane %v1884, 4
        %v1887 = vshll.u32 %v1709, 16
        %v1889 = vrot.slane %v1887, 5
        %v1890 = vor.u32 %v1886, %v1889
        %v1891 = vrot.slane %v1890, 4
        %v1893 = vshll.u32 %v1710, 16
        %v1895 = vrot.slane %v1893, 5
        %v1896 = vsel %vm222, %v1891, %v1895
        %v1897 = vshrl.u32 %v1710, 16
        %v1899 = vrot.slane %v1897, 4
        %v1900 = vor.u32 %v1899, %v1895
        %v1901 = vrot.slane %v1900, 4
        %v1903 = vshll.u32 %v1711, 16
        %v1905 = vrot.slane %v1903, 5
        %v1906 = vsel %vm222, %v1901, %v1905
        %v1908 = vshrl.u32 %v1712, 16
        %v1910 = vrot.slane %v1908, 4
        %v1911 = vshll.u32 %v1712, 16
        %v1913 = vrot.slane %v1911, 5
        %v1914 = vor.u32 %v1910, %v1913
        %v1915 = vrot.slane %v1914, 4
        %v1917 = vshll.u32 %v1713, 16
        %v1919 = vrot.slane %v1917, 5
        %v1920 = vsel %vm222, %v1915, %v1919
        %v1921 = vshrl.u32 %v1713, 16
        %v1923 = vrot.slane %v1921, 4
        %v1924 = vor.u32 %v1923, %v1919
        %v1925 = vrot.slane %v1924, 4
        %v1927 = vshll.u32 %v1714, 16
        %v1929 = vrot.slane %v1927, 5
        %v1930 = vsel %vm222, %v1925, %v1929
        %v1932 = vshrl.u32 %v1715, 16
        %v1934 = vrot.slane %v1932, 4
        %v1935 = vshll.u32 %v1715, 16
        %v1937 = vrot.slane %v1935, 5
        %v1938 = vor.u32 %v1934, %v1937
        %v1939 = vrot.slane %v1938, 4
        %v1941 = vshll.u32 %v1716, 16
        %v1943 = vrot.slane %v1941, 5
        %v1944 = vsel %vm222, %v1939, %v1943
        %v1945 = vshrl.u32 %v1716, 16
        %v1947 = vrot.slane %v1945, 4
        %v1948 = vor.u32 %v1947, %v1943
        %v1949 = vrot.slane %v1948, 4
        %v1951 = vshll.u32 %v1717, 16
        %v1953 = vrot.slane %v1951, 5
        %v1954 = vsel %vm222, %v1949, %v1953
        %v1956 = vshrl.u32 %v1718, 16
        %v1958 = vrot.slane %v1956, 4
        %v1959 = vshll.u32 %v1718, 16
        %v1961 = vrot.slane %v1959, 5
        %v1962 = vor.u32 %v1958, %v1961
        %v1963 = vrot.slane %v1962, 4
        %v1965 = vshll.u32 %v1719, 16
        %v1967 = vrot.slane %v1965, 5
        %v1968 = vsel %vm222, %v1963, %v1967
        %v1969 = vshrl.u32 %v1719, 16
        %v1971 = vrot.slane %v1969, 4
        %v1972 = vor.u32 %v1971, %v1967
        %v1973 = vrot.slane %v1972, 4
        %v1975 = vshll.u32 %v1720, 16
        %v1977 = vrot.slane %v1975, 5
        %v1978 = vsel %vm222, %v1973, %v1977
        %v1980 = vshrl.u32 %v1721, 16
        %v1982 = vrot.slane %v1980, 4
        %v1983 = vshll.u32 %v1721, 16
        %v1985 = vrot.slane %v1983, 5
        %v1986 = vor.u32 %v1982, %v1985
        %v1987 = vrot.slane %v1986, 4
        %v1989 = vshll.u32 %v1722, 16
        %v1991 = vrot.slane %v1989, 5
        %v1992 = vsel %vm222, %v1987, %v1991
        %v1993 = vshrl.u32 %v1722, 16
        %v1995 = vrot.slane %v1993, 4
        %v1996 = vor.u32 %v1995, %v1991
        %v1997 = vrot.slane %v1996, 4
        %v1999 = vshll.u32 %v1723, 16
        %v2001 = vrot.slane %v1999, 5
        %v2002 = vsel %vm222, %v1997, %v2001
        %v2004 = vshrl.u32 %v1724, 16
        %v2006 = vrot.slane %v2004, 4
        %v2007 = vshll.u32 %v1724, 16
        %v2009 = vrot.slane %v2007, 5
        %v2010 = vor.u32 %v2006, %v2009
        %v2011 = vrot.slane %v2010, 4
        %v2013 = vshll.u32 %v1725, 16
        %v2015 = vrot.slane %v2013, 5
        %v2016 = vsel %vm222, %v2011, %v2015
        %v2017 = vshrl.u32 %v1725, 16
        %v2019 = vrot.slane %v2017, 4
        %v2020 = vor.u32 %v2019, %v2015
        %v2021 = vrot.slane %v2020, 4
        %v2023 = vshll.u32 %v1726, 16
        %v2025 = vrot.slane %v2023, 5
        %v2026 = vsel %vm222, %v2021, %v2025
        %v2028 = vshrl.u32 %v1727, 16
        %v2030 = vrot.slane %v2028, 4
        %v2031 = vshll.u32 %v1727, 16
        %v2033 = vrot.slane %v2031, 5
        %v2034 = vor.u32 %v2030, %v2033
        %v2035 = vrot.slane %v2034, 4
        %v2037 = vshll.u32 %v1728, 16
        %v2039 = vrot.slane %v2037, 5
        %v2040 = vsel %vm222, %v2035, %v2039
        %v2041 = vshrl.u32 %v1728, 16
        %v2043 = vrot.slane %v2041, 4
        %v2044 = vor.u32 %v2043, %v2039
        %v2045 = vrot.slane %v2044, 4
        %v2047 = vshll.u32 %v1729, 16
        %v2049 = vrot.slane %v2047, 5
        %v2050 = vsel %vm222, %v2045, %v2049
        %v2052 = vshrl.u32 %v1730, 16
        %v2054 = vrot.slane %v2052, 4
        %v2055 = vshll.u32 %v1730, 16
        %v2057 = vrot.slane %v2055, 5
        %v2058 = vor.u32 %v2054, %v2057
        %v2059 = vrot.slane %v2058, 4
        %v2061 = vshll.u32 %v1731, 16
        %v2063 = vrot.slane %v2061, 5
        %v2064 = vsel %vm222, %v2059, %v2063
        %v2065 = vshrl.u32 %v1731, 16
        %v2067 = vrot.slane %v2065, 4
        %v2068 = vor.u32 %v2067, %v2063
        %v2069 = vrot.slane %v2068, 4
        %v2071 = vshll.u32 %v1732, 16
        %v2073 = vrot.slane %v2071, 5
        %v2074 = vsel %vm222, %v2069, %v2073
        %v2076 = vshrl.u32 %v1733, 16
        %v2078 = vrot.slane %v2076, 4
        %v2079 = vshll.u32 %v1733, 16
        %v2081 = vrot.slane %v2079, 5
        %v2082 = vor.u32 %v2078, %v2081
        %v2083 = vrot.slane %v2082, 4
        %v2085 = vshll.u32 %v1734, 16
        %v2087 = vrot.slane %v2085, 5
        %v2088 = vsel %vm222, %v2083, %v2087
        %v2089 = vshrl.u32 %v1734, 16
        %v2091 = vrot.slane %v2089, 4
        %v2092 = vor.u32 %v2091, %v2087
        %v2093 = vrot.slane %v2092, 4
        %v2095 = vshll.u32 %v1735, 16
        %v2097 = vrot.slane %v2095, 5
        %v2098 = vsel %vm222, %v2093, %v2097
        %v2100 = vshrl.u32 %v1736, 16
        %v2102 = vrot.slane %v2100, 4
        %v2103 = vshll.u32 %v1736, 16
        %v2105 = vrot.slane %v2103, 5
        %v2106 = vor.u32 %v2102, %v2105
        %v2107 = vrot.slane %v2106, 4
        %v2109 = vshll.u32 %v1737, 16
        %v2111 = vrot.slane %v2109, 5
        %v2112 = vsel %vm222, %v2107, %v2111
        %v2113 = vshrl.u32 %v1737, 16
        %v2115 = vrot.slane %v2113, 4
        %v2116 = vor.u32 %v2115, %v2111
        %v2117 = vrot.slane %v2116, 4
        %v2119 = vshll.u32 %v1738, 16
        %v2121 = vrot.slane %v2119, 5
        %v2122 = vsel %vm222, %v2117, %v2121
        %s2123 = scalar_lea.vmem %s1, 8
        %v2124 = vld [vmem:[%s2123] sm:$0x3]
        %v2125 = vunpack.c.l.b16 %v1752
        %v2126 = vunpack.c.l.b16 %v1762
        %v2127 = vunpack.c.l.b16 %v1776
        %v2128 = vunpack.c.l.b16 %v1786
        %v2129 = vunpack.c.l.b16 %v1800
        %v2130 = vunpack.c.l.b16 %v1810
        %v2131 = vunpack.c.l.b16 %v1824
        %v2132 = vunpack.c.l.b16 %v1834
        %v2133 = vunpack.c.l.b16 %v1848
        %v2134 = vunpack.c.l.b16 %v1858
        %v2135 = vunpack.c.l.b16 %v1872
        %v2136 = vunpack.c.l.b16 %v1882
        %v2137 = vunpack.c.l.b16 %v1896
        %v2138 = vunpack.c.l.b16 %v1906
        %v2139 = vunpack.c.l.b16 %v1920
        %v2140 = vunpack.c.l.b16 %v1930
        %v2141 = vunpack.c.l.b16 %v1944
        %v2142 = vunpack.c.l.b16 %v1954
        %v2143 = vunpack.c.l.b16 %v1968
        %v2144 = vunpack.c.l.b16 %v1978
        %v2145 = vunpack.c.l.b16 %v1992
        %v2146 = vunpack.c.l.b16 %v2002
        %v2147 = vunpack.c.l.b16 %v2016
        %v2148 = vunpack.c.l.b16 %v2026
        %v2149 = vunpack.c.l.b16 %v2040
        %v2150 = vunpack.c.l.b16 %v2050
        %v2151 = vunpack.c.l.b16 %v2064
        %v2152 = vunpack.c.l.b16 %v2074
        %v2153 = vunpack.c.l.b16 %v2088
        %v2154 = vunpack.c.l.b16 %v2098
        %v2155 = vunpack.c.l.b16 %v2112
        %v2156 = vunpack.c.l.b16 %v2122
        %v2157 = vpack.c.b16 %v2126, %v2125
        %v2158 = vpack.c.b16 %v2128, %v2127
        %v2159 = vpack.c.b16 %v2130, %v2129
        %v2160 = vpack.c.b16 %v2132, %v2131
        %v2161 = vpack.c.b16 %v2134, %v2133
        %v2162 = vpack.c.b16 %v2136, %v2135
        %v2163 = vpack.c.b16 %v2138, %v2137
        %v2164 = vpack.c.b16 %v2140, %v2139
        %v2165 = vpack.c.b16 %v2142, %v2141
        %v2166 = vpack.c.b16 %v2144, %v2143
        %v2167 = vpack.c.b16 %v2146, %v2145
        %v2168 = vpack.c.b16 %v2148, %v2147
        %v2169 = vpack.c.b16 %v2150, %v2149
        %v2170 = vpack.c.b16 %v2152, %v2151
        %v2171 = vpack.c.b16 %v2154, %v2153
        %v2172 = vpack.c.b16 %v2156, %v2155
        %v2174 = vsel %vm657, %v2157, 0
        %v2177 = vsel %vm657, %v2158, 0
        %v2180 = vsel %vm657, %v2159, 0
        %v2183 = vsel %vm657, %v2160, 0
        %v2186 = vsel %vm657, %v2161, 0
        %v2189 = vsel %vm657, %v2162, 0
        %v2192 = vsel %vm657, %v2163, 0
        %v2195 = vsel %vm657, %v2164, 0
        %v2198 = vsel %vm657, %v2165, 0
        %v2201 = vsel %vm657, %v2166, 0
        %v2204 = vsel %vm657, %v2167, 0
        %v2207 = vsel %vm657, %v2168, 0
        %v2210 = vsel %vm657, %v2169, 0
        %v2213 = vsel %vm657, %v2170, 0
        %v2216 = vsel %vm657, %v2171, 0
        %v2219 = vsel %vm657, %v2172, 0
        %v2222 = vsel %vm706, %v2124, 0
        %2224 = vmatpush.bf16.msra.mxu0 0
        %2225 = vmatpush.bf16.msra.mxu0 0
        %2226 = vmatpush.bf16.msra.mxu0 0
        %2227 = vmatpush.bf16.msra.mxu0 0
        %2228 = vmatpush.bf16.msra.mxu0 0
        %2229 = vmatpush.bf16.msra.mxu0 0
        %2230 = vmatpush.bf16.msra.mxu0 0
        %2231 = vmatpush.bf16.msra.mxu0 %v2222
        %2232 = vmatmul.bf16.gmra.mxu0 %v2174
        %v2233 = vpop.f32.mrf.mxu0
        %v2234 = vadd.f32 0.0, %v2233
        %v2235 = vpop.f32.mrf.mxu0
        %v2236 = vadd.f32 0.0, %v2235
        %2237 = vmatmul.bf16.gmra.mxu0 %v2177
        %v2238 = vpop.f32.mrf.mxu0
        %v2239 = vadd.f32 0.0, %v2238
        %v2240 = vpop.f32.mrf.mxu0
        %v2241 = vadd.f32 0.0, %v2240
        %2242 = vmatmul.bf16.gmra.mxu0 %v2180
        %v2243 = vpop.f32.mrf.mxu0
        %v2244 = vadd.f32 0.0, %v2243
        %v2245 = vpop.f32.mrf.mxu0
        %v2246 = vadd.f32 0.0, %v2245
        %2247 = vmatmul.bf16.gmra.mxu0 %v2183
        %v2248 = vpop.f32.mrf.mxu0
        %v2249 = vadd.f32 0.0, %v2248
        %v2250 = vpop.f32.mrf.mxu0
        %v2251 = vadd.f32 0.0, %v2250
        %2252 = vmatmul.bf16.gmra.mxu0 %v2186
        %v2253 = vpop.f32.mrf.mxu0
        %v2254 = vadd.f32 0.0, %v2253
        %v2255 = vpop.f32.mrf.mxu0
        %v2256 = vadd.f32 0.0, %v2255
        %2257 = vmatmul.bf16.gmra.mxu0 %v2189
        %v2258 = vpop.f32.mrf.mxu0
        %v2259 = vadd.f32 0.0, %v2258
        %v2260 = vpop.f32.mrf.mxu0
        %v2261 = vadd.f32 0.0, %v2260
        %2262 = vmatmul.bf16.gmra.mxu0 %v2192
        %v2263 = vpop.f32.mrf.mxu0
        %v2264 = vadd.f32 0.0, %v2263
        %v2265 = vpop.f32.mrf.mxu0
        %v2266 = vadd.f32 0.0, %v2265
        %2267 = vmatmul.bf16.gmra.mxu0 %v2195
        %v2268 = vpop.f32.mrf.mxu0
        %v2269 = vadd.f32 0.0, %v2268
        %v2270 = vpop.f32.mrf.mxu0
        %v2271 = vadd.f32 0.0, %v2270
        %2272 = vmatmul.bf16.gmra.mxu0 %v2198
        %v2273 = vpop.f32.mrf.mxu0
        %v2274 = vadd.f32 0.0, %v2273
        %v2275 = vpop.f32.mrf.mxu0
        %v2276 = vadd.f32 0.0, %v2275
        %2277 = vmatmul.bf16.gmra.mxu0 %v2201
        %v2278 = vpop.f32.mrf.mxu0
        %v2279 = vadd.f32 0.0, %v2278
        %v2280 = vpop.f32.mrf.mxu0
        %v2281 = vadd.f32 0.0, %v2280
        %2282 = vmatmul.bf16.gmra.mxu0 %v2204
        %v2283 = vpop.f32.mrf.mxu0
        %v2284 = vadd.f32 0.0, %v2283
        %v2285 = vpop.f32.mrf.mxu0
        %v2286 = vadd.f32 0.0, %v2285
        %2287 = vmatmul.bf16.gmra.mxu0 %v2207
        %v2288 = vpop.f32.mrf.mxu0
        %v2289 = vadd.f32 0.0, %v2288
        %v2290 = vpop.f32.mrf.mxu0
        %v2291 = vadd.f32 0.0, %v2290
        %2292 = vmatmul.bf16.gmra.mxu0 %v2210
        %v2293 = vpop.f32.mrf.mxu0
        %v2294 = vadd.f32 0.0, %v2293
        %v2295 = vpop.f32.mrf.mxu0
        %v2296 = vadd.f32 0.0, %v2295
        %2297 = vmatmul.bf16.gmra.mxu0 %v2213
        %v2298 = vpop.f32.mrf.mxu0
        %v2299 = vadd.f32 0.0, %v2298
        %v2300 = vpop.f32.mrf.mxu0
        %v2301 = vadd.f32 0.0, %v2300
        %2302 = vmatmul.bf16.gmra.mxu0 %v2216
        %v2303 = vpop.f32.mrf.mxu0
        %v2304 = vadd.f32 0.0, %v2303
        %v2305 = vpop.f32.mrf.mxu0
        %v2306 = vadd.f32 0.0, %v2305
        %2307 = vmatmul.bf16.gmra.mxu0 %v2219
        %v2308 = vpop.f32.mrf.mxu0
        %v2309 = vadd.f32 0.0, %v2308
        %v2310 = vpop.f32.mrf.mxu0
        %v2311 = vadd.f32 0.0, %v2310
        %2312 = vdwg.mxu0
        %v2313 = vadd.f32 %v1659, %v2234
        %v2314 = vadd.f32 %v1660, %v2236
        %v2315 = vadd.f32 %v1661, %v2239
        %v2316 = vadd.f32 %v1662, %v2241
        %v2317 = vadd.f32 %v1663, %v2244
        %v2318 = vadd.f32 %v1664, %v2246
        %v2319 = vadd.f32 %v1665, %v2249
        %v2320 = vadd.f32 %v1666, %v2251
        %v2321 = vadd.f32 %v1667, %v2254
        %v2322 = vadd.f32 %v1668, %v2256
        %v2323 = vadd.f32 %v1669, %v2259
        %v2324 = vadd.f32 %v1670, %v2261
        %v2325 = vadd.f32 %v1671, %v2264
        %v2326 = vadd.f32 %v1672, %v2266
        %v2327 = vadd.f32 %v1673, %v2269
        %v2328 = vadd.f32 %v1674, %v2271
        %v2329 = vadd.f32 %v1675, %v2274
        %v2330 = vadd.f32 %v1676, %v2276
        %v2331 = vadd.f32 %v1677, %v2279
        %v2332 = vadd.f32 %v1678, %v2281
        %v2333 = vadd.f32 %v1679, %v2284
        %v2334 = vadd.f32 %v1680, %v2286
        %v2335 = vadd.f32 %v1681, %v2289
        %v2336 = vadd.f32 %v1682, %v2291
        %v2337 = vadd.f32 %v1683, %v2294
        %v2338 = vadd.f32 %v1684, %v2296
        %v2339 = vadd.f32 %v1685, %v2299
        %v2340 = vadd.f32 %v1686, %v2301
        %v2341 = vadd.f32 %v1687, %v2304
        %v2342 = vadd.f32 %v1688, %v2306
        %v2343 = vadd.f32 %v1689, %v2309
        %v2344 = vadd.f32 %v1690, %v2311
        %v2345 = vld [vmem:[%s1404] sm:$0xe]
        %v2346 = vld [vmem:[%s1404 + $0xc] sm:$0xe]
        %v2347 = vld [vmem:[%s1404 + $0x18] sm:$0xe]
        %v2348 = vld [vmem:[%s1404 + $0x24] sm:$0xe]
        %v2349 = vld [vmem:[%s1404 + $0x30] sm:$0xe]
        %v2350 = vld [vmem:[%s1404 + $0x3c] sm:$0xe]
        %v2351 = vld [vmem:[%s1404 + $0x48] sm:$0xe]
        %v2352 = vld [vmem:[%s1404 + $0x54] sm:$0xe]
        %v2353 = vld [vmem:[%s1404 + $0x60] sm:$0xe]
        %v2354 = vld [vmem:[%s1404 + $0x6c] sm:$0xe]
        %v2355 = vld [vmem:[%s1404 + $0x78] sm:$0xe]
        %v2356 = vld [vmem:[%s1404 + $0x84] sm:$0xe]
        %v2357 = vld [vmem:[%s1404 + $0x90] sm:$0xe]
        %v2358 = vld [vmem:[%s1404 + $0x9c] sm:$0xe]
        %v2359 = vld [vmem:[%s1404 + $0xa8] sm:$0xe]
        %v2360 = vld [vmem:[%s1404 + $0xb4] sm:$0xe]
        %v2409 = vrot.slane %v2345, 5
        %v2410 = vrot.slane %v2409, 4
        %v2411 = vrot.slane %v1692, 5
        %v2412 = vsel %vm1069, %v2410, %v2411
        %v2413 = vrot.slane %v2411, 4
        %v2414 = vrot.slane %v1693, 5
        %v2415 = vsel %vm1069, %v2413, %v2414
        %v2416 = vrot.slane %v2346, 5
        %v2417 = vrot.slane %v2416, 4
        %v2418 = vrot.slane %v1695, 5
        %v2419 = vsel %vm1069, %v2417, %v2418
        %v2420 = vrot.slane %v2418, 4
        %v2421 = vrot.slane %v1696, 5
        %v2422 = vsel %vm1069, %v2420, %v2421
        %v2423 = vrot.slane %v2347, 5
        %v2424 = vrot.slane %v2423, 4
        %v2425 = vrot.slane %v1698, 5
        %v2426 = vsel %vm1069, %v2424, %v2425
        %v2427 = vrot.slane %v2425, 4
        %v2428 = vrot.slane %v1699, 5
        %v2429 = vsel %vm1069, %v2427, %v2428
        %v2430 = vrot.slane %v2348, 5
        %v2431 = vrot.slane %v2430, 4
        %v2432 = vrot.slane %v1701, 5
        %v2433 = vsel %vm1069, %v2431, %v2432
        %v2434 = vrot.slane %v2432, 4
        %v2435 = vrot.slane %v1702, 5
        %v2436 = vsel %vm1069, %v2434, %v2435
        %v2437 = vrot.slane %v2349, 5
        %v2438 = vrot.slane %v2437, 4
        %v2439 = vrot.slane %v1704, 5
        %v2440 = vsel %vm1069, %v2438, %v2439
        %v2441 = vrot.slane %v2439, 4
        %v2442 = vrot.slane %v1705, 5
        %v2443 = vsel %vm1069, %v2441, %v2442
        %v2444 = vrot.slane %v2350, 5
        %v2445 = vrot.slane %v2444, 4
        %v2446 = vrot.slane %v1707, 5
        %v2447 = vsel %vm1069, %v2445, %v2446
        %v2448 = vrot.slane %v2446, 4
        %v2449 = vrot.slane %v1708, 5
        %v2450 = vsel %vm1069, %v2448, %v2449
        %v2451 = vrot.slane %v2351, 5
        %v2452 = vrot.slane %v2451, 4
        %v2453 = vrot.slane %v1710, 5
        %v2454 = vsel %vm1069, %v2452, %v2453
        %v2455 = vrot.slane %v2453, 4
        %v2456 = vrot.slane %v1711, 5
        %v2457 = vsel %vm1069, %v2455, %v2456
        %v2458 = vrot.slane %v2352, 5
        %v2459 = vrot.slane %v2458, 4
        %v2460 = vrot.slane %v1713, 5
        %v2461 = vsel %vm1069, %v2459, %v2460
        %v2462 = vrot.slane %v2460, 4
        %v2463 = vrot.slane %v1714, 5
        %v2464 = vsel %vm1069, %v2462, %v2463
        %v2465 = vrot.slane %v2353, 5
        %v2466 = vrot.slane %v2465, 4
        %v2467 = vrot.slane %v1716, 5
        %v2468 = vsel %vm1069, %v2466, %v2467
        %v2469 = vrot.slane %v2467, 4
        %v2470 = vrot.slane %v1717, 5
        %v2471 = vsel %vm1069, %v2469, %v2470
        %v2472 = vrot.slane %v2354, 5
        %v2473 = vrot.slane %v2472, 4
        %v2474 = vrot.slane %v1719, 5
        %v2475 = vsel %vm1069, %v2473, %v2474
        %v2476 = vrot.slane %v2474, 4
        %v2477 = vrot.slane %v1720, 5
        %v2478 = vsel %vm1069, %v2476, %v2477
        %v2479 = vrot.slane %v2355, 5
        %v2480 = vrot.slane %v2479, 4
        %v2481 = vrot.slane %v1722, 5
        %v2482 = vsel %vm1069, %v2480, %v2481
        %v2483 = vrot.slane %v2481, 4
        %v2484 = vrot.slane %v1723, 5
        %v2485 = vsel %vm1069, %v2483, %v2484
        %v2486 = vrot.slane %v2356, 5
        %v2487 = vrot.slane %v2486, 4
        %v2488 = vrot.slane %v1725, 5
        %v2489 = vsel %vm1069, %v2487, %v2488
        %v2490 = vrot.slane %v2488, 4
        %v2491 = vrot.slane %v1726, 5
        %v2492 = vsel %vm1069, %v2490, %v2491
        %v2493 = vrot.slane %v2357, 5
        %v2494 = vrot.slane %v2493, 4
        %v2495 = vrot.slane %v1728, 5
        %v2496 = vsel %vm1069, %v2494, %v2495
        %v2497 = vrot.slane %v2495, 4
        %v2498 = vrot.slane %v1729, 5
        %v2499 = vsel %vm1069, %v2497, %v2498
        %v2500 = vrot.slane %v2358, 5
        %v2501 = vrot.slane %v2500, 4
        %v2502 = vrot.slane %v1731, 5
        %v2503 = vsel %vm1069, %v2501, %v2502
        %v2504 = vrot.slane %v2502, 4
        %v2505 = vrot.slane %v1732, 5
        %v2506 = vsel %vm1069, %v2504, %v2505
        %v2507 = vrot.slane %v2359, 5
        %v2508 = vrot.slane %v2507, 4
        %v2509 = vrot.slane %v1734, 5
        %v2510 = vsel %vm1069, %v2508, %v2509
        %v2511 = vrot.slane %v2509, 4
        %v2512 = vrot.slane %v1735, 5
        %v2513 = vsel %vm1069, %v2511, %v2512
        %v2514 = vrot.slane %v2360, 5
        %v2515 = vrot.slane %v2514, 4
        %v2516 = vrot.slane %v1737, 5
        %v2517 = vsel %vm1069, %v2515, %v2516
        %v2518 = vrot.slane %v2516, 4
        %v2519 = vrot.slane %v1738, 5
        %v2520 = vsel %vm1069, %v2518, %v2519
        %s2521 = scalar_lea.vmem %s1, 10
        %v2522 = vld [vmem:[%s2521] sm:$0x3]
        %v2523 = vunpack.c.l.b16 %v2412
        %v2524 = vunpack.c.l.b16 %v2415
        %v2525 = vunpack.c.l.b16 %v2419
        %v2526 = vunpack.c.l.b16 %v2422
        %v2527 = vunpack.c.l.b16 %v2426
        %v2528 = vunpack.c.l.b16 %v2429
        %v2529 = vunpack.c.l.b16 %v2433
        %v2530 = vunpack.c.l.b16 %v2436
        %v2531 = vunpack.c.l.b16 %v2440
        %v2532 = vunpack.c.l.b16 %v2443
        %v2533 = vunpack.c.l.b16 %v2447
        %v2534 = vunpack.c.l.b16 %v2450
        %v2535 = vunpack.c.l.b16 %v2454
        %v2536 = vunpack.c.l.b16 %v2457
        %v2537 = vunpack.c.l.b16 %v2461
        %v2538 = vunpack.c.l.b16 %v2464
        %v2539 = vunpack.c.l.b16 %v2468
        %v2540 = vunpack.c.l.b16 %v2471
        %v2541 = vunpack.c.l.b16 %v2475
        %v2542 = vunpack.c.l.b16 %v2478
        %v2543 = vunpack.c.l.b16 %v2482
        %v2544 = vunpack.c.l.b16 %v2485
        %v2545 = vunpack.c.l.b16 %v2489
        %v2546 = vunpack.c.l.b16 %v2492
        %v2547 = vunpack.c.l.b16 %v2496
        %v2548 = vunpack.c.l.b16 %v2499
        %v2549 = vunpack.c.l.b16 %v2503
        %v2550 = vunpack.c.l.b16 %v2506
        %v2551 = vunpack.c.l.b16 %v2510
        %v2552 = vunpack.c.l.b16 %v2513
        %v2553 = vunpack.c.l.b16 %v2517
        %v2554 = vunpack.c.l.b16 %v2520
        %v2555 = vpack.c.b16 %v2524, %v2523
        %v2556 = vpack.c.b16 %v2526, %v2525
        %v2557 = vpack.c.b16 %v2528, %v2527
        %v2558 = vpack.c.b16 %v2530, %v2529
        %v2559 = vpack.c.b16 %v2532, %v2531
        %v2560 = vpack.c.b16 %v2534, %v2533
        %v2561 = vpack.c.b16 %v2536, %v2535
        %v2562 = vpack.c.b16 %v2538, %v2537
        %v2563 = vpack.c.b16 %v2540, %v2539
        %v2564 = vpack.c.b16 %v2542, %v2541
        %v2565 = vpack.c.b16 %v2544, %v2543
        %v2566 = vpack.c.b16 %v2546, %v2545
        %v2567 = vpack.c.b16 %v2548, %v2547
        %v2568 = vpack.c.b16 %v2550, %v2549
        %v2569 = vpack.c.b16 %v2552, %v2551
        %v2570 = vpack.c.b16 %v2554, %v2553
        %v2572 = vsel %vm657, %v2555, 0
        %v2575 = vsel %vm657, %v2556, 0
        %v2578 = vsel %vm657, %v2557, 0
        %v2581 = vsel %vm657, %v2558, 0
        %v2584 = vsel %vm657, %v2559, 0
        %v2587 = vsel %vm657, %v2560, 0
        %v2590 = vsel %vm657, %v2561, 0
        %v2593 = vsel %vm657, %v2562, 0
        %v2596 = vsel %vm657, %v2563, 0
        %v2599 = vsel %vm657, %v2564, 0
        %v2602 = vsel %vm657, %v2565, 0
        %v2605 = vsel %vm657, %v2566, 0
        %v2608 = vsel %vm657, %v2567, 0
        %v2611 = vsel %vm657, %v2568, 0
        %v2614 = vsel %vm657, %v2569, 0
        %v2617 = vsel %vm657, %v2570, 0
        %v2620 = vsel %vm706, %v2522, 0
        %2622 = vmatpush.bf16.msra.mxu0 0
        %2623 = vmatpush.bf16.msra.mxu0 0
        %2624 = vmatpush.bf16.msra.mxu0 0
        %2625 = vmatpush.bf16.msra.mxu0 0
        %2626 = vmatpush.bf16.msra.mxu0 0
        %2627 = vmatpush.bf16.msra.mxu0 0
        %2628 = vmatpush.bf16.msra.mxu0 0
        %2629 = vmatpush.bf16.msra.mxu0 %v2620
        %2630 = vmatmul.bf16.gmra.mxu0 %v2572
        %v2631 = vpop.f32.mrf.mxu0
        %v2632 = vadd.f32 0.0, %v2631
        %v2633 = vpop.f32.mrf.mxu0
        %v2634 = vadd.f32 0.0, %v2633
        %2635 = vmatmul.bf16.gmra.mxu0 %v2575
        %v2636 = vpop.f32.mrf.mxu0
        %v2637 = vadd.f32 0.0, %v2636
        %v2638 = vpop.f32.mrf.mxu0
        %v2639 = vadd.f32 0.0, %v2638
        %2640 = vmatmul.bf16.gmra.mxu0 %v2578
        %v2641 = vpop.f32.mrf.mxu0
        %v2642 = vadd.f32 0.0, %v2641
        %v2643 = vpop.f32.mrf.mxu0
        %v2644 = vadd.f32 0.0, %v2643
        %2645 = vmatmul.bf16.gmra.mxu0 %v2581
        %v2646 = vpop.f32.mrf.mxu0
        %v2647 = vadd.f32 0.0, %v2646
        %v2648 = vpop.f32.mrf.mxu0
        %v2649 = vadd.f32 0.0, %v2648
        %2650 = vmatmul.bf16.gmra.mxu0 %v2584
        %v2651 = vpop.f32.mrf.mxu0
        %v2652 = vadd.f32 0.0, %v2651
        %v2653 = vpop.f32.mrf.mxu0
        %v2654 = vadd.f32 0.0, %v2653
        %2655 = vmatmul.bf16.gmra.mxu0 %v2587
        %v2656 = vpop.f32.mrf.mxu0
        %v2657 = vadd.f32 0.0, %v2656
        %v2658 = vpop.f32.mrf.mxu0
        %v2659 = vadd.f32 0.0, %v2658
        %2660 = vmatmul.bf16.gmra.mxu0 %v2590
        %v2661 = vpop.f32.mrf.mxu0
        %v2662 = vadd.f32 0.0, %v2661
        %v2663 = vpop.f32.mrf.mxu0
        %v2664 = vadd.f32 0.0, %v2663
        %2665 = vmatmul.bf16.gmra.mxu0 %v2593
        %v2666 = vpop.f32.mrf.mxu0
        %v2667 = vadd.f32 0.0, %v2666
        %v2668 = vpop.f32.mrf.mxu0
        %v2669 = vadd.f32 0.0, %v2668
        %2670 = vmatmul.bf16.gmra.mxu0 %v2596
        %v2671 = vpop.f32.mrf.mxu0
        %v2672 = vadd.f32 0.0, %v2671
        %v2673 = vpop.f32.mrf.mxu0
        %v2674 = vadd.f32 0.0, %v2673
        %2675 = vmatmul.bf16.gmra.mxu0 %v2599
        %v2676 = vpop.f32.mrf.mxu0
        %v2677 = vadd.f32 0.0, %v2676
        %v2678 = vpop.f32.mrf.mxu0
        %v2679 = vadd.f32 0.0, %v2678
        %2680 = vmatmul.bf16.gmra.mxu0 %v2602
        %v2681 = vpop.f32.mrf.mxu0
        %v2682 = vadd.f32 0.0, %v2681
        %v2683 = vpop.f32.mrf.mxu0
        %v2684 = vadd.f32 0.0, %v2683
        %2685 = vmatmul.bf16.gmra.mxu0 %v2605
        %v2686 = vpop.f32.mrf.mxu0
        %v2687 = vadd.f32 0.0, %v2686
        %v2688 = vpop.f32.mrf.mxu0
        %v2689 = vadd.f32 0.0, %v2688
        %2690 = vmatmul.bf16.gmra.mxu0 %v2608
        %v2691 = vpop.f32.mrf.mxu0
        %v2692 = vadd.f32 0.0, %v2691
        %v2693 = vpop.f32.mrf.mxu0
        %v2694 = vadd.f32 0.0, %v2693
        %2695 = vmatmul.bf16.gmra.mxu0 %v2611
        %v2696 = vpop.f32.mrf.mxu0
        %v2697 = vadd.f32 0.0, %v2696
        %v2698 = vpop.f32.mrf.mxu0
        %v2699 = vadd.f32 0.0, %v2698
        %2700 = vmatmul.bf16.gmra.mxu0 %v2614
        %v2701 = vpop.f32.mrf.mxu0
        %v2702 = vadd.f32 0.0, %v2701
        %v2703 = vpop.f32.mrf.mxu0
        %v2704 = vadd.f32 0.0, %v2703
        %2705 = vmatmul.bf16.gmra.mxu0 %v2617
        %v2706 = vpop.f32.mrf.mxu0
        %v2707 = vadd.f32 0.0, %v2706
        %v2708 = vpop.f32.mrf.mxu0
        %v2709 = vadd.f32 0.0, %v2708
        %2710 = vdwg.mxu0
        %v2711 = vadd.f32 %v2313, %v2632
        %v2712 = vadd.f32 %v2314, %v2634
        %v2713 = vadd.f32 %v2315, %v2637
        %v2714 = vadd.f32 %v2316, %v2639
        %v2715 = vadd.f32 %v2317, %v2642
        %v2716 = vadd.f32 %v2318, %v2644
        %v2717 = vadd.f32 %v2319, %v2647
        %v2718 = vadd.f32 %v2320, %v2649
        %v2719 = vadd.f32 %v2321, %v2652
        %v2720 = vadd.f32 %v2322, %v2654
        %v2721 = vadd.f32 %v2323, %v2657
        %v2722 = vadd.f32 %v2324, %v2659
        %v2723 = vadd.f32 %v2325, %v2662
        %v2724 = vadd.f32 %v2326, %v2664
        %v2725 = vadd.f32 %v2327, %v2667
        %v2726 = vadd.f32 %v2328, %v2669
        %v2727 = vadd.f32 %v2329, %v2672
        %v2728 = vadd.f32 %v2330, %v2674
        %v2729 = vadd.f32 %v2331, %v2677
        %v2730 = vadd.f32 %v2332, %v2679
        %v2731 = vadd.f32 %v2333, %v2682
        %v2732 = vadd.f32 %v2334, %v2684
        %v2733 = vadd.f32 %v2335, %v2687
        %v2734 = vadd.f32 %v2336, %v2689
        %v2735 = vadd.f32 %v2337, %v2692
        %v2736 = vadd.f32 %v2338, %v2694
        %v2737 = vadd.f32 %v2339, %v2697
        %v2738 = vadd.f32 %v2340, %v2699
        %v2739 = vadd.f32 %v2341, %v2702
        %v2740 = vadd.f32 %v2342, %v2704
        %v2741 = vadd.f32 %v2343, %v2707
        %v2742 = vadd.f32 %v2344, %v2709
        %s2743 = scalar_lea.vmem %s168, 24
        %v2744 = vld [vmem:[%s2743] sm:$0xf]
        %v2745 = vld [vmem:[%s2743 + $0x4] sm:$0xf]
        %v2746 = vld [vmem:[%s2743 + $0xc] sm:$0xf]
        %v2747 = vld [vmem:[%s2743 + $0x10] sm:$0xf]
        %v2748 = vld [vmem:[%s2743 + $0x18] sm:$0xf]
        %v2749 = vld [vmem:[%s2743 + $0x1c] sm:$0xf]
        %v2750 = vld [vmem:[%s2743 + $0x24] sm:$0xf]
        %v2751 = vld [vmem:[%s2743 + $0x28] sm:$0xf]
        %v2752 = vld [vmem:[%s2743 + $0x30] sm:$0xf]
        %v2753 = vld [vmem:[%s2743 + $0x34] sm:$0xf]
        %v2754 = vld [vmem:[%s2743 + $0x3c] sm:$0xf]
        %v2755 = vld [vmem:[%s2743 + $0x40] sm:$0xf]
        %v2756 = vld [vmem:[%s2743 + $0x48] sm:$0xf]
        %v2757 = vld [vmem:[%s2743 + $0x4c] sm:$0xf]
        %v2758 = vld [vmem:[%s2743 + $0x54] sm:$0xf]
        %v2759 = vld [vmem:[%s2743 + $0x58] sm:$0xf]
        %v2760 = vld [vmem:[%s2743 + $0x60] sm:$0xf]
        %v2761 = vld [vmem:[%s2743 + $0x64] sm:$0xf]
        %v2762 = vld [vmem:[%s2743 + $0x6c] sm:$0xf]
        %v2763 = vld [vmem:[%s2743 + $0x70] sm:$0xf]
        %v2764 = vld [vmem:[%s2743 + $0x78] sm:$0xf]
        %v2765 = vld [vmem:[%s2743 + $0x7c] sm:$0xf]
        %v2766 = vld [vmem:[%s2743 + $0x84] sm:$0xf]
        %v2767 = vld [vmem:[%s2743 + $0x88] sm:$0xf]
        %v2768 = vld [vmem:[%s2743 + $0x90] sm:$0xf]
        %v2769 = vld [vmem:[%s2743 + $0x94] sm:$0xf]
        %v2770 = vld [vmem:[%s2743 + $0x9c] sm:$0xf]
        %v2771 = vld [vmem:[%s2743 + $0xa0] sm:$0xf]
        %v2772 = vld [vmem:[%s2743 + $0xa8] sm:$0xf]
        %v2773 = vld [vmem:[%s2743 + $0xac] sm:$0xf]
        %v2774 = vld [vmem:[%s2743 + $0xb4] sm:$0xf]
        %v2775 = vld [vmem:[%s2743 + $0xb8] sm:$0xf]
        %s2776 = scalar_lea.vmem %s1, 12
        %v2777 = vld [vmem:[%s2776] sm:$0x3]
        %v2810 = vunpack.c.l.b16 %v2744
        %v2811 = vunpack.c.l.b16 %v2745
        %v2812 = vunpack.c.l.b16 %v2746
        %v2813 = vunpack.c.l.b16 %v2747
        %v2814 = vunpack.c.l.b16 %v2748
        %v2815 = vunpack.c.l.b16 %v2749
        %v2816 = vunpack.c.l.b16 %v2750
        %v2817 = vunpack.c.l.b16 %v2751
        %v2818 = vunpack.c.l.b16 %v2752
        %v2819 = vunpack.c.l.b16 %v2753
        %v2820 = vunpack.c.l.b16 %v2754
        %v2821 = vunpack.c.l.b16 %v2755
        %v2822 = vunpack.c.l.b16 %v2756
        %v2823 = vunpack.c.l.b16 %v2757
        %v2824 = vunpack.c.l.b16 %v2758
        %v2825 = vunpack.c.l.b16 %v2759
        %v2826 = vunpack.c.l.b16 %v2760
        %v2827 = vunpack.c.l.b16 %v2761
        %v2828 = vunpack.c.l.b16 %v2762
        %v2829 = vunpack.c.l.b16 %v2763
        %v2830 = vunpack.c.l.b16 %v2764
        %v2831 = vunpack.c.l.b16 %v2765
        %v2832 = vunpack.c.l.b16 %v2766
        %v2833 = vunpack.c.l.b16 %v2767
        %v2834 = vunpack.c.l.b16 %v2768
        %v2835 = vunpack.c.l.b16 %v2769
        %v2836 = vunpack.c.l.b16 %v2770
        %v2837 = vunpack.c.l.b16 %v2771
        %v2838 = vunpack.c.l.b16 %v2772
        %v2839 = vunpack.c.l.b16 %v2773
        %v2840 = vunpack.c.l.b16 %v2774
        %v2841 = vunpack.c.l.b16 %v2775
        %v2842 = vpack.c.b16 %v2811, %v2810
        %v2843 = vpack.c.b16 %v2813, %v2812
        %v2844 = vpack.c.b16 %v2815, %v2814
        %v2845 = vpack.c.b16 %v2817, %v2816
        %v2846 = vpack.c.b16 %v2819, %v2818
        %v2847 = vpack.c.b16 %v2821, %v2820
        %v2848 = vpack.c.b16 %v2823, %v2822
        %v2849 = vpack.c.b16 %v2825, %v2824
        %v2850 = vpack.c.b16 %v2827, %v2826
        %v2851 = vpack.c.b16 %v2829, %v2828
        %v2852 = vpack.c.b16 %v2831, %v2830
        %v2853 = vpack.c.b16 %v2833, %v2832
        %v2854 = vpack.c.b16 %v2835, %v2834
        %v2855 = vpack.c.b16 %v2837, %v2836
        %v2856 = vpack.c.b16 %v2839, %v2838
        %v2857 = vpack.c.b16 %v2841, %v2840
        %v2859 = vsel %vm657, %v2842, 0
        %v2862 = vsel %vm657, %v2843, 0
        %v2865 = vsel %vm657, %v2844, 0
        %v2868 = vsel %vm657, %v2845, 0
        %v2871 = vsel %vm657, %v2846, 0
        %v2874 = vsel %vm657, %v2847, 0
        %v2877 = vsel %vm657, %v2848, 0
        %v2880 = vsel %vm657, %v2849, 0
        %v2883 = vsel %vm657, %v2850, 0
        %v2886 = vsel %vm657, %v2851, 0
        %v2889 = vsel %vm657, %v2852, 0
        %v2892 = vsel %vm657, %v2853, 0
        %v2895 = vsel %vm657, %v2854, 0
        %v2898 = vsel %vm657, %v2855, 0
        %v2901 = vsel %vm657, %v2856, 0
        %v2904 = vsel %vm657, %v2857, 0
        %v2907 = vsel %vm706, %v2777, 0
        %2909 = vmatpush.bf16.msra.mxu0 0
        %2910 = vmatpush.bf16.msra.mxu0 0
        %2911 = vmatpush.bf16.msra.mxu0 0
        %2912 = vmatpush.bf16.msra.mxu0 0
        %2913 = vmatpush.bf16.msra.mxu0 0
        %2914 = vmatpush.bf16.msra.mxu0 0
        %2915 = vmatpush.bf16.msra.mxu0 0
        %2916 = vmatpush.bf16.msra.mxu0 %v2907
        %2917 = vmatmul.bf16.gmra.mxu0 %v2859
        %v2918 = vpop.f32.mrf.mxu0
        %v2919 = vadd.f32 0.0, %v2918
        %v2920 = vpop.f32.mrf.mxu0
        %v2921 = vadd.f32 0.0, %v2920
        %2922 = vmatmul.bf16.gmra.mxu0 %v2862
        %v2923 = vpop.f32.mrf.mxu0
        %v2924 = vadd.f32 0.0, %v2923
        %v2925 = vpop.f32.mrf.mxu0
        %v2926 = vadd.f32 0.0, %v2925
        %2927 = vmatmul.bf16.gmra.mxu0 %v2865
        %v2928 = vpop.f32.mrf.mxu0
        %v2929 = vadd.f32 0.0, %v2928
        %v2930 = vpop.f32.mrf.mxu0
        %v2931 = vadd.f32 0.0, %v2930
        %2932 = vmatmul.bf16.gmra.mxu0 %v2868
        %v2933 = vpop.f32.mrf.mxu0
        %v2934 = vadd.f32 0.0, %v2933
        %v2935 = vpop.f32.mrf.mxu0
        %v2936 = vadd.f32 0.0, %v2935
        %2937 = vmatmul.bf16.gmra.mxu0 %v2871
        %v2938 = vpop.f32.mrf.mxu0
        %v2939 = vadd.f32 0.0, %v2938
        %v2940 = vpop.f32.mrf.mxu0
        %v2941 = vadd.f32 0.0, %v2940
        %2942 = vmatmul.bf16.gmra.mxu0 %v2874
        %v2943 = vpop.f32.mrf.mxu0
        %v2944 = vadd.f32 0.0, %v2943
        %v2945 = vpop.f32.mrf.mxu0
        %v2946 = vadd.f32 0.0, %v2945
        %2947 = vmatmul.bf16.gmra.mxu0 %v2877
        %v2948 = vpop.f32.mrf.mxu0
        %v2949 = vadd.f32 0.0, %v2948
        %v2950 = vpop.f32.mrf.mxu0
        %v2951 = vadd.f32 0.0, %v2950
        %2952 = vmatmul.bf16.gmra.mxu0 %v2880
        %v2953 = vpop.f32.mrf.mxu0
        %v2954 = vadd.f32 0.0, %v2953
        %v2955 = vpop.f32.mrf.mxu0
        %v2956 = vadd.f32 0.0, %v2955
        %2957 = vmatmul.bf16.gmra.mxu0 %v2883
        %v2958 = vpop.f32.mrf.mxu0
        %v2959 = vadd.f32 0.0, %v2958
        %v2960 = vpop.f32.mrf.mxu0
        %v2961 = vadd.f32 0.0, %v2960
        %2962 = vmatmul.bf16.gmra.mxu0 %v2886
        %v2963 = vpop.f32.mrf.mxu0
        %v2964 = vadd.f32 0.0, %v2963
        %v2965 = vpop.f32.mrf.mxu0
        %v2966 = vadd.f32 0.0, %v2965
        %2967 = vmatmul.bf16.gmra.mxu0 %v2889
        %v2968 = vpop.f32.mrf.mxu0
        %v2969 = vadd.f32 0.0, %v2968
        %v2970 = vpop.f32.mrf.mxu0
        %v2971 = vadd.f32 0.0, %v2970
        %2972 = vmatmul.bf16.gmra.mxu0 %v2892
        %v2973 = vpop.f32.mrf.mxu0
        %v2974 = vadd.f32 0.0, %v2973
        %v2975 = vpop.f32.mrf.mxu0
        %v2976 = vadd.f32 0.0, %v2975
        %2977 = vmatmul.bf16.gmra.mxu0 %v2895
        %v2978 = vpop.f32.mrf.mxu0
        %v2979 = vadd.f32 0.0, %v2978
        %v2980 = vpop.f32.mrf.mxu0
        %v2981 = vadd.f32 0.0, %v2980
        %2982 = vmatmul.bf16.gmra.mxu0 %v2898
        %v2983 = vpop.f32.mrf.mxu0
        %v2984 = vadd.f32 0.0, %v2983
        %v2985 = vpop.f32.mrf.mxu0
        %v2986 = vadd.f32 0.0, %v2985
        %2987 = vmatmul.bf16.gmra.mxu0 %v2901
        %v2988 = vpop.f32.mrf.mxu0
        %v2989 = vadd.f32 0.0, %v2988
        %v2990 = vpop.f32.mrf.mxu0
        %v2991 = vadd.f32 0.0, %v2990
        %2992 = vmatmul.bf16.gmra.mxu0 %v2904
        %v2993 = vpop.f32.mrf.mxu0
        %v2994 = vadd.f32 0.0, %v2993
        %v2995 = vpop.f32.mrf.mxu0
        %v2996 = vadd.f32 0.0, %v2995
        %2997 = vdwg.mxu0
        %v2998 = vadd.f32 %v2711, %v2919
        %v2999 = vadd.f32 %v2712, %v2921
        %v3000 = vadd.f32 %v2713, %v2924
        %v3001 = vadd.f32 %v2714, %v2926
        %v3002 = vadd.f32 %v2715, %v2929
        %v3003 = vadd.f32 %v2716, %v2931
        %v3004 = vadd.f32 %v2717, %v2934
        %v3005 = vadd.f32 %v2718, %v2936
        %v3006 = vadd.f32 %v2719, %v2939
        %v3007 = vadd.f32 %v2720, %v2941
        %v3008 = vadd.f32 %v2721, %v2944
        %v3009 = vadd.f32 %v2722, %v2946
        %v3010 = vadd.f32 %v2723, %v2949
        %v3011 = vadd.f32 %v2724, %v2951
        %v3012 = vadd.f32 %v2725, %v2954
        %v3013 = vadd.f32 %v2726, %v2956
        %v3014 = vadd.f32 %v2727, %v2959
        %v3015 = vadd.f32 %v2728, %v2961
        %v3016 = vadd.f32 %v2729, %v2964
        %v3017 = vadd.f32 %v2730, %v2966
        %v3018 = vadd.f32 %v2731, %v2969
        %v3019 = vadd.f32 %v2732, %v2971
        %v3020 = vadd.f32 %v2733, %v2974
        %v3021 = vadd.f32 %v2734, %v2976
        %v3022 = vadd.f32 %v2735, %v2979
        %v3023 = vadd.f32 %v2736, %v2981
        %v3024 = vadd.f32 %v2737, %v2984
        %v3025 = vadd.f32 %v2738, %v2986
        %v3026 = vadd.f32 %v2739, %v2989
        %v3027 = vadd.f32 %v2740, %v2991
        %v3028 = vadd.f32 %v2741, %v2994
        %v3029 = vadd.f32 %v2742, %v2996
        %v3030 = vld [vmem:[%s2743] sm:$0xf]
        %v3031 = vld [vmem:[%s2743 + $0x4] sm:$0xf]
        %v3032 = vld [vmem:[%s2743 + $0x8] sm:$0x1]
        %v3033 = vld [vmem:[%s2743 + $0xc] sm:$0xf]
        %v3034 = vld [vmem:[%s2743 + $0x10] sm:$0xf]
        %v3035 = vld [vmem:[%s2743 + $0x14] sm:$0x1]
        %v3036 = vld [vmem:[%s2743 + $0x18] sm:$0xf]
        %v3037 = vld [vmem:[%s2743 + $0x1c] sm:$0xf]
        %v3038 = vld [vmem:[%s2743 + $0x20] sm:$0x1]
        %v3039 = vld [vmem:[%s2743 + $0x24] sm:$0xf]
        %v3040 = vld [vmem:[%s2743 + $0x28] sm:$0xf]
        %v3041 = vld [vmem:[%s2743 + $0x2c] sm:$0x1]
        %v3042 = vld [vmem:[%s2743 + $0x30] sm:$0xf]
        %v3043 = vld [vmem:[%s2743 + $0x34] sm:$0xf]
        %v3044 = vld [vmem:[%s2743 + $0x38] sm:$0x1]
        %v3045 = vld [vmem:[%s2743 + $0x3c] sm:$0xf]
        %v3046 = vld [vmem:[%s2743 + $0x40] sm:$0xf]
        %v3047 = vld [vmem:[%s2743 + $0x44] sm:$0x1]
        %v3048 = vld [vmem:[%s2743 + $0x48] sm:$0xf]
        %v3049 = vld [vmem:[%s2743 + $0x4c] sm:$0xf]
        %v3050 = vld [vmem:[%s2743 + $0x50] sm:$0x1]
        %v3051 = vld [vmem:[%s2743 + $0x54] sm:$0xf]
        %v3052 = vld [vmem:[%s2743 + $0x58] sm:$0xf]
        %v3053 = vld [vmem:[%s2743 + $0x5c] sm:$0x1]
        %v3054 = vld [vmem:[%s2743 + $0x60] sm:$0xf]
        %v3055 = vld [vmem:[%s2743 + $0x64] sm:$0xf]
        %v3056 = vld [vmem:[%s2743 + $0x68] sm:$0x1]
        %v3057 = vld [vmem:[%s2743 + $0x6c] sm:$0xf]
        %v3058 = vld [vmem:[%s2743 + $0x70] sm:$0xf]
        %v3059 = vld [vmem:[%s2743 + $0x74] sm:$0x1]
        %v3060 = vld [vmem:[%s2743 + $0x78] sm:$0xf]
        %v3061 = vld [vmem:[%s2743 + $0x7c] sm:$0xf]
        %v3062 = vld [vmem:[%s2743 + $0x80] sm:$0x1]
        %v3063 = vld [vmem:[%s2743 + $0x84] sm:$0xf]
        %v3064 = vld [vmem:[%s2743 + $0x88] sm:$0xf]
        %v3065 = vld [vmem:[%s2743 + $0x8c] sm:$0x1]
        %v3066 = vld [vmem:[%s2743 + $0x90] sm:$0xf]
        %v3067 = vld [vmem:[%s2743 + $0x94] sm:$0xf]
        %v3068 = vld [vmem:[%s2743 + $0x98] sm:$0x1]
        %v3069 = vld [vmem:[%s2743 + $0x9c] sm:$0xf]
        %v3070 = vld [vmem:[%s2743 + $0xa0] sm:$0xf]
        %v3071 = vld [vmem:[%s2743 + $0xa4] sm:$0x1]
        %v3072 = vld [vmem:[%s2743 + $0xa8] sm:$0xf]
        %v3073 = vld [vmem:[%s2743 + $0xac] sm:$0xf]
        %v3074 = vld [vmem:[%s2743 + $0xb0] sm:$0x1]
        %v3075 = vld [vmem:[%s2743 + $0xb4] sm:$0xf]
        %v3076 = vld [vmem:[%s2743 + $0xb8] sm:$0xf]
        %v3077 = vld [vmem:[%s2743 + $0xbc] sm:$0x1]
        %v3079 = vshrl.u32 %v3030, 16
        %v3081 = vrot.slane %v3079, 4
        %v3082 = vshll.u32 %v3030, 16
        %v3084 = vrot.slane %v3082, 5
        %v3085 = vor.u32 %v3081, %v3084
        %v3086 = vrot.slane %v3085, 4
        %v3088 = vshll.u32 %v3031, 16
        %v3090 = vrot.slane %v3088, 5
        %v3091 = vsel %vm222, %v3086, %v3090
        %v3092 = vshrl.u32 %v3031, 16
        %v3094 = vrot.slane %v3092, 4
        %v3095 = vor.u32 %v3094, %v3090
        %v3096 = vrot.slane %v3095, 4
        %v3098 = vshll.u32 %v3032, 16
        %v3100 = vrot.slane %v3098, 5
        %v3101 = vsel %vm222, %v3096, %v3100
        %v3103 = vshrl.u32 %v3033, 16
        %v3105 = vrot.slane %v3103, 4
        %v3106 = vshll.u32 %v3033, 16
        %v3108 = vrot.slane %v3106, 5
        %v3109 = vor.u32 %v3105, %v3108
        %v3110 = vrot.slane %v3109, 4
        %v3112 = vshll.u32 %v3034, 16
        %v3114 = vrot.slane %v3112, 5
        %v3115 = vsel %vm222, %v3110, %v3114
        %v3116 = vshrl.u32 %v3034, 16
        %v3118 = vrot.slane %v3116, 4
        %v3119 = vor.u32 %v3118, %v3114
        %v3120 = vrot.slane %v3119, 4
        %v3122 = vshll.u32 %v3035, 16
        %v3124 = vrot.slane %v3122, 5
        %v3125 = vsel %vm222, %v3120, %v3124
        %v3127 = vshrl.u32 %v3036, 16
        %v3129 = vrot.slane %v3127, 4
        %v3130 = vshll.u32 %v3036, 16
        %v3132 = vrot.slane %v3130, 5
        %v3133 = vor.u32 %v3129, %v3132
        %v3134 = vrot.slane %v3133, 4
        %v3136 = vshll.u32 %v3037, 16
        %v3138 = vrot.slane %v3136, 5
        %v3139 = vsel %vm222, %v3134, %v3138
        %v3140 = vshrl.u32 %v3037, 16
        %v3142 = vrot.slane %v3140, 4
        %v3143 = vor.u32 %v3142, %v3138
        %v3144 = vrot.slane %v3143, 4
        %v3146 = vshll.u32 %v3038, 16
        %v3148 = vrot.slane %v3146, 5
        %v3149 = vsel %vm222, %v3144, %v3148
        %v3151 = vshrl.u32 %v3039, 16
        %v3153 = vrot.slane %v3151, 4
        %v3154 = vshll.u32 %v3039, 16
        %v3156 = vrot.slane %v3154, 5
        %v3157 = vor.u32 %v3153, %v3156
        %v3158 = vrot.slane %v3157, 4
        %v3160 = vshll.u32 %v3040, 16
        %v3162 = vrot.slane %v3160, 5
        %v3163 = vsel %vm222, %v3158, %v3162
        %v3164 = vshrl.u32 %v3040, 16
        %v3166 = vrot.slane %v3164, 4
        %v3167 = vor.u32 %v3166, %v3162
        %v3168 = vrot.slane %v3167, 4
        %v3170 = vshll.u32 %v3041, 16
        %v3172 = vrot.slane %v3170, 5
        %v3173 = vsel %vm222, %v3168, %v3172
        %v3175 = vshrl.u32 %v3042, 16
        %v3177 = vrot.slane %v3175, 4
        %v3178 = vshll.u32 %v3042, 16
        %v3180 = vrot.slane %v3178, 5
        %v3181 = vor.u32 %v3177, %v3180
        %v3182 = vrot.slane %v3181, 4
        %v3184 = vshll.u32 %v3043, 16
        %v3186 = vrot.slane %v3184, 5
        %v3187 = vsel %vm222, %v3182, %v3186
        %v3188 = vshrl.u32 %v3043, 16
        %v3190 = vrot.slane %v3188, 4
        %v3191 = vor.u32 %v3190, %v3186
        %v3192 = vrot.slane %v3191, 4
        %v3194 = vshll.u32 %v3044, 16
        %v3196 = vrot.slane %v3194, 5
        %v3197 = vsel %vm222, %v3192, %v3196
        %v3199 = vshrl.u32 %v3045, 16
        %v3201 = vrot.slane %v3199, 4
        %v3202 = vshll.u32 %v3045, 16
        %v3204 = vrot.slane %v3202, 5
        %v3205 = vor.u32 %v3201, %v3204
        %v3206 = vrot.slane %v3205, 4
        %v3208 = vshll.u32 %v3046, 16
        %v3210 = vrot.slane %v3208, 5
        %v3211 = vsel %vm222, %v3206, %v3210
        %v3212 = vshrl.u32 %v3046, 16
        %v3214 = vrot.slane %v3212, 4
        %v3215 = vor.u32 %v3214, %v3210
        %v3216 = vrot.slane %v3215, 4
        %v3218 = vshll.u32 %v3047, 16
        %v3220 = vrot.slane %v3218, 5
        %v3221 = vsel %vm222, %v3216, %v3220
        %v3223 = vshrl.u32 %v3048, 16
        %v3225 = vrot.slane %v3223, 4
        %v3226 = vshll.u32 %v3048, 16
        %v3228 = vrot.slane %v3226, 5
        %v3229 = vor.u32 %v3225, %v3228
        %v3230 = vrot.slane %v3229, 4
        %v3232 = vshll.u32 %v3049, 16
        %v3234 = vrot.slane %v3232, 5
        %v3235 = vsel %vm222, %v3230, %v3234
        %v3236 = vshrl.u32 %v3049, 16
        %v3238 = vrot.slane %v3236, 4
        %v3239 = vor.u32 %v3238, %v3234
        %v3240 = vrot.slane %v3239, 4
        %v3242 = vshll.u32 %v3050, 16
        %v3244 = vrot.slane %v3242, 5
        %v3245 = vsel %vm222, %v3240, %v3244
        %v3247 = vshrl.u32 %v3051, 16
        %v3249 = vrot.slane %v3247, 4
        %v3250 = vshll.u32 %v3051, 16
        %v3252 = vrot.slane %v3250, 5
        %v3253 = vor.u32 %v3249, %v3252
        %v3254 = vrot.slane %v3253, 4
        %v3256 = vshll.u32 %v3052, 16
        %v3258 = vrot.slane %v3256, 5
        %v3259 = vsel %vm222, %v3254, %v3258
        %v3260 = vshrl.u32 %v3052, 16
        %v3262 = vrot.slane %v3260, 4
        %v3263 = vor.u32 %v3262, %v3258
        %v3264 = vrot.slane %v3263, 4
        %v3266 = vshll.u32 %v3053, 16
        %v3268 = vrot.slane %v3266, 5
        %v3269 = vsel %vm222, %v3264, %v3268
        %v3271 = vshrl.u32 %v3054, 16
        %v3273 = vrot.slane %v3271, 4
        %v3274 = vshll.u32 %v3054, 16
        %v3276 = vrot.slane %v3274, 5
        %v3277 = vor.u32 %v3273, %v3276
        %v3278 = vrot.slane %v3277, 4
        %v3280 = vshll.u32 %v3055, 16
        %v3282 = vrot.slane %v3280, 5
        %v3283 = vsel %vm222, %v3278, %v3282
        %v3284 = vshrl.u32 %v3055, 16
        %v3286 = vrot.slane %v3284, 4
        %v3287 = vor.u32 %v3286, %v3282
        %v3288 = vrot.slane %v3287, 4
        %v3290 = vshll.u32 %v3056, 16
        %v3292 = vrot.slane %v3290, 5
        %v3293 = vsel %vm222, %v3288, %v3292
        %v3295 = vshrl.u32 %v3057, 16
        %v3297 = vrot.slane %v3295, 4
        %v3298 = vshll.u32 %v3057, 16
        %v3300 = vrot.slane %v3298, 5
        %v3301 = vor.u32 %v3297, %v3300
        %v3302 = vrot.slane %v3301, 4
        %v3304 = vshll.u32 %v3058, 16
        %v3306 = vrot.slane %v3304, 5
        %v3307 = vsel %vm222, %v3302, %v3306
        %v3308 = vshrl.u32 %v3058, 16
        %v3310 = vrot.slane %v3308, 4
        %v3311 = vor.u32 %v3310, %v3306
        %v3312 = vrot.slane %v3311, 4
        %v3314 = vshll.u32 %v3059, 16
        %v3316 = vrot.slane %v3314, 5
        %v3317 = vsel %vm222, %v3312, %v3316
        %v3319 = vshrl.u32 %v3060, 16
        %v3321 = vrot.slane %v3319, 4
        %v3322 = vshll.u32 %v3060, 16
        %v3324 = vrot.slane %v3322, 5
        %v3325 = vor.u32 %v3321, %v3324
        %v3326 = vrot.slane %v3325, 4
        %v3328 = vshll.u32 %v3061, 16
        %v3330 = vrot.slane %v3328, 5
        %v3331 = vsel %vm222, %v3326, %v3330
        %v3332 = vshrl.u32 %v3061, 16
        %v3334 = vrot.slane %v3332, 4
        %v3335 = vor.u32 %v3334, %v3330
        %v3336 = vrot.slane %v3335, 4
        %v3338 = vshll.u32 %v3062, 16
        %v3340 = vrot.slane %v3338, 5
        %v3341 = vsel %vm222, %v3336, %v3340
        %v3343 = vshrl.u32 %v3063, 16
        %v3345 = vrot.slane %v3343, 4
        %v3346 = vshll.u32 %v3063, 16
        %v3348 = vrot.slane %v3346, 5
        %v3349 = vor.u32 %v3345, %v3348
        %v3350 = vrot.slane %v3349, 4
        %v3352 = vshll.u32 %v3064, 16
        %v3354 = vrot.slane %v3352, 5
        %v3355 = vsel %vm222, %v3350, %v3354
        %v3356 = vshrl.u32 %v3064, 16
        %v3358 = vrot.slane %v3356, 4
        %v3359 = vor.u32 %v3358, %v3354
        %v3360 = vrot.slane %v3359, 4
        %v3362 = vshll.u32 %v3065, 16
        %v3364 = vrot.slane %v3362, 5
        %v3365 = vsel %vm222, %v3360, %v3364
        %v3367 = vshrl.u32 %v3066, 16
        %v3369 = vrot.slane %v3367, 4
        %v3370 = vshll.u32 %v3066, 16
        %v3372 = vrot.slane %v3370, 5
        %v3373 = vor.u32 %v3369, %v3372
        %v3374 = vrot.slane %v3373, 4
        %v3376 = vshll.u32 %v3067, 16
        %v3378 = vrot.slane %v3376, 5
        %v3379 = vsel %vm222, %v3374, %v3378
        %v3380 = vshrl.u32 %v3067, 16
        %v3382 = vrot.slane %v3380, 4
        %v3383 = vor.u32 %v3382, %v3378
        %v3384 = vrot.slane %v3383, 4
        %v3386 = vshll.u32 %v3068, 16
        %v3388 = vrot.slane %v3386, 5
        %v3389 = vsel %vm222, %v3384, %v3388
        %v3391 = vshrl.u32 %v3069, 16
        %v3393 = vrot.slane %v3391, 4
        %v3394 = vshll.u32 %v3069, 16
        %v3396 = vrot.slane %v3394, 5
        %v3397 = vor.u32 %v3393, %v3396
        %v3398 = vrot.slane %v3397, 4
        %v3400 = vshll.u32 %v3070, 16
        %v3402 = vrot.slane %v3400, 5
        %v3403 = vsel %vm222, %v3398, %v3402
        %v3404 = vshrl.u32 %v3070, 16
        %v3406 = vrot.slane %v3404, 4
        %v3407 = vor.u32 %v3406, %v3402
        %v3408 = vrot.slane %v3407, 4
        %v3410 = vshll.u32 %v3071, 16
        %v3412 = vrot.slane %v3410, 5
        %v3413 = vsel %vm222, %v3408, %v3412
        %v3415 = vshrl.u32 %v3072, 16
        %v3417 = vrot.slane %v3415, 4
        %v3418 = vshll.u32 %v3072, 16
        %v3420 = vrot.slane %v3418, 5
        %v3421 = vor.u32 %v3417, %v3420
        %v3422 = vrot.slane %v3421, 4
        %v3424 = vshll.u32 %v3073, 16
        %v3426 = vrot.slane %v3424, 5
        %v3427 = vsel %vm222, %v3422, %v3426
        %v3428 = vshrl.u32 %v3073, 16
        %v3430 = vrot.slane %v3428, 4
        %v3431 = vor.u32 %v3430, %v3426
        %v3432 = vrot.slane %v3431, 4
        %v3434 = vshll.u32 %v3074, 16
        %v3436 = vrot.slane %v3434, 5
        %v3437 = vsel %vm222, %v3432, %v3436
        %v3439 = vshrl.u32 %v3075, 16
        %v3441 = vrot.slane %v3439, 4
        %v3442 = vshll.u32 %v3075, 16
        %v3444 = vrot.slane %v3442, 5
        %v3445 = vor.u32 %v3441, %v3444
        %v3446 = vrot.slane %v3445, 4
        %v3448 = vshll.u32 %v3076, 16
        %v3450 = vrot.slane %v3448, 5
        %v3451 = vsel %vm222, %v3446, %v3450
        %v3452 = vshrl.u32 %v3076, 16
        %v3454 = vrot.slane %v3452, 4
        %v3455 = vor.u32 %v3454, %v3450
        %v3456 = vrot.slane %v3455, 4
        %v3458 = vshll.u32 %v3077, 16
        %v3460 = vrot.slane %v3458, 5
        %v3461 = vsel %vm222, %v3456, %v3460
        %s3462 = scalar_lea.vmem %s1, 14
        %v3463 = vld [vmem:[%s3462] sm:$0x3]
        %v3464 = vunpack.c.l.b16 %v3091
        %v3465 = vunpack.c.l.b16 %v3101
        %v3466 = vunpack.c.l.b16 %v3115
        %v3467 = vunpack.c.l.b16 %v3125
        %v3468 = vunpack.c.l.b16 %v3139
        %v3469 = vunpack.c.l.b16 %v3149
        %v3470 = vunpack.c.l.b16 %v3163
        %v3471 = vunpack.c.l.b16 %v3173
        %v3472 = vunpack.c.l.b16 %v3187
        %v3473 = vunpack.c.l.b16 %v3197
        %v3474 = vunpack.c.l.b16 %v3211
        %v3475 = vunpack.c.l.b16 %v3221
        %v3476 = vunpack.c.l.b16 %v3235
        %v3477 = vunpack.c.l.b16 %v3245
        %v3478 = vunpack.c.l.b16 %v3259
        %v3479 = vunpack.c.l.b16 %v3269
        %v3480 = vunpack.c.l.b16 %v3283
        %v3481 = vunpack.c.l.b16 %v3293
        %v3482 = vunpack.c.l.b16 %v3307
        %v3483 = vunpack.c.l.b16 %v3317
        %v3484 = vunpack.c.l.b16 %v3331
        %v3485 = vunpack.c.l.b16 %v3341
        %v3486 = vunpack.c.l.b16 %v3355
        %v3487 = vunpack.c.l.b16 %v3365
        %v3488 = vunpack.c.l.b16 %v3379
        %v3489 = vunpack.c.l.b16 %v3389
        %v3490 = vunpack.c.l.b16 %v3403
        %v3491 = vunpack.c.l.b16 %v3413
        %v3492 = vunpack.c.l.b16 %v3427
        %v3493 = vunpack.c.l.b16 %v3437
        %v3494 = vunpack.c.l.b16 %v3451
        %v3495 = vunpack.c.l.b16 %v3461
        %v3496 = vpack.c.b16 %v3465, %v3464
        %v3497 = vpack.c.b16 %v3467, %v3466
        %v3498 = vpack.c.b16 %v3469, %v3468
        %v3499 = vpack.c.b16 %v3471, %v3470
        %v3500 = vpack.c.b16 %v3473, %v3472
        %v3501 = vpack.c.b16 %v3475, %v3474
        %v3502 = vpack.c.b16 %v3477, %v3476
        %v3503 = vpack.c.b16 %v3479, %v3478
        %v3504 = vpack.c.b16 %v3481, %v3480
        %v3505 = vpack.c.b16 %v3483, %v3482
        %v3506 = vpack.c.b16 %v3485, %v3484
        %v3507 = vpack.c.b16 %v3487, %v3486
        %v3508 = vpack.c.b16 %v3489, %v3488
        %v3509 = vpack.c.b16 %v3491, %v3490
        %v3510 = vpack.c.b16 %v3493, %v3492
        %v3511 = vpack.c.b16 %v3495, %v3494
        %v3513 = vsel %vm657, %v3496, 0
        %v3516 = vsel %vm657, %v3497, 0
        %v3519 = vsel %vm657, %v3498, 0
        %v3522 = vsel %vm657, %v3499, 0
        %v3525 = vsel %vm657, %v3500, 0
        %v3528 = vsel %vm657, %v3501, 0
        %v3531 = vsel %vm657, %v3502, 0
        %v3534 = vsel %vm657, %v3503, 0
        %v3537 = vsel %vm657, %v3504, 0
        %v3540 = vsel %vm657, %v3505, 0
        %v3543 = vsel %vm657, %v3506, 0
        %v3546 = vsel %vm657, %v3507, 0
        %v3549 = vsel %vm657, %v3508, 0
        %v3552 = vsel %vm657, %v3509, 0
        %v3555 = vsel %vm657, %v3510, 0
        %v3558 = vsel %vm657, %v3511, 0
        %v3561 = vsel %vm706, %v3463, 0
        %3563 = vmatpush.bf16.msra.mxu0 0
        %3564 = vmatpush.bf16.msra.mxu0 0
        %3565 = vmatpush.bf16.msra.mxu0 0
        %3566 = vmatpush.bf16.msra.mxu0 0
        %3567 = vmatpush.bf16.msra.mxu0 0
        %3568 = vmatpush.bf16.msra.mxu0 0
        %3569 = vmatpush.bf16.msra.mxu0 0
        %3570 = vmatpush.bf16.msra.mxu0 %v3561
        %3571 = vmatmul.bf16.gmra.mxu0 %v3513
        %v3572 = vpop.f32.mrf.mxu0
        %v3573 = vadd.f32 0.0, %v3572
        %v3574 = vpop.f32.mrf.mxu0
        %v3575 = vadd.f32 0.0, %v3574
        %3576 = vmatmul.bf16.gmra.mxu0 %v3516
        %v3577 = vpop.f32.mrf.mxu0
        %v3578 = vadd.f32 0.0, %v3577
        %v3579 = vpop.f32.mrf.mxu0
        %v3580 = vadd.f32 0.0, %v3579
        %3581 = vmatmul.bf16.gmra.mxu0 %v3519
        %v3582 = vpop.f32.mrf.mxu0
        %v3583 = vadd.f32 0.0, %v3582
        %v3584 = vpop.f32.mrf.mxu0
        %v3585 = vadd.f32 0.0, %v3584
        %3586 = vmatmul.bf16.gmra.mxu0 %v3522
        %v3587 = vpop.f32.mrf.mxu0
        %v3588 = vadd.f32 0.0, %v3587
        %v3589 = vpop.f32.mrf.mxu0
        %v3590 = vadd.f32 0.0, %v3589
        %3591 = vmatmul.bf16.gmra.mxu0 %v3525
        %v3592 = vpop.f32.mrf.mxu0
        %v3593 = vadd.f32 0.0, %v3592
        %v3594 = vpop.f32.mrf.mxu0
        %v3595 = vadd.f32 0.0, %v3594
        %3596 = vmatmul.bf16.gmra.mxu0 %v3528
        %v3597 = vpop.f32.mrf.mxu0
        %v3598 = vadd.f32 0.0, %v3597
        %v3599 = vpop.f32.mrf.mxu0
        %v3600 = vadd.f32 0.0, %v3599
        %3601 = vmatmul.bf16.gmra.mxu0 %v3531
        %v3602 = vpop.f32.mrf.mxu0
        %v3603 = vadd.f32 0.0, %v3602
        %v3604 = vpop.f32.mrf.mxu0
        %v3605 = vadd.f32 0.0, %v3604
        %3606 = vmatmul.bf16.gmra.mxu0 %v3534
        %v3607 = vpop.f32.mrf.mxu0
        %v3608 = vadd.f32 0.0, %v3607
        %v3609 = vpop.f32.mrf.mxu0
        %v3610 = vadd.f32 0.0, %v3609
        %3611 = vmatmul.bf16.gmra.mxu0 %v3537
        %v3612 = vpop.f32.mrf.mxu0
        %v3613 = vadd.f32 0.0, %v3612
        %v3614 = vpop.f32.mrf.mxu0
        %v3615 = vadd.f32 0.0, %v3614
        %3616 = vmatmul.bf16.gmra.mxu0 %v3540
        %v3617 = vpop.f32.mrf.mxu0
        %v3618 = vadd.f32 0.0, %v3617
        %v3619 = vpop.f32.mrf.mxu0
        %v3620 = vadd.f32 0.0, %v3619
        %3621 = vmatmul.bf16.gmra.mxu0 %v3543
        %v3622 = vpop.f32.mrf.mxu0
        %v3623 = vadd.f32 0.0, %v3622
        %v3624 = vpop.f32.mrf.mxu0
        %v3625 = vadd.f32 0.0, %v3624
        %3626 = vmatmul.bf16.gmra.mxu0 %v3546
        %v3627 = vpop.f32.mrf.mxu0
        %v3628 = vadd.f32 0.0, %v3627
        %v3629 = vpop.f32.mrf.mxu0
        %v3630 = vadd.f32 0.0, %v3629
        %3631 = vmatmul.bf16.gmra.mxu0 %v3549
        %v3632 = vpop.f32.mrf.mxu0
        %v3633 = vadd.f32 0.0, %v3632
        %v3634 = vpop.f32.mrf.mxu0
        %v3635 = vadd.f32 0.0, %v3634
        %3636 = vmatmul.bf16.gmra.mxu0 %v3552
        %v3637 = vpop.f32.mrf.mxu0
        %v3638 = vadd.f32 0.0, %v3637
        %v3639 = vpop.f32.mrf.mxu0
        %v3640 = vadd.f32 0.0, %v3639
        %3641 = vmatmul.bf16.gmra.mxu0 %v3555
        %v3642 = vpop.f32.mrf.mxu0
        %v3643 = vadd.f32 0.0, %v3642
        %v3644 = vpop.f32.mrf.mxu0
        %v3645 = vadd.f32 0.0, %v3644
        %3646 = vmatmul.bf16.gmra.mxu0 %v3558
        %v3647 = vpop.f32.mrf.mxu0
        %v3648 = vadd.f32 0.0, %v3647
        %v3649 = vpop.f32.mrf.mxu0
        %v3650 = vadd.f32 0.0, %v3649
        %3651 = vdwg.mxu0
        %v3652 = vadd.f32 %v2998, %v3573
        %v3653 = vadd.f32 %v2999, %v3575
        %v3654 = vadd.f32 %v3000, %v3578
        %v3655 = vadd.f32 %v3001, %v3580
        %v3656 = vadd.f32 %v3002, %v3583
        %v3657 = vadd.f32 %v3003, %v3585
        %v3658 = vadd.f32 %v3004, %v3588
        %v3659 = vadd.f32 %v3005, %v3590
        %v3660 = vadd.f32 %v3006, %v3593
        %v3661 = vadd.f32 %v3007, %v3595
        %v3662 = vadd.f32 %v3008, %v3598
        %v3663 = vadd.f32 %v3009, %v3600
        %v3664 = vadd.f32 %v3010, %v3603
        %v3665 = vadd.f32 %v3011, %v3605
        %v3666 = vadd.f32 %v3012, %v3608
        %v3667 = vadd.f32 %v3013, %v3610
        %v3668 = vadd.f32 %v3014, %v3613
        %v3669 = vadd.f32 %v3015, %v3615
        %v3670 = vadd.f32 %v3016, %v3618
        %v3671 = vadd.f32 %v3017, %v3620
        %v3672 = vadd.f32 %v3018, %v3623
        %v3673 = vadd.f32 %v3019, %v3625
        %v3674 = vadd.f32 %v3020, %v3628
        %v3675 = vadd.f32 %v3021, %v3630
        %v3676 = vadd.f32 %v3022, %v3633
        %v3677 = vadd.f32 %v3023, %v3635
        %v3678 = vadd.f32 %v3024, %v3638
        %v3679 = vadd.f32 %v3025, %v3640
        %v3680 = vadd.f32 %v3026, %v3643
        %v3681 = vadd.f32 %v3027, %v3645
        %v3682 = vadd.f32 %v3028, %v3648
        %v3683 = vadd.f32 %v3029, %v3650
        %v3684 = vld [vmem:[%s2743] sm:$0xe]
        %v3685 = vld [vmem:[%s2743 + $0xc] sm:$0xe]
        %v3686 = vld [vmem:[%s2743 + $0x18] sm:$0xe]
        %v3687 = vld [vmem:[%s2743 + $0x24] sm:$0xe]
        %v3688 = vld [vmem:[%s2743 + $0x30] sm:$0xe]
        %v3689 = vld [vmem:[%s2743 + $0x3c] sm:$0xe]
        %v3690 = vld [vmem:[%s2743 + $0x48] sm:$0xe]
        %v3691 = vld [vmem:[%s2743 + $0x54] sm:$0xe]
        %v3692 = vld [vmem:[%s2743 + $0x60] sm:$0xe]
        %v3693 = vld [vmem:[%s2743 + $0x6c] sm:$0xe]
        %v3694 = vld [vmem:[%s2743 + $0x78] sm:$0xe]
        %v3695 = vld [vmem:[%s2743 + $0x84] sm:$0xe]
        %v3696 = vld [vmem:[%s2743 + $0x90] sm:$0xe]
        %v3697 = vld [vmem:[%s2743 + $0x9c] sm:$0xe]
        %v3698 = vld [vmem:[%s2743 + $0xa8] sm:$0xe]
        %v3699 = vld [vmem:[%s2743 + $0xb4] sm:$0xe]
        %v3748 = vrot.slane %v3684, 5
        %v3749 = vrot.slane %v3748, 4
        %v3750 = vrot.slane %v3031, 5
        %v3751 = vsel %vm1069, %v3749, %v3750
        %v3752 = vrot.slane %v3750, 4
        %v3753 = vrot.slane %v3032, 5
        %v3754 = vsel %vm1069, %v3752, %v3753
        %v3755 = vrot.slane %v3685, 5
        %v3756 = vrot.slane %v3755, 4
        %v3757 = vrot.slane %v3034, 5
        %v3758 = vsel %vm1069, %v3756, %v3757
        %v3759 = vrot.slane %v3757, 4
        %v3760 = vrot.slane %v3035, 5
        %v3761 = vsel %vm1069, %v3759, %v3760
        %v3762 = vrot.slane %v3686, 5
        %v3763 = vrot.slane %v3762, 4
        %v3764 = vrot.slane %v3037, 5
        %v3765 = vsel %vm1069, %v3763, %v3764
        %v3766 = vrot.slane %v3764, 4
        %v3767 = vrot.slane %v3038, 5
        %v3768 = vsel %vm1069, %v3766, %v3767
        %v3769 = vrot.slane %v3687, 5
        %v3770 = vrot.slane %v3769, 4
        %v3771 = vrot.slane %v3040, 5
        %v3772 = vsel %vm1069, %v3770, %v3771
        %v3773 = vrot.slane %v3771, 4
        %v3774 = vrot.slane %v3041, 5
        %v3775 = vsel %vm1069, %v3773, %v3774
        %v3776 = vrot.slane %v3688, 5
        %v3777 = vrot.slane %v3776, 4
        %v3778 = vrot.slane %v3043, 5
        %v3779 = vsel %vm1069, %v3777, %v3778
        %v3780 = vrot.slane %v3778, 4
        %v3781 = vrot.slane %v3044, 5
        %v3782 = vsel %vm1069, %v3780, %v3781
        %v3783 = vrot.slane %v3689, 5
        %v3784 = vrot.slane %v3783, 4
        %v3785 = vrot.slane %v3046, 5
        %v3786 = vsel %vm1069, %v3784, %v3785
        %v3787 = vrot.slane %v3785, 4
        %v3788 = vrot.slane %v3047, 5
        %v3789 = vsel %vm1069, %v3787, %v3788
        %v3790 = vrot.slane %v3690, 5
        %v3791 = vrot.slane %v3790, 4
        %v3792 = vrot.slane %v3049, 5
        %v3793 = vsel %vm1069, %v3791, %v3792
        %v3794 = vrot.slane %v3792, 4
        %v3795 = vrot.slane %v3050, 5
        %v3796 = vsel %vm1069, %v3794, %v3795
        %v3797 = vrot.slane %v3691, 5
        %v3798 = vrot.slane %v3797, 4
        %v3799 = vrot.slane %v3052, 5
        %v3800 = vsel %vm1069, %v3798, %v3799
        %v3801 = vrot.slane %v3799, 4
        %v3802 = vrot.slane %v3053, 5
        %v3803 = vsel %vm1069, %v3801, %v3802
        %v3804 = vrot.slane %v3692, 5
        %v3805 = vrot.slane %v3804, 4
        %v3806 = vrot.slane %v3055, 5
        %v3807 = vsel %vm1069, %v3805, %v3806
        %v3808 = vrot.slane %v3806, 4
        %v3809 = vrot.slane %v3056, 5
        %v3810 = vsel %vm1069, %v3808, %v3809
        %v3811 = vrot.slane %v3693, 5
        %v3812 = vrot.slane %v3811, 4
        %v3813 = vrot.slane %v3058, 5
        %v3814 = vsel %vm1069, %v3812, %v3813
        %v3815 = vrot.slane %v3813, 4
        %v3816 = vrot.slane %v3059, 5
        %v3817 = vsel %vm1069, %v3815, %v3816
        %v3818 = vrot.slane %v3694, 5
        %v3819 = vrot.slane %v3818, 4
        %v3820 = vrot.slane %v3061, 5
        %v3821 = vsel %vm1069, %v3819, %v3820
        %v3822 = vrot.slane %v3820, 4
        %v3823 = vrot.slane %v3062, 5
        %v3824 = vsel %vm1069, %v3822, %v3823
        %v3825 = vrot.slane %v3695, 5
        %v3826 = vrot.slane %v3825, 4
        %v3827 = vrot.slane %v3064, 5
        %v3828 = vsel %vm1069, %v3826, %v3827
        %v3829 = vrot.slane %v3827, 4
        %v3830 = vrot.slane %v3065, 5
        %v3831 = vsel %vm1069, %v3829, %v3830
        %v3832 = vrot.slane %v3696, 5
        %v3833 = vrot.slane %v3832, 4
        %v3834 = vrot.slane %v3067, 5
        %v3835 = vsel %vm1069, %v3833, %v3834
        %v3836 = vrot.slane %v3834, 4
        %v3837 = vrot.slane %v3068, 5
        %v3838 = vsel %vm1069, %v3836, %v3837
        %v3839 = vrot.slane %v3697, 5
        %v3840 = vrot.slane %v3839, 4
        %v3841 = vrot.slane %v3070, 5
        %v3842 = vsel %vm1069, %v3840, %v3841
        %v3843 = vrot.slane %v3841, 4
        %v3844 = vrot.slane %v3071, 5
        %v3845 = vsel %vm1069, %v3843, %v3844
        %v3846 = vrot.slane %v3698, 5
        %v3847 = vrot.slane %v3846, 4
        %v3848 = vrot.slane %v3073, 5
        %v3849 = vsel %vm1069, %v3847, %v3848
        %v3850 = vrot.slane %v3848, 4
        %v3851 = vrot.slane %v3074, 5
        %v3852 = vsel %vm1069, %v3850, %v3851
        %v3853 = vrot.slane %v3699, 5
        %v3854 = vrot.slane %v3853, 4
        %v3855 = vrot.slane %v3076, 5
        %v3856 = vsel %vm1069, %v3854, %v3855
        %v3857 = vrot.slane %v3855, 4
        %v3858 = vrot.slane %v3077, 5
        %v3859 = vsel %vm1069, %v3857, %v3858
        %s3860 = scalar_lea.vmem %s1, 16
        %v3861 = vld [vmem:[%s3860] sm:$0x3]
        %v3862 = vunpack.c.l.b16 %v3751
        %v3863 = vunpack.c.l.b16 %v3754
        %v3864 = vunpack.c.l.b16 %v3758
        %v3865 = vunpack.c.l.b16 %v3761
        %v3866 = vunpack.c.l.b16 %v3765
        %v3867 = vunpack.c.l.b16 %v3768
        %v3868 = vunpack.c.l.b16 %v3772
        %v3869 = vunpack.c.l.b16 %v3775
        %v3870 = vunpack.c.l.b16 %v3779
        %v3871 = vunpack.c.l.b16 %v3782
        %v3872 = vunpack.c.l.b16 %v3786
        %v3873 = vunpack.c.l.b16 %v3789
        %v3874 = vunpack.c.l.b16 %v3793
        %v3875 = vunpack.c.l.b16 %v3796
        %v3876 = vunpack.c.l.b16 %v3800
        %v3877 = vunpack.c.l.b16 %v3803
        %v3878 = vunpack.c.l.b16 %v3807
        %v3879 = vunpack.c.l.b16 %v3810
        %v3880 = vunpack.c.l.b16 %v3814
        %v3881 = vunpack.c.l.b16 %v3817
        %v3882 = vunpack.c.l.b16 %v3821
        %v3883 = vunpack.c.l.b16 %v3824
        %v3884 = vunpack.c.l.b16 %v3828
        %v3885 = vunpack.c.l.b16 %v3831
        %v3886 = vunpack.c.l.b16 %v3835
        %v3887 = vunpack.c.l.b16 %v3838
        %v3888 = vunpack.c.l.b16 %v3842
        %v3889 = vunpack.c.l.b16 %v3845
        %v3890 = vunpack.c.l.b16 %v3849
        %v3891 = vunpack.c.l.b16 %v3852
        %v3892 = vunpack.c.l.b16 %v3856
        %v3893 = vunpack.c.l.b16 %v3859
        %v3894 = vpack.c.b16 %v3863, %v3862
        %v3895 = vpack.c.b16 %v3865, %v3864
        %v3896 = vpack.c.b16 %v3867, %v3866
        %v3897 = vpack.c.b16 %v3869, %v3868
        %v3898 = vpack.c.b16 %v3871, %v3870
        %v3899 = vpack.c.b16 %v3873, %v3872
        %v3900 = vpack.c.b16 %v3875, %v3874
        %v3901 = vpack.c.b16 %v3877, %v3876
        %v3902 = vpack.c.b16 %v3879, %v3878
        %v3903 = vpack.c.b16 %v3881, %v3880
        %v3904 = vpack.c.b16 %v3883, %v3882
        %v3905 = vpack.c.b16 %v3885, %v3884
        %v3906 = vpack.c.b16 %v3887, %v3886
        %v3907 = vpack.c.b16 %v3889, %v3888
        %v3908 = vpack.c.b16 %v3891, %v3890
        %v3909 = vpack.c.b16 %v3893, %v3892
        %v3911 = vsel %vm657, %v3894, 0
        %v3914 = vsel %vm657, %v3895, 0
        %v3917 = vsel %vm657, %v3896, 0
        %v3920 = vsel %vm657, %v3897, 0
        %v3923 = vsel %vm657, %v3898, 0
        %v3926 = vsel %vm657, %v3899, 0
        %v3929 = vsel %vm657, %v3900, 0
        %v3932 = vsel %vm657, %v3901, 0
        %v3935 = vsel %vm657, %v3902, 0
        %v3938 = vsel %vm657, %v3903, 0
        %v3941 = vsel %vm657, %v3904, 0
        %v3944 = vsel %vm657, %v3905, 0
        %v3947 = vsel %vm657, %v3906, 0
        %v3950 = vsel %vm657, %v3907, 0
        %v3953 = vsel %vm657, %v3908, 0
        %v3956 = vsel %vm657, %v3909, 0
        %v3959 = vsel %vm706, %v3861, 0
        %3961 = vmatpush.bf16.msra.mxu0 0
        %3962 = vmatpush.bf16.msra.mxu0 0
        %3963 = vmatpush.bf16.msra.mxu0 0
        %3964 = vmatpush.bf16.msra.mxu0 0
        %3965 = vmatpush.bf16.msra.mxu0 0
        %3966 = vmatpush.bf16.msra.mxu0 0
        %3967 = vmatpush.bf16.msra.mxu0 0
        %3968 = vmatpush.bf16.msra.mxu0 %v3959
        %3969 = vmatmul.bf16.gmra.mxu0 %v3911
        %v3970 = vpop.f32.mrf.mxu0
        %v3971 = vadd.f32 0.0, %v3970
        %v3972 = vpop.f32.mrf.mxu0
        %v3973 = vadd.f32 0.0, %v3972
        %3974 = vmatmul.bf16.gmra.mxu0 %v3914
        %v3975 = vpop.f32.mrf.mxu0
        %v3976 = vadd.f32 0.0, %v3975
        %v3977 = vpop.f32.mrf.mxu0
        %v3978 = vadd.f32 0.0, %v3977
        %3979 = vmatmul.bf16.gmra.mxu0 %v3917
        %v3980 = vpop.f32.mrf.mxu0
        %v3981 = vadd.f32 0.0, %v3980
        %v3982 = vpop.f32.mrf.mxu0
        %v3983 = vadd.f32 0.0, %v3982
        %3984 = vmatmul.bf16.gmra.mxu0 %v3920
        %v3985 = vpop.f32.mrf.mxu0
        %v3986 = vadd.f32 0.0, %v3985
        %v3987 = vpop.f32.mrf.mxu0
        %v3988 = vadd.f32 0.0, %v3987
        %3989 = vmatmul.bf16.gmra.mxu0 %v3923
        %v3990 = vpop.f32.mrf.mxu0
        %v3991 = vadd.f32 0.0, %v3990
        %v3992 = vpop.f32.mrf.mxu0
        %v3993 = vadd.f32 0.0, %v3992
        %3994 = vmatmul.bf16.gmra.mxu0 %v3926
        %v3995 = vpop.f32.mrf.mxu0
        %v3996 = vadd.f32 0.0, %v3995
        %v3997 = vpop.f32.mrf.mxu0
        %v3998 = vadd.f32 0.0, %v3997
        %3999 = vmatmul.bf16.gmra.mxu0 %v3929
        %v4000 = vpop.f32.mrf.mxu0
        %v4001 = vadd.f32 0.0, %v4000
        %v4002 = vpop.f32.mrf.mxu0
        %v4003 = vadd.f32 0.0, %v4002
        %4004 = vmatmul.bf16.gmra.mxu0 %v3932
        %v4005 = vpop.f32.mrf.mxu0
        %v4006 = vadd.f32 0.0, %v4005
        %v4007 = vpop.f32.mrf.mxu0
        %v4008 = vadd.f32 0.0, %v4007
        %4009 = vmatmul.bf16.gmra.mxu0 %v3935
        %v4010 = vpop.f32.mrf.mxu0
        %v4011 = vadd.f32 0.0, %v4010
        %v4012 = vpop.f32.mrf.mxu0
        %v4013 = vadd.f32 0.0, %v4012
        %4014 = vmatmul.bf16.gmra.mxu0 %v3938
        %v4015 = vpop.f32.mrf.mxu0
        %v4016 = vadd.f32 0.0, %v4015
        %v4017 = vpop.f32.mrf.mxu0
        %v4018 = vadd.f32 0.0, %v4017
        %4019 = vmatmul.bf16.gmra.mxu0 %v3941
        %v4020 = vpop.f32.mrf.mxu0
        %v4021 = vadd.f32 0.0, %v4020
        %v4022 = vpop.f32.mrf.mxu0
        %v4023 = vadd.f32 0.0, %v4022
        %4024 = vmatmul.bf16.gmra.mxu0 %v3944
        %v4025 = vpop.f32.mrf.mxu0
        %v4026 = vadd.f32 0.0, %v4025
        %v4027 = vpop.f32.mrf.mxu0
        %v4028 = vadd.f32 0.0, %v4027
        %4029 = vmatmul.bf16.gmra.mxu0 %v3947
        %v4030 = vpop.f32.mrf.mxu0
        %v4031 = vadd.f32 0.0, %v4030
        %v4032 = vpop.f32.mrf.mxu0
        %v4033 = vadd.f32 0.0, %v4032
        %4034 = vmatmul.bf16.gmra.mxu0 %v3950
        %v4035 = vpop.f32.mrf.mxu0
        %v4036 = vadd.f32 0.0, %v4035
        %v4037 = vpop.f32.mrf.mxu0
        %v4038 = vadd.f32 0.0, %v4037
        %4039 = vmatmul.bf16.gmra.mxu0 %v3953
        %v4040 = vpop.f32.mrf.mxu0
        %v4041 = vadd.f32 0.0, %v4040
        %v4042 = vpop.f32.mrf.mxu0
        %v4043 = vadd.f32 0.0, %v4042
        %4044 = vmatmul.bf16.gmra.mxu0 %v3956
        %v4045 = vpop.f32.mrf.mxu0
        %v4046 = vadd.f32 0.0, %v4045
        %v4047 = vpop.f32.mrf.mxu0
        %v4048 = vadd.f32 0.0, %v4047
        %4049 = vdwg.mxu0
        %v4050 = vadd.f32 %v3652, %v3971
        %v4051 = vadd.f32 %v3653, %v3973
        %v4052 = vadd.f32 %v3654, %v3976
        %v4053 = vadd.f32 %v3655, %v3978
        %v4054 = vadd.f32 %v3656, %v3981
        %v4055 = vadd.f32 %v3657, %v3983
        %v4056 = vadd.f32 %v3658, %v3986
        %v4057 = vadd.f32 %v3659, %v3988
        %v4058 = vadd.f32 %v3660, %v3991
        %v4059 = vadd.f32 %v3661, %v3993
        %v4060 = vadd.f32 %v3662, %v3996
        %v4061 = vadd.f32 %v3663, %v3998
        %v4062 = vadd.f32 %v3664, %v4001
        %v4063 = vadd.f32 %v3665, %v4003
        %v4064 = vadd.f32 %v3666, %v4006
        %v4065 = vadd.f32 %v3667, %v4008
        %v4066 = vadd.f32 %v3668, %v4011
        %v4067 = vadd.f32 %v3669, %v4013
        %v4068 = vadd.f32 %v3670, %v4016
        %v4069 = vadd.f32 %v3671, %v4018
        %v4070 = vadd.f32 %v3672, %v4021
        %v4071 = vadd.f32 %v3673, %v4023
        %v4072 = vadd.f32 %v3674, %v4026
        %v4073 = vadd.f32 %v3675, %v4028
        %v4074 = vadd.f32 %v3676, %v4031
        %v4075 = vadd.f32 %v3677, %v4033
        %v4076 = vadd.f32 %v3678, %v4036
        %v4077 = vadd.f32 %v3679, %v4038
        %v4078 = vadd.f32 %v3680, %v4041
        %v4079 = vadd.f32 %v3681, %v4043
        %v4080 = vadd.f32 %v3682, %v4046
        %v4081 = vadd.f32 %v3683, %v4048
        %v4082 = vld [vmem:[%s2] sm:$0x1]
        %v4084 = vperm.slane %v4082, 0
        %v4086 = vmul.f32 %v4050, %v4084
        %v4087 = vmul.f32 %v4051, %v4084
        %v4088 = vmul.f32 %v4052, %v4084
        %v4089 = vmul.f32 %v4053, %v4084
        %v4090 = vmul.f32 %v4054, %v4084
        %v4091 = vmul.f32 %v4055, %v4084
        %v4092 = vmul.f32 %v4056, %v4084
        %v4093 = vmul.f32 %v4057, %v4084
        %v4094 = vmul.f32 %v4058, %v4084
        %v4095 = vmul.f32 %v4059, %v4084
        %v4096 = vmul.f32 %v4060, %v4084
        %v4097 = vmul.f32 %v4061, %v4084
        %v4098 = vmul.f32 %v4062, %v4084
        %v4099 = vmul.f32 %v4063, %v4084
        %v4100 = vmul.f32 %v4064, %v4084
        %v4101 = vmul.f32 %v4065, %v4084
        %v4102 = vmul.f32 %v4066, %v4084
        %v4103 = vmul.f32 %v4067, %v4084
        %v4104 = vmul.f32 %v4068, %v4084
        %v4105 = vmul.f32 %v4069, %v4084
        %v4106 = vmul.f32 %v4070, %v4084
        %v4107 = vmul.f32 %v4071, %v4084
        %v4108 = vmul.f32 %v4072, %v4084
        %v4109 = vmul.f32 %v4073, %v4084
        %v4110 = vmul.f32 %v4074, %v4084
        %v4111 = vmul.f32 %v4075, %v4084
        %v4112 = vmul.f32 %v4076, %v4084
        %v4113 = vmul.f32 %v4077, %v4084
        %v4114 = vmul.f32 %v4078, %v4084
        %v4115 = vmul.f32 %v4079, %v4084
        %v4116 = vmul.f32 %v4080, %v4084
        %v4117 = vmul.f32 %v4081, %v4084
        %4118 = vst [vmem:[%s163] sm:$0xff] %v4086
        %4119 = vst [vmem:[%s163 + $0x8] sm:$0xff] %v4087
        %4120 = vst [vmem:[%s163 + $0x10] sm:$0xff] %v4088
        %4121 = vst [vmem:[%s163 + $0x18] sm:$0xff] %v4089
        %4122 = vst [vmem:[%s163 + $0x20] sm:$0xff] %v4090
        %4123 = vst [vmem:[%s163 + $0x28] sm:$0xff] %v4091
        %4124 = vst [vmem:[%s163 + $0x30] sm:$0xff] %v4092
        %4125 = vst [vmem:[%s163 + $0x38] sm:$0xff] %v4093
        %4126 = vst [vmem:[%s163 + $0x40] sm:$0xff] %v4094
        %4127 = vst [vmem:[%s163 + $0x48] sm:$0xff] %v4095
        %4128 = vst [vmem:[%s163 + $0x50] sm:$0xff] %v4096
        %4129 = vst [vmem:[%s163 + $0x58] sm:$0xff] %v4097
        %4130 = vst [vmem:[%s163 + $0x60] sm:$0xff] %v4098
        %4131 = vst [vmem:[%s163 + $0x68] sm:$0xff] %v4099
        %4132 = vst [vmem:[%s163 + $0x70] sm:$0xff] %v4100
        %4133 = vst [vmem:[%s163 + $0x78] sm:$0xff] %v4101
        %4134 = vst [vmem:[%s163 + $0x80] sm:$0xff] %v4102
        %4135 = vst [vmem:[%s163 + $0x88] sm:$0xff] %v4103
        %4136 = vst [vmem:[%s163 + $0x90] sm:$0xff] %v4104
        %4137 = vst [vmem:[%s163 + $0x98] sm:$0xff] %v4105
        %4138 = vst [vmem:[%s163 + $0xa0] sm:$0xff] %v4106
        %4139 = vst [vmem:[%s163 + $0xa8] sm:$0xff] %v4107
        %4140 = vst [vmem:[%s163 + $0xb0] sm:$0xff] %v4108
        %4141 = vst [vmem:[%s163 + $0xb8] sm:$0xff] %v4109
        %4142 = vst [vmem:[%s163 + $0xc0] sm:$0xff] %v4110
        %4143 = vst [vmem:[%s163 + $0xc8] sm:$0xff] %v4111
        %4144 = vst [vmem:[%s163 + $0xd0] sm:$0xff] %v4112
        %4145 = vst [vmem:[%s163 + $0xd8] sm:$0xff] %v4113
        %4146 = vst [vmem:[%s163 + $0xe0] sm:$0xff] %v4114
        %4147 = vst [vmem:[%s163 + $0xe8] sm:$0xff] %v4115
        %4148 = vst [vmem:[%s163 + $0xf0] sm:$0xff] %v4116
        %4149 = vst [vmem:[%s163 + $0xf8] sm:$0xff] %v4117
        %s4150 = sand.u32 %s93, 1
        %s4151 = scalar_lea.sflag [#allocation3], %s4150
        %s4152 = sand.u32 %s93, 1
        %s4153 = smul.addr %s4152, 256
        %s4154 = scalar_lea.vmem [#allocation2], %s4153
        // Predicated region
        $region33: #{tpu_custom_call.1} parent=31 // pred_check
          %p4155 = pneg %p103
        $region34: #{tpu_custom_call.1} parent=31 // pred_check_branch
          %4157 = sbr.rel (%p4155) target = $region36
        $region35: #{tpu_custom_call.1} parent=31 // pred_region
          %s4158 = smul.u32 32, %s17
          %4160 = vsyncadd %s4151, 0
          %s4161 = smul.addr %s4158, 8
          %s4162 = scalar_lea.hbm %s3, %s4161
          %s4163 = sshll.u32 %s4154, 4
          %s4164 = int_to_ptr.vmem [resolvable:$true] %s4163
          %s4165 = sshll.u32 %s4162, 4
          %s4166 = int_to_ptr.hbm [resolvable:$true] %s4165
          %4171 = dma.vmem_to_hbm [thread:$0]  %s4164, 4096, %s4166, %s4151, 128, 128, 8
        $region36: #{tpu_custom_call.1} parent=31 // pred_fallthru
          _
      $region32: #{tpu_custom_call.1} parent=5 // pred_fallthru
        _
      %p4172 = scmp.le.s32.totalorder 2, %s12
      // Predicated region
      $region37: #{tpu_custom_call.1} parent=5 // pred_check
        %p4173 = pneg %p4172
      $region38: #{tpu_custom_call.1} parent=5 // pred_check_branch
        %4175 = sbr.rel (%p4173) target = $region40
      $region39: #{tpu_custom_call.1} parent=5 // pred_region
        %s4176 = ssub.s32 %s12, 2
        // Predicated region
        $region41: #{tpu_custom_call.1} parent=39 // pred_check
          %p4177 = pneg %p109
        $region42: #{tpu_custom_call.1} parent=39 // pred_check_branch
          %4179 = sbr.rel (%p4177) target = $region44
        $region43: #{tpu_custom_call.1} parent=39 // pred_region
          %s4180 = sand.u32 %s94, 1
          %s4181 = scalar_lea.sflag [#allocation3], %s4180
          %s4182 = sand.u32 %s94, 1
          %s4183 = smul.addr %s4182, 256
          %s4184 = scalar_lea.vmem [#allocation2], %s4183
          %4186 = dma.done %s4181, 4096
        $region44: #{tpu_custom_call.1} parent=39 // pred_fallthru
          _
      $region40: #{tpu_custom_call.1} parent=5 // pred_fallthru
        _
    $region6: #{tpu_custom_call.1} parent=1 // loop_footer
      %s16 = sadd.s32 1, %s12
    $region7: #{tpu_custom_call.1} parent=1 // loop_footer_branch
      %11 = sbr.rel target = $region3
    $region8: #{tpu_custom_call.1} parent=1 // loop_exit
      _
    %4187 = vsyncpa [#allocation3], 1
    %s4188 = scalar_lea.sflag [#allocation3], 1
    %4189 = vsyncpa %s4188, 1

</llo_original>
